<compile_context>
chip_gen: v5e
topology: v5e:2x2
jax: 0.10.0
libtpu: 0.0.40
codegen_flags: <defaults>
</compile_context>

<pallas_src>
import functools

import jax
import jax.numpy as jnp
from jax.experimental import pallas as pl
from jax.experimental.pallas import tpu as pltpu


# Column offset of the image inside the padded VMEM scratch.  Using 8 keeps the
# interior stores sublane-aligned; the 3x3 taps read at offsets 7/8/9.
_PAD_OFF = 8


# ---------------------------------------------------------------------------
# Fused BasicBlock kernel (one image per grid step)
# ---------------------------------------------------------------------------
def _basic_block_kernel(x_ref, w1_ref, s1_ref, b1_ref, w2_ref, s2_ref, b2_ref,
                        out_ref, xpad_ref, mpad_ref, *, H, W, C):
    # x_ref:   (1, H, W, C)   float32 input (NHWC), identity shortcut source
    # w*_ref:  (9, C, C)      bfloat16 conv weights, tap-major (ky*3+kx, Cin, Cout)
    # s*/b*:   (1, C)         float32 folded BatchNorm scale / bias
    # out_ref: (1, H, W, C)   float32 output
    # xpad_ref, mpad_ref: (H+2, _PAD_OFF+W+1, C) float32 padded VMEM scratches

    # Re-zero every grid step: scratch persists across steps and, with a
    # "parallel" grid (v7x megacore), each core must initialize its own copy.
    xpad_ref[...] = jnp.zeros_like(xpad_ref)
    mpad_ref[...] = jnp.zeros_like(mpad_ref)

    x = x_ref[0]                                        # (H, W, C) float32
    xpad_ref[1:H + 1, _PAD_OFF:_PAD_OFF + W, :] = x     # aligned interior store

    def conv3x3(pad_ref, w_ref):
        # 3x3 / stride 1 conv as 9 shifted (H*W, C) @ (C, C) MXU matmuls,
        # bf16 operands, float32 accumulation.
        acc = jnp.zeros((H * W, C), jnp.float32)
        for ky in range(3):
            for kx in range(3):
                patch = pad_ref[ky:ky + H,
                                _PAD_OFF - 1 + kx:_PAD_OFF - 1 + kx + W, :]
                patch = patch.reshape(H * W, C).astype(jnp.bfloat16)
                acc = acc + jnp.dot(patch, w_ref[ky * 3 + kx],
                                    preferred_element_type=jnp.float32)
        return acc                                      # (H*W, C) float32

    # conv1 -> BN1 -> ReLU; result stays in VMEM (padded scratch) for conv2.
    a1 = conv3x3(xpad_ref, w1_ref) * s1_ref[...] + b1_ref[...]
    a1 = jnp.maximum(a1, 0.0)
    mpad_ref[1:H + 1, _PAD_OFF:_PAD_OFF + W, :] = a1.reshape(H, W, C)

    # conv2 -> BN2 -> + identity shortcut -> ReLU
    a2 = conv3x3(mpad_ref, w2_ref) * s2_ref[...] + b2_ref[...]
    a2 = a2 + x.reshape(H * W, C)                       # residual in float32
    a2 = jnp.maximum(a2, 0.0)
    out_ref[0] = a2.reshape(H, W, C).astype(out_ref.dtype)


# ---------------------------------------------------------------------------
# Wrappers
# ---------------------------------------------------------------------------
def fold_bn(gamma, beta, running_mean, running_var, eps=1e-5):
    scale = gamma / jnp.sqrt(running_var + eps)
    bias = beta - running_mean * scale
    return scale, bias


def basic_block_forward_nhwc(x_nhwc, params):
    """Fused BasicBlock forward.  NHWC in, NHWC out (no layout glue)."""
    N, H, W, C = x_nhwc.shape
    w1, w2 = params["w1"], params["w2"]
    # This kernel implements the stride=1, in_planes == planes block only
    # (identity shortcut); assert instead of silently assuming.
    assert w1.shape == (3, 3, C, C) and w2.shape == (3, 3, C, C), (
        "basic_block_forward: requires stride=1 and in_planes == planes "
        "(identity shortcut)")

    s1, b1 = fold_bn(params["bn1_gamma"], params["bn1_beta"],
                     params["bn1_mean"], params["bn1_var"])
    s2, b2 = fold_bn(params["bn2_gamma"], params["bn2_beta"],
                     params["bn2_mean"], params["bn2_var"])

    # Weights as (9, Cin, Cout) bfloat16 (tap-major), BN affine as (1, C) f32.
    w1r = w1.reshape(9, C, C).astype(jnp.bfloat16)
    w2r = w2.reshape(9, C, C).astype(jnp.bfloat16)
    s1r = s1.reshape(1, C).astype(jnp.float32)
    b1r = b1.reshape(1, C).astype(jnp.float32)
    s2r = s2.reshape(1, C).astype(jnp.float32)
    b2r = b2.reshape(1, C).astype(jnp.float32)

    Ws = _PAD_OFF + W + 1   # padded scratch width (zero cols at 7 and 8+W)
    kernel = functools.partial(_basic_block_kernel, H=H, W=W, C=C)

    return pl.pallas_call(
        kernel,
        out_shape=jax.ShapeDtypeStruct((N, H, W, C), jnp.float32),
        grid=(N,),
        in_specs=[
            pl.BlockSpec((1, H, W, C), lambda n: (n, 0, 0, 0)),   # x
            pl.BlockSpec((9, C, C), lambda n: (0, 0, 0)),         # w1
            pl.BlockSpec((1, C), lambda n: (0, 0)),               # scale1
            pl.BlockSpec((1, C), lambda n: (0, 0)),               # bias1
            pl.BlockSpec((9, C, C), lambda n: (0, 0, 0)),         # w2
            pl.BlockSpec((1, C), lambda n: (0, 0)),               # scale2
            pl.BlockSpec((1, C), lambda n: (0, 0)),               # bias2
        ],
        out_specs=pl.BlockSpec((1, H, W, C), lambda n: (n, 0, 0, 0)),
        scratch_shapes=[
            pltpu.VMEM((H + 2, Ws, C), jnp.float32),   # padded input
            pltpu.VMEM((H + 2, Ws, C), jnp.float32),   # padded conv1 output
        ],
        compiler_params=pltpu.CompilerParams(
            dimension_semantics=("parallel",)),        # v7x: one image per TC
    )(x_nhwc.astype(jnp.float32), w1r, s1r, b1r, w2r, s2r, b2r)


def basic_block_forward(x_nchw, params):
    """PyTorch-layout convenience wrapper (NCHW in/out).

    For a chain of blocks convert to NHWC once and call
    basic_block_forward_nhwc directly to avoid per-block transposes.
    """
    x = jnp.transpose(x_nchw, (0, 2, 3, 1))
    out = basic_block_forward_nhwc(x, params)
    return jnp.transpose(out, (0, 3, 1, 2))


# ---------------------------------------------------------------------------
# Pure-JAX reference (same bf16 conv inputs / f32 accumulation as the kernel)
# ---------------------------------------------------------------------------
def _conv3x3_same_ref(x_f32, w_bf16):
    return jax.lax.conv_general_dilated(
        x_f32.astype(jnp.bfloat16), w_bf16,
        window_strides=(1, 1), padding="SAME",
        dimension_numbers=("NHWC", "HWIO", "NHWC"),
        preferred_element_type=jnp.float32)


def basic_block_ref(x_nchw, params):
    x = jnp.transpose(x_nchw, (0, 2, 3, 1)).astype(jnp.float32)
    s1, b1 = fold_bn(params["bn1_gamma"], params["bn1_beta"],
                     params["bn1_mean"], params["bn1_var"])
    s2, b2 = fold_bn(params["bn2_gamma"], params["bn2_beta"],
                     params["bn2_mean"], params["bn2_var"])
    w1 = params["w1"].astype(jnp.bfloat16)
    w2 = params["w2"].astype(jnp.bfloat16)

    a1 = jnp.maximum(_conv3x3_same_ref(x, w1) * s1 + b1, 0.0)
    a2 = _conv3x3_same_ref(a1, w2) * s2 + b2 + x
    a2 = jnp.maximum(a2, 0.0)
    return jnp.transpose(a2, (0, 3, 1, 2))


# ---------------------------------------------------------------------------
if __name__ == "__main__":
    N, C, H, W = 2, 32, 16, 16          # in_planes = planes = 32, stride = 1
    key = jax.random.PRNGKey(0)
    k = jax.random.split(key, 10)

    x = jax.random.normal(k[0], (N, C, H, W), jnp.float32)   # NCHW input

    params = {
        # conv weights in HWIO layout: (3, 3, Cin, Cout), bias=False as in ResNet
        "w1": jax.random.normal(k[1], (3, 3, C, C), jnp.float32) * 0.1,
        "w2": jax.random.normal(k[2], (3, 3, C, C), jnp.float32) * 0.1,
        # BatchNorm applied in eval mode (running stats), folded into scale/bias.
        "bn1_gamma": 1.0 + 0.1 * jax.random.normal(k[3], (C,), jnp.float32),
        "bn1_beta": 0.05 * jax.random.normal(k[4], (C,), jnp.float32),
        "bn1_mean": 0.1 * jax.random.normal(k[5], (C,), jnp.float32),
        "bn1_var": 1.0 + 0.1 * jax.random.uniform(k[6], (C,), jnp.float32),
        "bn2_gamma": 1.0 + 0.1 * jax.random.normal(k[7], (C,), jnp.float32),
        "bn2_beta": 0.05 * jax.random.normal(k[8], (C,), jnp.float32),
        "bn2_mean": 0.1 * jax.random.normal(k[9], (C,), jnp.float32),
        "bn2_var": jnp.ones((C,), jnp.float32),
    }

    out = jax.block_until_ready(basic_block_forward(x, params))
    ref = jax.block_until_ready(basic_block_ref(x, params))

    assert out.shape == (N, C, H, W), out.shape
    max_err = float(jnp.max(jnp.abs(out - ref)))
    assert jnp.allclose(out, ref, atol=2e-3, rtol=2e-3), max_err

    print("KERNEL_OK")
</pallas_src>

<mosaic_0001>
module attributes {stable_mosaic.version = 11 : i64} {
  func.func @_basic_block_kernel(%arg0: i32, %arg1: memref<1x16x16x32xf32, #tpu.memory_space<vmem>>, %arg2: memref<9x32x32xbf16, #tpu.memory_space<vmem>>, %arg3: memref<1x32xf32, #tpu.memory_space<vmem>>, %arg4: memref<1x32xf32, #tpu.memory_space<vmem>>, %arg5: memref<9x32x32xbf16, #tpu.memory_space<vmem>>, %arg6: memref<1x32xf32, #tpu.memory_space<vmem>>, %arg7: memref<1x32xf32, #tpu.memory_space<vmem>>, %arg8: memref<1x16x16x32xf32, #tpu.memory_space<vmem>>, %arg9: memref<18x25x32xf32, #tpu.memory_space<vmem>>, %arg10: memref<18x25x32xf32, #tpu.memory_space<vmem>>) attributes {dimension_semantics = [#tpu.dimension_semantics<parallel>], iteration_bounds = array<i64: 2>, scalar_prefetch = 0 : i64, scratch_operands = 2 : i64, tpu.core_type = #tpu.core_type<tc>, window_params = [{transform_indices = @transform_0, window_bounds = array<i64: 1, 16, 16, 32>}, {pipeline_mode = #tpu.pipeline_mode<synchronous>, transform_indices = @transform_1, window_bounds = array<i64: 9, 32, 32>}, {pipeline_mode = #tpu.pipeline_mode<synchronous>, transform_indices = @transform_2, window_bounds = array<i64: 1, 32>}, {pipeline_mode = #tpu.pipeline_mode<synchronous>, transform_indices = @transform_3, window_bounds = array<i64: 1, 32>}, {pipeline_mode = #tpu.pipeline_mode<synchronous>, transform_indices = @transform_4, window_bounds = array<i64: 9, 32, 32>}, {pipeline_mode = #tpu.pipeline_mode<synchronous>, transform_indices = @transform_5, window_bounds = array<i64: 1, 32>}, {pipeline_mode = #tpu.pipeline_mode<synchronous>, transform_indices = @transform_6, window_bounds = array<i64: 1, 32>}, {transform_indices = @transform_7, window_bounds = array<i64: 1, 16, 16, 32>}]} {
    %cst = arith.constant 0.000000e+00 : f32
    %0 = vector.broadcast %cst : f32 to vector<18x25x32xf32>
    %c0 = arith.constant 0 : index
    %c0_0 = arith.constant 0 : index
    %c0_1 = arith.constant 0 : index
    %1 = vector.load %arg9[%c0, %c0_0, %c0_1] : memref<18x25x32xf32, #tpu.memory_space<vmem>>, vector<18x25x32xf32>
    tpu.vector_store %arg9[%c0, %c0_0, %c0_1], %0 {strides = array<i32>} : memref<18x25x32xf32, #tpu.memory_space<vmem>>, vector<18x25x32xf32>,
    %cst_2 = arith.constant 0.000000e+00 : f32
    %2 = vector.broadcast %cst_2 : f32 to vector<18x25x32xf32>
    %c0_3 = arith.constant 0 : index
    %c0_4 = arith.constant 0 : index
    %c0_5 = arith.constant 0 : index
    %3 = vector.load %arg10[%c0_3, %c0_4, %c0_5] : memref<18x25x32xf32, #tpu.memory_space<vmem>>, vector<18x25x32xf32>
    tpu.vector_store %arg10[%c0_3, %c0_4, %c0_5], %2 {strides = array<i32>} : memref<18x25x32xf32, #tpu.memory_space<vmem>>, vector<18x25x32xf32>,
    %c0_6 = arith.constant 0 : index
    %c0_7 = arith.constant 0 : index
    %c0_8 = arith.constant 0 : index
    %c0_9 = arith.constant 0 : index
    %4 = vector.load %arg1[%c0_6, %c0_7, %c0_8, %c0_9] : memref<1x16x16x32xf32, #tpu.memory_space<vmem>>, vector<1x16x16x32xf32>
    %5 = vector.shape_cast %4 : vector<1x16x16x32xf32> to vector<16x16x32xf32>
    %c1 = arith.constant 1 : index
    %c8 = arith.constant 8 : index
    %c0_10 = arith.constant 0 : index
    %6 = vector.load %arg9[%c1, %c8, %c0_10] : memref<18x25x32xf32, #tpu.memory_space<vmem>>, vector<16x16x32xf32>
    tpu.vector_store %arg9[%c1, %c8, %c0_10], %5 {strides = array<i32>} : memref<18x25x32xf32, #tpu.memory_space<vmem>>, vector<16x16x32xf32>,
    %cst_11 = arith.constant 0.000000e+00 : f32
    %7 = vector.broadcast %cst_11 : f32 to vector<256x32xf32>
    %c0_12 = arith.constant 0 : index
    %c7 = arith.constant 7 : index
    %c0_13 = arith.constant 0 : index
    %8 = vector.load %arg9[%c0_12, %c7, %c0_13] : memref<18x25x32xf32, #tpu.memory_space<vmem>>, vector<16x16x32xf32>
    %9 = vector.shape_cast %8 : vector<16x16x32xf32> to vector<256x32xf32>
    %10 = arith.truncf %9 : vector<256x32xf32> to vector<256x32xbf16>
    %c0_14 = arith.constant 0 : index
    %c0_15 = arith.constant 0 : index
    %c0_16 = arith.constant 0 : index
    %11 = vector.load %arg2[%c0_14, %c0_15, %c0_16] : memref<9x32x32xbf16, #tpu.memory_space<vmem>>, vector<1x32x32xbf16>
    %12 = vector.shape_cast %11 : vector<1x32x32xbf16> to vector<32x32xbf16>
    %cst_17 = arith.constant dense<0.000000e+00> : vector<256x32xf32>
    %13 = tpu.matmul %10, %12, %cst_17 {dimension_numbers = #tpu.dot_dimension_numbers<[1], [0], [0], [1], [0, 0, 1, 1], [], []>} : vector<256x32xbf16>, vector<32x32xbf16>, vector<256x32xf32> -> vector<256x32xf32>
    %14 = arith.addf %7, %13 : vector<256x32xf32>
    %c0_18 = arith.constant 0 : index
    %c8_19 = arith.constant 8 : index
    %c0_20 = arith.constant 0 : index
    %15 = vector.load %arg9[%c0_18, %c8_19, %c0_20] : memref<18x25x32xf32, #tpu.memory_space<vmem>>, vector<16x16x32xf32>
    %16 = vector.shape_cast %15 : vector<16x16x32xf32> to vector<256x32xf32>
    %17 = arith.truncf %16 : vector<256x32xf32> to vector<256x32xbf16>
    %c1_21 = arith.constant 1 : index
    %c0_22 = arith.constant 0 : index
    %c0_23 = arith.constant 0 : index
    %18 = vector.load %arg2[%c1_21, %c0_22, %c0_23] : memref<9x32x32xbf16, #tpu.memory_space<vmem>>, vector<1x32x32xbf16>
    %19 = vector.shape_cast %18 : vector<1x32x32xbf16> to vector<32x32xbf16>
    %cst_24 = arith.constant dense<0.000000e+00> : vector<256x32xf32>
    %20 = tpu.matmul %17, %19, %cst_24 {dimension_numbers = #tpu.dot_dimension_numbers<[1], [0], [0], [1], [0, 0, 1, 1], [], []>} : vector<256x32xbf16>, vector<32x32xbf16>, vector<256x32xf32> -> vector<256x32xf32>
    %21 = arith.addf %14, %20 : vector<256x32xf32>
    %c0_25 = arith.constant 0 : index
    %c9 = arith.constant 9 : index
    %c0_26 = arith.constant 0 : index
    %22 = vector.load %arg9[%c0_25, %c9, %c0_26] : memref<18x25x32xf32, #tpu.memory_space<vmem>>, vector<16x16x32xf32>
    %23 = vector.shape_cast %22 : vector<16x16x32xf32> to vector<256x32xf32>
    %24 = arith.truncf %23 : vector<256x32xf32> to vector<256x32xbf16>
    %c2 = arith.constant 2 : index
    %c0_27 = arith.constant 0 : index
    %c0_28 = arith.constant 0 : index
    %25 = vector.load %arg2[%c2, %c0_27, %c0_28] : memref<9x32x32xbf16, #tpu.memory_space<vmem>>, vector<1x32x32xbf16>
    %26 = vector.shape_cast %25 : vector<1x32x32xbf16> to vector<32x32xbf16>
    %cst_29 = arith.constant dense<0.000000e+00> : vector<256x32xf32>
    %27 = tpu.matmul %24, %26, %cst_29 {dimension_numbers = #tpu.dot_dimension_numbers<[1], [0], [0], [1], [0, 0, 1, 1], [], []>} : vector<256x32xbf16>, vector<32x32xbf16>, vector<256x32xf32> -> vector<256x32xf32>
    %28 = arith.addf %21, %27 : vector<256x32xf32>
    %c1_30 = arith.constant 1 : index
    %c7_31 = arith.constant 7 : index
    %c0_32 = arith.constant 0 : index
    %29 = vector.load %arg9[%c1_30, %c7_31, %c0_32] : memref<18x25x32xf32, #tpu.memory_space<vmem>>, vector<16x16x32xf32>
    %30 = vector.shape_cast %29 : vector<16x16x32xf32> to vector<256x32xf32>
    %31 = arith.truncf %30 : vector<256x32xf32> to vector<256x32xbf16>
    %c3 = arith.constant 3 : index
    %c0_33 = arith.constant 0 : index
    %c0_34 = arith.constant 0 : index
    %32 = vector.load %arg2[%c3, %c0_33, %c0_34] : memref<9x32x32xbf16, #tpu.memory_space<vmem>>, vector<1x32x32xbf16>
    %33 = vector.shape_cast %32 : vector<1x32x32xbf16> to vector<32x32xbf16>
    %cst_35 = arith.constant dense<0.000000e+00> : vector<256x32xf32>
    %34 = tpu.matmul %31, %33, %cst_35 {dimension_numbers = #tpu.dot_dimension_numbers<[1], [0], [0], [1], [0, 0, 1, 1], [], []>} : vector<256x32xbf16>, vector<32x32xbf16>, vector<256x32xf32> -> vector<256x32xf32>
    %35 = arith.addf %28, %34 : vector<256x32xf32>
    %c1_36 = arith.constant 1 : index
    %c8_37 = arith.constant 8 : index
    %c0_38 = arith.constant 0 : index
    %36 = vector.load %arg9[%c1_36, %c8_37, %c0_38] : memref<18x25x32xf32, #tpu.memory_space<vmem>>, vector<16x16x32xf32>
    %37 = vector.shape_cast %36 : vector<16x16x32xf32> to vector<256x32xf32>
    %38 = arith.truncf %37 : vector<256x32xf32> to vector<256x32xbf16>
    %c4 = arith.constant 4 : index
    %c0_39 = arith.constant 0 : index
    %c0_40 = arith.constant 0 : index
    %39 = vector.load %arg2[%c4, %c0_39, %c0_40] : memref<9x32x32xbf16, #tpu.memory_space<vmem>>, vector<1x32x32xbf16>
    %40 = vector.shape_cast %39 : vector<1x32x32xbf16> to vector<32x32xbf16>
    %cst_41 = arith.constant dense<0.000000e+00> : vector<256x32xf32>
    %41 = tpu.matmul %38, %40, %cst_41 {dimension_numbers = #tpu.dot_dimension_numbers<[1], [0], [0], [1], [0, 0, 1, 1], [], []>} : vector<256x32xbf16>, vector<32x32xbf16>, vector<256x32xf32> -> vector<256x32xf32>
    %42 = arith.addf %35, %41 : vector<256x32xf32>
    %c1_42 = arith.constant 1 : index
    %c9_43 = arith.constant 9 : index
    %c0_44 = arith.constant 0 : index
    %43 = vector.load %arg9[%c1_42, %c9_43, %c0_44] : memref<18x25x32xf32, #tpu.memory_space<vmem>>, vector<16x16x32xf32>
    %44 = vector.shape_cast %43 : vector<16x16x32xf32> to vector<256x32xf32>
    %45 = arith.truncf %44 : vector<256x32xf32> to vector<256x32xbf16>
    %c5 = arith.constant 5 : index
    %c0_45 = arith.constant 0 : index
    %c0_46 = arith.constant 0 : index
    %46 = vector.load %arg2[%c5, %c0_45, %c0_46] : memref<9x32x32xbf16, #tpu.memory_space<vmem>>, vector<1x32x32xbf16>
    %47 = vector.shape_cast %46 : vector<1x32x32xbf16> to vector<32x32xbf16>
    %cst_47 = arith.constant dense<0.000000e+00> : vector<256x32xf32>
    %48 = tpu.matmul %45, %47, %cst_47 {dimension_numbers = #tpu.dot_dimension_numbers<[1], [0], [0], [1], [0, 0, 1, 1], [], []>} : vector<256x32xbf16>, vector<32x32xbf16>, vector<256x32xf32> -> vector<256x32xf32>
    %49 = arith.addf %42, %48 : vector<256x32xf32>
    %c2_48 = arith.constant 2 : index
    %c7_49 = arith.constant 7 : index
    %c0_50 = arith.constant 0 : index
    %50 = vector.load %arg9[%c2_48, %c7_49, %c0_50] : memref<18x25x32xf32, #tpu.memory_space<vmem>>, vector<16x16x32xf32>
    %51 = vector.shape_cast %50 : vector<16x16x32xf32> to vector<256x32xf32>
    %52 = arith.truncf %51 : vector<256x32xf32> to vector<256x32xbf16>
    %c6 = arith.constant 6 : index
    %c0_51 = arith.constant 0 : index
    %c0_52 = arith.constant 0 : index
    %53 = vector.load %arg2[%c6, %c0_51, %c0_52] : memref<9x32x32xbf16, #tpu.memory_space<vmem>>, vector<1x32x32xbf16>
    %54 = vector.shape_cast %53 : vector<1x32x32xbf16> to vector<32x32xbf16>
    %cst_53 = arith.constant dense<0.000000e+00> : vector<256x32xf32>
    %55 = tpu.matmul %52, %54, %cst_53 {dimension_numbers = #tpu.dot_dimension_numbers<[1], [0], [0], [1], [0, 0, 1, 1], [], []>} : vector<256x32xbf16>, vector<32x32xbf16>, vector<256x32xf32> -> vector<256x32xf32>
    %56 = arith.addf %49, %55 : vector<256x32xf32>
    %c2_54 = arith.constant 2 : index
    %c8_55 = arith.constant 8 : index
    %c0_56 = arith.constant 0 : index
    %57 = vector.load %arg9[%c2_54, %c8_55, %c0_56] : memref<18x25x32xf32, #tpu.memory_space<vmem>>, vector<16x16x32xf32>
    %58 = vector.shape_cast %57 : vector<16x16x32xf32> to vector<256x32xf32>
    %59 = arith.truncf %58 : vector<256x32xf32> to vector<256x32xbf16>
    %c7_57 = arith.constant 7 : index
    %c0_58 = arith.constant 0 : index
    %c0_59 = arith.constant 0 : index
    %60 = vector.load %arg2[%c7_57, %c0_58, %c0_59] : memref<9x32x32xbf16, #tpu.memory_space<vmem>>, vector<1x32x32xbf16>
    %61 = vector.shape_cast %60 : vector<1x32x32xbf16> to vector<32x32xbf16>
    %cst_60 = arith.constant dense<0.000000e+00> : vector<256x32xf32>
    %62 = tpu.matmul %59, %61, %cst_60 {dimension_numbers = #tpu.dot_dimension_numbers<[1], [0], [0], [1], [0, 0, 1, 1], [], []>} : vector<256x32xbf16>, vector<32x32xbf16>, vector<256x32xf32> -> vector<256x32xf32>
    %63 = arith.addf %56, %62 : vector<256x32xf32>
    %c2_61 = arith.constant 2 : index
    %c9_62 = arith.constant 9 : index
    %c0_63 = arith.constant 0 : index
    %64 = vector.load %arg9[%c2_61, %c9_62, %c0_63] : memref<18x25x32xf32, #tpu.memory_space<vmem>>, vector<16x16x32xf32>
    %65 = vector.shape_cast %64 : vector<16x16x32xf32> to vector<256x32xf32>
    %66 = arith.truncf %65 : vector<256x32xf32> to vector<256x32xbf16>
    %c8_64 = arith.constant 8 : index
    %c0_65 = arith.constant 0 : index
    %c0_66 = arith.constant 0 : index
    %67 = vector.load %arg2[%c8_64, %c0_65, %c0_66] : memref<9x32x32xbf16, #tpu.memory_space<vmem>>, vector<1x32x32xbf16>
    %68 = vector.shape_cast %67 : vector<1x32x32xbf16> to vector<32x32xbf16>
    %cst_67 = arith.constant dense<0.000000e+00> : vector<256x32xf32>
    %69 = tpu.matmul %66, %68, %cst_67 {dimension_numbers = #tpu.dot_dimension_numbers<[1], [0], [0], [1], [0, 0, 1, 1], [], []>} : vector<256x32xbf16>, vector<32x32xbf16>, vector<256x32xf32> -> vector<256x32xf32>
    %70 = arith.addf %63, %69 : vector<256x32xf32>
    %c0_68 = arith.constant 0 : index
    %c0_69 = arith.constant 0 : index
    %71 = vector.load %arg3[%c0_68, %c0_69] : memref<1x32xf32, #tpu.memory_space<vmem>>, vector<1x32xf32>
    %72 = vector.broadcast %71 : vector<1x32xf32> to vector<256x32xf32>
    %73 = arith.mulf %70, %72 : vector<256x32xf32>
    %c0_70 = arith.constant 0 : index
    %c0_71 = arith.constant 0 : index
    %74 = vector.load %arg4[%c0_70, %c0_71] : memref<1x32xf32, #tpu.memory_space<vmem>>, vector<1x32xf32>
    %75 = vector.broadcast %74 : vector<1x32xf32> to vector<256x32xf32>
    %76 = arith.addf %73, %75 : vector<256x32xf32>
    %cst_72 = arith.constant 0.000000e+00 : f32
    %77 = vector.broadcast %cst_72 : f32 to vector<256x32xf32>
    %78 = arith.maximumf %76, %77 : vector<256x32xf32>
    %79 = vector.shape_cast %78 : vector<256x32xf32> to vector<16x16x32xf32>
    %c1_73 = arith.constant 1 : index
    %c8_74 = arith.constant 8 : index
    %c0_75 = arith.constant 0 : index
    %80 = vector.load %arg10[%c1_73, %c8_74, %c0_75] : memref<18x25x32xf32, #tpu.memory_space<vmem>>, vector<16x16x32xf32>
    tpu.vector_store %arg10[%c1_73, %c8_74, %c0_75], %79 {strides = array<i32>} : memref<18x25x32xf32, #tpu.memory_space<vmem>>, vector<16x16x32xf32>,
    %cst_76 = arith.constant 0.000000e+00 : f32
    %81 = vector.broadcast %cst_76 : f32 to vector<256x32xf32>
    %c0_77 = arith.constant 0 : index
    %c7_78 = arith.constant 7 : index
    %c0_79 = arith.constant 0 : index
    %82 = vector.load %arg10[%c0_77, %c7_78, %c0_79] : memref<18x25x32xf32, #tpu.memory_space<vmem>>, vector<16x16x32xf32>
    %83 = vector.shape_cast %82 : vector<16x16x32xf32> to vector<256x32xf32>
    %84 = arith.truncf %83 : vector<256x32xf32> to vector<256x32xbf16>
    %c0_80 = arith.constant 0 : index
    %c0_81 = arith.constant 0 : index
    %c0_82 = arith.constant 0 : index
    %85 = vector.load %arg5[%c0_80, %c0_81, %c0_82] : memref<9x32x32xbf16, #tpu.memory_space<vmem>>, vector<1x32x32xbf16>
    %86 = vector.shape_cast %85 : vector<1x32x32xbf16> to vector<32x32xbf16>
    %cst_83 = arith.constant dense<0.000000e+00> : vector<256x32xf32>
    %87 = tpu.matmul %84, %86, %cst_83 {dimension_numbers = #tpu.dot_dimension_numbers<[1], [0], [0], [1], [0, 0, 1, 1], [], []>} : vector<256x32xbf16>, vector<32x32xbf16>, vector<256x32xf32> -> vector<256x32xf32>
    %88 = arith.addf %81, %87 : vector<256x32xf32>
    %c0_84 = arith.constant 0 : index
    %c8_85 = arith.constant 8 : index
    %c0_86 = arith.constant 0 : index
    %89 = vector.load %arg10[%c0_84, %c8_85, %c0_86] : memref<18x25x32xf32, #tpu.memory_space<vmem>>, vector<16x16x32xf32>
    %90 = vector.shape_cast %89 : vector<16x16x32xf32> to vector<256x32xf32>
    %91 = arith.truncf %90 : vector<256x32xf32> to vector<256x32xbf16>
    %c1_87 = arith.constant 1 : index
    %c0_88 = arith.constant 0 : index
    %c0_89 = arith.constant 0 : index
    %92 = vector.load %arg5[%c1_87, %c0_88, %c0_89] : memref<9x32x32xbf16, #tpu.memory_space<vmem>>, vector<1x32x32xbf16>
    %93 = vector.shape_cast %92 : vector<1x32x32xbf16> to vector<32x32xbf16>
    %cst_90 = arith.constant dense<0.000000e+00> : vector<256x32xf32>
    %94 = tpu.matmul %91, %93, %cst_90 {dimension_numbers = #tpu.dot_dimension_numbers<[1], [0], [0], [1], [0, 0, 1, 1], [], []>} : vector<256x32xbf16>, vector<32x32xbf16>, vector<256x32xf32> -> vector<256x32xf32>
    %95 = arith.addf %88, %94 : vector<256x32xf32>
    %c0_91 = arith.constant 0 : index
    %c9_92 = arith.constant 9 : index
    %c0_93 = arith.constant 0 : index
    %96 = vector.load %arg10[%c0_91, %c9_92, %c0_93] : memref<18x25x32xf32, #tpu.memory_space<vmem>>, vector<16x16x32xf32>
    %97 = vector.shape_cast %96 : vector<16x16x32xf32> to vector<256x32xf32>
    %98 = arith.truncf %97 : vector<256x32xf32> to vector<256x32xbf16>
    %c2_94 = arith.constant 2 : index
    %c0_95 = arith.constant 0 : index
    %c0_96 = arith.constant 0 : index
    %99 = vector.load %arg5[%c2_94, %c0_95, %c0_96] : memref<9x32x32xbf16, #tpu.memory_space<vmem>>, vector<1x32x32xbf16>
    %100 = vector.shape_cast %99 : vector<1x32x32xbf16> to vector<32x32xbf16>
    %cst_97 = arith.constant dense<0.000000e+00> : vector<256x32xf32>
    %101 = tpu.matmul %98, %100, %cst_97 {dimension_numbers = #tpu.dot_dimension_numbers<[1], [0], [0], [1], [0, 0, 1, 1], [], []>} : vector<256x32xbf16>, vector<32x32xbf16>, vector<256x32xf32> -> vector<256x32xf32>
    %102 = arith.addf %95, %101 : vector<256x32xf32>
    %c1_98 = arith.constant 1 : index
    %c7_99 = arith.constant 7 : index
    %c0_100 = arith.constant 0 : index
    %103 = vector.load %arg10[%c1_98, %c7_99, %c0_100] : memref<18x25x32xf32, #tpu.memory_space<vmem>>, vector<16x16x32xf32>
    %104 = vector.shape_cast %103 : vector<16x16x32xf32> to vector<256x32xf32>
    %105 = arith.truncf %104 : vector<256x32xf32> to vector<256x32xbf16>
    %c3_101 = arith.constant 3 : index
    %c0_102 = arith.constant 0 : index
    %c0_103 = arith.constant 0 : index
    %106 = vector.load %arg5[%c3_101, %c0_102, %c0_103] : memref<9x32x32xbf16, #tpu.memory_space<vmem>>, vector<1x32x32xbf16>
    %107 = vector.shape_cast %106 : vector<1x32x32xbf16> to vector<32x32xbf16>
    %cst_104 = arith.constant dense<0.000000e+00> : vector<256x32xf32>
    %108 = tpu.matmul %105, %107, %cst_104 {dimension_numbers = #tpu.dot_dimension_numbers<[1], [0], [0], [1], [0, 0, 1, 1], [], []>} : vector<256x32xbf16>, vector<32x32xbf16>, vector<256x32xf32> -> vector<256x32xf32>
    %109 = arith.addf %102, %108 : vector<256x32xf32>
    %c1_105 = arith.constant 1 : index
    %c8_106 = arith.constant 8 : index
    %c0_107 = arith.constant 0 : index
    %110 = vector.load %arg10[%c1_105, %c8_106, %c0_107] : memref<18x25x32xf32, #tpu.memory_space<vmem>>, vector<16x16x32xf32>
    %111 = vector.shape_cast %110 : vector<16x16x32xf32> to vector<256x32xf32>
    %112 = arith.truncf %111 : vector<256x32xf32> to vector<256x32xbf16>
    %c4_108 = arith.constant 4 : index
    %c0_109 = arith.constant 0 : index
    %c0_110 = arith.constant 0 : index
    %113 = vector.load %arg5[%c4_108, %c0_109, %c0_110] : memref<9x32x32xbf16, #tpu.memory_space<vmem>>, vector<1x32x32xbf16>
    %114 = vector.shape_cast %113 : vector<1x32x32xbf16> to vector<32x32xbf16>
    %cst_111 = arith.constant dense<0.000000e+00> : vector<256x32xf32>
    %115 = tpu.matmul %112, %114, %cst_111 {dimension_numbers = #tpu.dot_dimension_numbers<[1], [0], [0], [1], [0, 0, 1, 1], [], []>} : vector<256x32xbf16>, vector<32x32xbf16>, vector<256x32xf32> -> vector<256x32xf32>
    %116 = arith.addf %109, %115 : vector<256x32xf32>
    %c1_112 = arith.constant 1 : index
    %c9_113 = arith.constant 9 : index
    %c0_114 = arith.constant 0 : index
    %117 = vector.load %arg10[%c1_112, %c9_113, %c0_114] : memref<18x25x32xf32, #tpu.memory_space<vmem>>, vector<16x16x32xf32>
    %118 = vector.shape_cast %117 : vector<16x16x32xf32> to vector<256x32xf32>
    %119 = arith.truncf %118 : vector<256x32xf32> to vector<256x32xbf16>
    %c5_115 = arith.constant 5 : index
    %c0_116 = arith.constant 0 : index
    %c0_117 = arith.constant 0 : index
    %120 = vector.load %arg5[%c5_115, %c0_116, %c0_117] : memref<9x32x32xbf16, #tpu.memory_space<vmem>>, vector<1x32x32xbf16>
    %121 = vector.shape_cast %120 : vector<1x32x32xbf16> to vector<32x32xbf16>
    %cst_118 = arith.constant dense<0.000000e+00> : vector<256x32xf32>
    %122 = tpu.matmul %119, %121, %cst_118 {dimension_numbers = #tpu.dot_dimension_numbers<[1], [0], [0], [1], [0, 0, 1, 1], [], []>} : vector<256x32xbf16>, vector<32x32xbf16>, vector<256x32xf32> -> vector<256x32xf32>
    %123 = arith.addf %116, %122 : vector<256x32xf32>
    %c2_119 = arith.constant 2 : index
    %c7_120 = arith.constant 7 : index
    %c0_121 = arith.constant 0 : index
    %124 = vector.load %arg10[%c2_119, %c7_120, %c0_121] : memref<18x25x32xf32, #tpu.memory_space<vmem>>, vector<16x16x32xf32>
    %125 = vector.shape_cast %124 : vector<16x16x32xf32> to vector<256x32xf32>
    %126 = arith.truncf %125 : vector<256x32xf32> to vector<256x32xbf16>
    %c6_122 = arith.constant 6 : index
    %c0_123 = arith.constant 0 : index
    %c0_124 = arith.constant 0 : index
    %127 = vector.load %arg5[%c6_122, %c0_123, %c0_124] : memref<9x32x32xbf16, #tpu.memory_space<vmem>>, vector<1x32x32xbf16>
    %128 = vector.shape_cast %127 : vector<1x32x32xbf16> to vector<32x32xbf16>
    %cst_125 = arith.constant dense<0.000000e+00> : vector<256x32xf32>
    %129 = tpu.matmul %126, %128, %cst_125 {dimension_numbers = #tpu.dot_dimension_numbers<[1], [0], [0], [1], [0, 0, 1, 1], [], []>} : vector<256x32xbf16>, vector<32x32xbf16>, vector<256x32xf32> -> vector<256x32xf32>
    %130 = arith.addf %123, %129 : vector<256x32xf32>
    %c2_126 = arith.constant 2 : index
    %c8_127 = arith.constant 8 : index
    %c0_128 = arith.constant 0 : index
    %131 = vector.load %arg10[%c2_126, %c8_127, %c0_128] : memref<18x25x32xf32, #tpu.memory_space<vmem>>, vector<16x16x32xf32>
    %132 = vector.shape_cast %131 : vector<16x16x32xf32> to vector<256x32xf32>
    %133 = arith.truncf %132 : vector<256x32xf32> to vector<256x32xbf16>
    %c7_129 = arith.constant 7 : index
    %c0_130 = arith.constant 0 : index
    %c0_131 = arith.constant 0 : index
    %134 = vector.load %arg5[%c7_129, %c0_130, %c0_131] : memref<9x32x32xbf16, #tpu.memory_space<vmem>>, vector<1x32x32xbf16>
    %135 = vector.shape_cast %134 : vector<1x32x32xbf16> to vector<32x32xbf16>
    %cst_132 = arith.constant dense<0.000000e+00> : vector<256x32xf32>
    %136 = tpu.matmul %133, %135, %cst_132 {dimension_numbers = #tpu.dot_dimension_numbers<[1], [0], [0], [1], [0, 0, 1, 1], [], []>} : vector<256x32xbf16>, vector<32x32xbf16>, vector<256x32xf32> -> vector<256x32xf32>
    %137 = arith.addf %130, %136 : vector<256x32xf32>
    %c2_133 = arith.constant 2 : index
    %c9_134 = arith.constant 9 : index
    %c0_135 = arith.constant 0 : index
    %138 = vector.load %arg10[%c2_133, %c9_134, %c0_135] : memref<18x25x32xf32, #tpu.memory_space<vmem>>, vector<16x16x32xf32>
    %139 = vector.shape_cast %138 : vector<16x16x32xf32> to vector<256x32xf32>
    %140 = arith.truncf %139 : vector<256x32xf32> to vector<256x32xbf16>
    %c8_136 = arith.constant 8 : index
    %c0_137 = arith.constant 0 : index
    %c0_138 = arith.constant 0 : index
    %141 = vector.load %arg5[%c8_136, %c0_137, %c0_138] : memref<9x32x32xbf16, #tpu.memory_space<vmem>>, vector<1x32x32xbf16>
    %142 = vector.shape_cast %141 : vector<1x32x32xbf16> to vector<32x32xbf16>
    %cst_139 = arith.constant dense<0.000000e+00> : vector<256x32xf32>
    %143 = tpu.matmul %140, %142, %cst_139 {dimension_numbers = #tpu.dot_dimension_numbers<[1], [0], [0], [1], [0, 0, 1, 1], [], []>} : vector<256x32xbf16>, vector<32x32xbf16>, vector<256x32xf32> -> vector<256x32xf32>
    %144 = arith.addf %137, %143 : vector<256x32xf32>
    %c0_140 = arith.constant 0 : index
    %c0_141 = arith.constant 0 : index
    %145 = vector.load %arg6[%c0_140, %c0_141] : memref<1x32xf32, #tpu.memory_space<vmem>>, vector<1x32xf32>
    %146 = vector.broadcast %145 : vector<1x32xf32> to vector<256x32xf32>
    %147 = arith.mulf %144, %146 : vector<256x32xf32>
    %c0_142 = arith.constant 0 : index
    %c0_143 = arith.constant 0 : index
    %148 = vector.load %arg7[%c0_142, %c0_143] : memref<1x32xf32, #tpu.memory_space<vmem>>, vector<1x32xf32>
    %149 = vector.broadcast %148 : vector<1x32xf32> to vector<256x32xf32>
    %150 = arith.addf %147, %149 : vector<256x32xf32>
    %151 = vector.shape_cast %5 : vector<16x16x32xf32> to vector<256x32xf32>
    %152 = arith.addf %150, %151 : vector<256x32xf32>
    %cst_144 = arith.constant 0.000000e+00 : f32
    %153 = vector.broadcast %cst_144 : f32 to vector<256x32xf32>
    %154 = arith.maximumf %152, %153 : vector<256x32xf32>
    %155 = vector.shape_cast %154 : vector<256x32xf32> to vector<16x16x32xf32>
    %c0_145 = arith.constant 0 : index
    %c0_146 = arith.constant 0 : index
    %c0_147 = arith.constant 0 : index
    %c0_148 = arith.constant 0 : index
    %156 = vector.load %arg8[%c0_145, %c0_146, %c0_147, %c0_148] : memref<1x16x16x32xf32, #tpu.memory_space<vmem>>, vector<1x16x16x32xf32>
    %157 = vector.shape_cast %156 : vector<1x16x16x32xf32> to vector<16x16x32xf32>
    %158 = vector.shape_cast %155 : vector<16x16x32xf32> to vector<1x16x16x32xf32>
    tpu.vector_store %arg8[%c0_145, %c0_146, %c0_147, %c0_148], %158 {strides = array<i32>} : memref<1x16x16x32xf32, #tpu.memory_space<vmem>>, vector<1x16x16x32xf32>,
    return
  }
  func.func @transform_0(%arg0: i32) -> (i32, i32, i32, i32) {
    %c0_i32 = arith.constant 0 : i32
    %c0_i32_0 = arith.constant 0 : i32
    %c0_i32_1 = arith.constant 0 : i32
    %c0_i32_2 = arith.constant 0 : i32
    return %arg0, %c0_i32, %c0_i32_0, %c0_i32_1 : i32, i32, i32, i32
  }
  func.func @transform_1(%arg0: i32) -> (i32, i32, i32) {
    %c0_i32 = arith.constant 0 : i32
    %c0_i32_0 = arith.constant 0 : i32
    %c0_i32_1 = arith.constant 0 : i32
    %c0_i32_2 = arith.constant 0 : i32
    return %c0_i32, %c0_i32_0, %c0_i32_1 : i32, i32, i32
  }
  func.func @transform_2(%arg0: i32) -> (i32, i32) {
    %c0_i32 = arith.constant 0 : i32
    %c0_i32_0 = arith.constant 0 : i32
    %c0_i32_1 = arith.constant 0 : i32
    return %c0_i32, %c0_i32_0 : i32, i32
  }
  func.func @transform_3(%arg0: i32) -> (i32, i32) {
    %c0_i32 = arith.constant 0 : i32
    %c0_i32_0 = arith.constant 0 : i32
    %c0_i32_1 = arith.constant 0 : i32
    return %c0_i32, %c0_i32_0 : i32, i32
  }
  func.func @transform_4(%arg0: i32) -> (i32, i32, i32) {
    %c0_i32 = arith.constant 0 : i32
    %c0_i32_0 = arith.constant 0 : i32
    %c0_i32_1 = arith.constant 0 : i32
    %c0_i32_2 = arith.constant 0 : i32
    return %c0_i32, %c0_i32_0, %c0_i32_1 : i32, i32, i32
  }
  func.func @transform_5(%arg0: i32) -> (i32, i32) {
    %c0_i32 = arith.constant 0 : i32
    %c0_i32_0 = arith.constant 0 : i32
    %c0_i32_1 = arith.constant 0 : i32
    return %c0_i32, %c0_i32_0 : i32, i32
  }
  func.func @transform_6(%arg0: i32) -> (i32, i32) {
    %c0_i32 = arith.constant 0 : i32
    %c0_i32_0 = arith.constant 0 : i32
    %c0_i32_1 = arith.constant 0 : i32
    return %c0_i32, %c0_i32_0 : i32, i32
  }
  func.func @transform_7(%arg0: i32) -> (i32, i32, i32, i32) {
    %c0_i32 = arith.constant 0 : i32
    %c0_i32_0 = arith.constant 0 : i32
    %c0_i32_1 = arith.constant 0 : i32
    %c0_i32_2 = arith.constant 0 : i32
    return %arg0, %c0_i32, %c0_i32_0, %c0_i32_1 : i32, i32, i32, i32
  }
}

</mosaic_0001>

<llo_original>
// kernel: tpu_custom_call.1
$region0: #{tpu_custom_call.1}
  #allocation0 [shape = 'u32[]', space=smem, size = 0x4, offset = 0x4, fixed_abs, tag = 'smem constant byte address 0x4 - core index']
  #allocation1 [shape = 'u32[72,128]{1,0:T(1,128)}', space=vmem, size = 0x9000, scoped, tag = 'internal scratch']
  #allocation2 [shape = 'f32[18,25,32]{2,1,0:T(8,128)}', space=vmem, size = 0x48000, scoped, tag = 'scratch operand']
  #allocation3 [shape = 'f32[18,25,32]{2,1,0:T(8,128)}', space=vmem, size = 0x48000, scoped, tag = 'scratch operand']
  %s0 = inlined_call_operand.hbm [shape: f32[2,16,16,32], index: 0, kind: input, shape index: {}]
  %s1 = inlined_call_operand.hbm [shape: bf16[9,32,32], index: 1, kind: input, shape index: {}]
  %s2 = inlined_call_operand.vmem [shape: f32[1,32], index: 2, kind: input, shape index: {}]
  %s3 = inlined_call_operand.vmem [shape: f32[1,32], index: 3, kind: input, shape index: {}]
  %s4 = inlined_call_operand.hbm [shape: bf16[9,32,32], index: 4, kind: input, shape index: {}]
  %s5 = inlined_call_operand.vmem [shape: f32[1,32], index: 5, kind: input, shape index: {}]
  %s6 = inlined_call_operand.vmem [shape: f32[1,32], index: 6, kind: input, shape index: {}]
  %s7 = inlined_call_operand.hbm [shape: f32[2,16,16,32], index: 7, kind: output, shape index: {}]
  %s8 = sld [smem:[#allocation0]]
  $region73: #{tpu_custom_call.1} parent=0
    _
  %s10 = ssub.s32 1, %s8
  %s11 = scalar_select 0, %s10, %s8
  $region1: #{tpu_custom_call.1} parent=0
    #allocation4 [shape = 'u8[262144]{0}', space=vmem, size = 0x40000, scoped, tag = 'input window, operand 0']
    #allocation5 [shape = 's32[2]{0}', space=sflag, size = 0x8, scoped, tag = 'scoped memory for tpu_custom_call.1']
    #allocation6 [shape = 's32[2]{0}', space=sflag, size = 0x8, scoped, tag = 'scoped memory for tpu_custom_call.1']
    #allocation7 [shape = 'u8[73728]{0}', space=vmem, size = 0x12000, scoped, tag = 'input window, operand 1, single buffered']
    #allocation8 [shape = 's32[1]{0}', space=sflag, size = 0x4, scoped, tag = 'scoped memory for tpu_custom_call.1']
    #allocation9 [shape = 'u8[73728]{0}', space=vmem, size = 0x12000, scoped, tag = 'input window, operand 4, single buffered']
    #allocation10 [shape = 'u8[262144]{0}', space=vmem, size = 0x40000, scoped, tag = 'output window, operand 0']
    %12 = vsyncpa [#allocation5], 0
    %s13 = scalar_lea.sflag [#allocation5], 1
    %14 = vsyncpa %s13, 0
    %15 = vsyncpa [#allocation8], 0
    %16 = vsyncpa [#allocation6], 0
    %s17 = scalar_lea.sflag [#allocation6], 1
    %18 = vsyncpa %s17, 0
    loop: start=0, step=1, limit=4
    $region2: #{tpu_custom_call.1} parent=1 // loop_pre_header
      _
    $region3: #{tpu_custom_call.1} parent=1 // loop_header
      %s20 = sphi 0, %s24
      %p21 = scmp.ge.s32.totalorder %s20, 4
      %s30 = sphi 0, %s32
      %s33 = sphi 0, %s30
      %s34 = sphi 0, %s33
      %s50 = sphi 0, %s34
      %s54 = sphi 0, %s54
      %s56 = sphi 0, %s54
      %s57 = sphi 0, %s56
      %s71 = sphi 0, %s57
      %s75 = sphi 0, %s75
      %s77 = sphi 0, %s75
      %s78 = sphi 0, %s77
      %s92 = sphi 0, %s78
      %s96 = sphi 0, %s96
      %s98 = sphi 0, %s96
      %s99 = sphi 0, %s98
      %s113 = sphi 0, %s99
      %s117 = sphi 0, %s117
      %s119 = sphi 0, %s117
      %s120 = sphi 0, %s119
      %s134 = sphi 0, %s120
      %s138 = sphi 0, %s138
      %s140 = sphi 0, %s138
      %s141 = sphi 0, %s140
      %s155 = sphi 0, %s141
      %s159 = sphi 0, %s159
      %s161 = sphi 0, %s159
      %s162 = sphi 0, %s161
      %s176 = sphi 0, %s162
      %s182 = sphi 0, %s184
      %s185 = sphi 0, %s182
      %s186 = sphi 0, %s185
      %s202 = sphi 0, %s186
    $region4: #{tpu_custom_call.1} parent=1 // loop_header_branch
      %23 = sbr.rel (%p21) target = $region8
    $region5: #{tpu_custom_call.1} parent=1 // loop_body
      %s25 = ssub.s32 %s20, 1
      %s26 = ssub.s32 %s20, 2
      %s27 = sadd.s32 %s20, 1
      %s28 = ssub.s32 %s20, %s27
      %p29 = scmp.eq.s32.totalorder %s28, 0
      %s31 = sadd.s32 %s30, 1
      %s32 = scalar_select %p29, %s30, %s31
      %p35 = pneg %p29
      %p36 = scmp.eq.s32.totalorder %s20, 1
      %p37 = por %p35, %p36
      %p38 = scmp.ne.s32.totalorder %s30, %s33
      %p39 = scmp.eq.s32.totalorder %s20, 0
      %p40 = por %p38, %p39
      %p41 = scmp.ne.s32.totalorder %s30, %s33
      %p42 = scmp.eq.s32.totalorder %s25, 1
      %p43 = por %p41, %p42
      %p44 = scmp.ne.s32.totalorder %s33, %s34
      %p45 = scmp.eq.s32.totalorder %s25, 0
      %p46 = por %p44, %p45
      %p47 = scmp.ne.s32.totalorder %s33, %s34
      %p48 = scmp.eq.s32.totalorder %s26, 1
      %p49 = por %p47, %p48
      %p51 = scmp.ne.s32.totalorder %s34, %s50
      %p52 = scmp.eq.s32.totalorder %s26, 0
      %p53 = por %p51, %p52
      %s55 = sadd.s32 %s54, 1
      %p58 = scmp.eq.s32.totalorder %s20, 1
      %p59 = scmp.ne.s32.totalorder %s54, %s56
      %p60 = scmp.eq.s32.totalorder %s20, 0
      %p61 = por %p59, %p60
      %p62 = scmp.ne.s32.totalorder %s54, %s56
      %p63 = scmp.eq.s32.totalorder %s25, 1
      %p64 = por %p62, %p63
      %p65 = scmp.ne.s32.totalorder %s56, %s57
      %p66 = scmp.eq.s32.totalorder %s25, 0
      %p67 = por %p65, %p66
      %p68 = scmp.ne.s32.totalorder %s56, %s57
      %p69 = scmp.eq.s32.totalorder %s26, 1
      %p70 = por %p68, %p69
      %p72 = scmp.ne.s32.totalorder %s57, %s71
      %p73 = scmp.eq.s32.totalorder %s26, 0
      %p74 = por %p72, %p73
      %s76 = sadd.s32 %s75, 1
      %p79 = scmp.eq.s32.totalorder %s20, 1
      %p80 = scmp.ne.s32.totalorder %s75, %s77
      %p81 = scmp.eq.s32.totalorder %s20, 0
      %p82 = por %p80, %p81
      %p83 = scmp.ne.s32.totalorder %s75, %s77
      %p84 = scmp.eq.s32.totalorder %s25, 1
      %p85 = por %p83, %p84
      %p86 = scmp.ne.s32.totalorder %s77, %s78
      %p87 = scmp.eq.s32.totalorder %s25, 0
      %p88 = por %p86, %p87
      %p89 = scmp.ne.s32.totalorder %s77, %s78
      %p90 = scmp.eq.s32.totalorder %s26, 1
      %p91 = por %p89, %p90
      %p93 = scmp.ne.s32.totalorder %s78, %s92
      %p94 = scmp.eq.s32.totalorder %s26, 0
      %p95 = por %p93, %p94
      %s97 = sadd.s32 %s96, 1
      %p100 = scmp.eq.s32.totalorder %s20, 1
      %p101 = scmp.ne.s32.totalorder %s96, %s98
      %p102 = scmp.eq.s32.totalorder %s20, 0
      %p103 = por %p101, %p102
      %p104 = scmp.ne.s32.totalorder %s96, %s98
      %p105 = scmp.eq.s32.totalorder %s25, 1
      %p106 = por %p104, %p105
      %p107 = scmp.ne.s32.totalorder %s98, %s99
      %p108 = scmp.eq.s32.totalorder %s25, 0
      %p109 = por %p107, %p108
      %p110 = scmp.ne.s32.totalorder %s98, %s99
      %p111 = scmp.eq.s32.totalorder %s26, 1
      %p112 = por %p110, %p111
      %p114 = scmp.ne.s32.totalorder %s99, %s113
      %p115 = scmp.eq.s32.totalorder %s26, 0
      %p116 = por %p114, %p115
      %s118 = sadd.s32 %s117, 1
      %p121 = scmp.eq.s32.totalorder %s20, 1
      %p122 = scmp.ne.s32.totalorder %s117, %s119
      %p123 = scmp.eq.s32.totalorder %s20, 0
      %p124 = por %p122, %p123
      %p125 = scmp.ne.s32.totalorder %s117, %s119
      %p126 = scmp.eq.s32.totalorder %s25, 1
      %p127 = por %p125, %p126
      %p128 = scmp.ne.s32.totalorder %s119, %s120
      %p129 = scmp.eq.s32.totalorder %s25, 0
      %p130 = por %p128, %p129
      %p131 = scmp.ne.s32.totalorder %s119, %s120
      %p132 = scmp.eq.s32.totalorder %s26, 1
      %p133 = por %p131, %p132
      %p135 = scmp.ne.s32.totalorder %s120, %s134
      %p136 = scmp.eq.s32.totalorder %s26, 0
      %p137 = por %p135, %p136
      %s139 = sadd.s32 %s138, 1
      %p142 = scmp.eq.s32.totalorder %s20, 1
      %p143 = scmp.ne.s32.totalorder %s138, %s140
      %p144 = scmp.eq.s32.totalorder %s20, 0
      %p145 = por %p143, %p144
      %p146 = scmp.ne.s32.totalorder %s138, %s140
      %p147 = scmp.eq.s32.totalorder %s25, 1
      %p148 = por %p146, %p147
      %p149 = scmp.ne.s32.totalorder %s140, %s141
      %p150 = scmp.eq.s32.totalorder %s25, 0
      %p151 = por %p149, %p150
      %p152 = scmp.ne.s32.totalorder %s140, %s141
      %p153 = scmp.eq.s32.totalorder %s26, 1
      %p154 = por %p152, %p153
      %p156 = scmp.ne.s32.totalorder %s141, %s155
      %p157 = scmp.eq.s32.totalorder %s26, 0
      %p158 = por %p156, %p157
      %s160 = sadd.s32 %s159, 1
      %p163 = scmp.eq.s32.totalorder %s20, 1
      %p164 = scmp.ne.s32.totalorder %s159, %s161
      %p165 = scmp.eq.s32.totalorder %s20, 0
      %p166 = por %p164, %p165
      %p167 = scmp.ne.s32.totalorder %s159, %s161
      %p168 = scmp.eq.s32.totalorder %s25, 1
      %p169 = por %p167, %p168
      %p170 = scmp.ne.s32.totalorder %s161, %s162
      %p171 = scmp.eq.s32.totalorder %s25, 0
      %p172 = por %p170, %p171
      %p173 = scmp.ne.s32.totalorder %s161, %s162
      %p174 = scmp.eq.s32.totalorder %s26, 1
      %p175 = por %p173, %p174
      %p177 = scmp.ne.s32.totalorder %s162, %s176
      %p178 = scmp.eq.s32.totalorder %s26, 0
      %p179 = por %p177, %p178
      %s180 = ssub.s32 %s20, %s27
      %p181 = scmp.eq.s32.totalorder %s180, 0
      %s183 = sadd.s32 %s182, 1
      %s184 = scalar_select %p181, %s182, %s183
      %p187 = pneg %p181
      %p188 = scmp.eq.s32.totalorder %s20, 1
      %p189 = por %p187, %p188
      %p190 = scmp.ne.s32.totalorder %s182, %s185
      %p191 = scmp.eq.s32.totalorder %s20, 0
      %p192 = por %p190, %p191
      %p193 = scmp.ne.s32.totalorder %s182, %s185
      %p194 = scmp.eq.s32.totalorder %s25, 1
      %p195 = por %p193, %p194
      %p196 = scmp.ne.s32.totalorder %s185, %s186
      %p197 = scmp.eq.s32.totalorder %s25, 0
      %p198 = por %p196, %p197
      %p199 = scmp.ne.s32.totalorder %s185, %s186
      %p200 = scmp.eq.s32.totalorder %s26, 1
      %p201 = por %p199, %p200
      %p203 = scmp.ne.s32.totalorder %s186, %s202
      %p204 = scmp.eq.s32.totalorder %s26, 0
      %p205 = por %p203, %p204
      %p206 = scmp.le.s32.totalorder 1, %s20
      %p207 = scmp.lt.s32.totalorder %s20, 3
      %p208 = pnand %p206, %p207
      %p209 = pneg %p208
      // Predicated region
      $region9: #{tpu_custom_call.1} parent=5 // pred_check
        _
      $region10: #{tpu_custom_call.1} parent=5 // pred_check_branch
        %211 = sbr.rel (%p208) target = $region12
      $region11: #{tpu_custom_call.1} parent=5 // pred_region
        %s212 = ssub.s32 %s20, 1
        // Predicated region
        $region13: #{tpu_custom_call.1} parent=11 // pred_check
          %p213 = pneg %p67
        $region14: #{tpu_custom_call.1} parent=11 // pred_check_branch
          %215 = sbr.rel (%p213) target = $region16
        $region15: #{tpu_custom_call.1} parent=11 // pred_region
          %217 = vsyncadd [#allocation8], 0
          %s218 = sshll.u32 %s1, 4
          %s219 = int_to_ptr.hbm [resolvable:$true] %s218
          %s220 = sshll.u32 [#allocation7], 4
          %s221 = int_to_ptr.vmem [resolvable:$true] %s220
          %226 = dma.hbm_to_vmem [thread:$0]  %s219, 2304, %s221, [#allocation8], 64, 64, 4
        $region16: #{tpu_custom_call.1} parent=11 // pred_fallthru
          _
        // Predicated region
        $region17: #{tpu_custom_call.1} parent=11 // pred_check
          %p227 = pneg %p88
        $region18: #{tpu_custom_call.1} parent=11 // pred_check_branch
          %229 = sbr.rel (%p227) target = $region20
        $region19: #{tpu_custom_call.1} parent=11 // pred_region
          _
        $region20: #{tpu_custom_call.1} parent=11 // pred_fallthru
          _
        // Predicated region
        $region21: #{tpu_custom_call.1} parent=11 // pred_check
          %p230 = pneg %p109
        $region22: #{tpu_custom_call.1} parent=11 // pred_check_branch
          %232 = sbr.rel (%p230) target = $region24
        $region23: #{tpu_custom_call.1} parent=11 // pred_region
          _
        $region24: #{tpu_custom_call.1} parent=11 // pred_fallthru
          _
        // Predicated region
        $region25: #{tpu_custom_call.1} parent=11 // pred_check
          %p233 = pneg %p130
        $region26: #{tpu_custom_call.1} parent=11 // pred_check_branch
          %235 = sbr.rel (%p233) target = $region28
        $region27: #{tpu_custom_call.1} parent=11 // pred_region
          %237 = vsyncadd [#allocation8], 0
          %s238 = sshll.u32 %s4, 4
          %s239 = int_to_ptr.hbm [resolvable:$true] %s238
          %s240 = sshll.u32 [#allocation9], 4
          %s241 = int_to_ptr.vmem [resolvable:$true] %s240
          %246 = dma.hbm_to_vmem [thread:$0]  %s239, 2304, %s241, [#allocation8], 64, 64, 4
        $region28: #{tpu_custom_call.1} parent=11 // pred_fallthru
          _
        // Predicated region
        $region29: #{tpu_custom_call.1} parent=11 // pred_check
          %p247 = pneg %p151
        $region30: #{tpu_custom_call.1} parent=11 // pred_check_branch
          %249 = sbr.rel (%p247) target = $region32
        $region31: #{tpu_custom_call.1} parent=11 // pred_region
          _
        $region32: #{tpu_custom_call.1} parent=11 // pred_fallthru
          _
        // Predicated region
        $region33: #{tpu_custom_call.1} parent=11 // pred_check
          %p250 = pneg %p172
        $region34: #{tpu_custom_call.1} parent=11 // pred_check_branch
          %252 = sbr.rel (%p250) target = $region36
        $region35: #{tpu_custom_call.1} parent=11 // pred_region
          _
        $region36: #{tpu_custom_call.1} parent=11 // pred_fallthru
          _
      $region12: #{tpu_custom_call.1} parent=5 // pred_fallthru
        _
      %p253 = scmp.lt.s32.totalorder %s20, 2
      // Predicated region
      $region37: #{tpu_custom_call.1} parent=5 // pred_check
        %p254 = pneg %p253
      $region38: #{tpu_custom_call.1} parent=5 // pred_check_branch
        %256 = sbr.rel (%p254) target = $region40
      $region39: #{tpu_custom_call.1} parent=5 // pred_region
        // Predicated region
        $region41: #{tpu_custom_call.1} parent=39 // pred_check
          %p257 = pneg %p40
        $region42: #{tpu_custom_call.1} parent=39 // pred_check_branch
          %259 = sbr.rel (%p257) target = $region44
        $region43: #{tpu_custom_call.1} parent=39 // pred_region
          %s260 = sand.u32 %s30, 1
          %s261 = scalar_lea.sflag [#allocation5], %s260
          %s262 = sand.u32 %s30, 1
          %s263 = smul.addr %s262, 256
          %s264 = scalar_lea.vmem [#allocation4], %s263
          %266 = vsyncadd %s261, 0
          %s267 = smul.addr %s20, 32
          %s268 = smul.addr %s267, 8
          %s269 = scalar_lea.hbm %s0, %s268
          %s270 = sshll.u32 %s269, 4
          %s271 = int_to_ptr.hbm [resolvable:$true] %s270
          %s272 = sshll.u32 %s264, 4
          %s273 = int_to_ptr.vmem [resolvable:$true] %s272
          %278 = dma.hbm_to_vmem [thread:$0]  %s271, 4096, %s273, %s261, 128, 128, 8
        $region44: #{tpu_custom_call.1} parent=39 // pred_fallthru
          _
      $region40: #{tpu_custom_call.1} parent=5 // pred_fallthru
        _
      %p279 = scmp.le.s32.totalorder 1, %s20
      %p280 = scmp.lt.s32.totalorder %s20, 3
      %p281 = pnand %p279, %p280
      %p282 = pneg %p281
      // Predicated region
      $region45: #{tpu_custom_call.1} parent=5 // pred_check
        _
      $region46: #{tpu_custom_call.1} parent=5 // pred_check_branch
        %284 = sbr.rel (%p281) target = $region48
      $region47: #{tpu_custom_call.1} parent=5 // pred_region
        %s285 = ssub.s32 %s20, 1
        %s286 = sand.u32 %s33, 1
        %s287 = scalar_lea.sflag [#allocation5], %s286
        %s288 = sand.u32 %s33, 1
        %s289 = smul.addr %s288, 256
        %s290 = scalar_lea.vmem [#allocation4], %s289
        // Predicated region
        $region49: #{tpu_custom_call.1} parent=47 // pred_check
          %p291 = pneg %p46
        $region50: #{tpu_custom_call.1} parent=47 // pred_check_branch
          %293 = sbr.rel (%p291) target = $region52
        $region51: #{tpu_custom_call.1} parent=47 // pred_region
          %295 = dma.done %s287, 4096
        $region52: #{tpu_custom_call.1} parent=47 // pred_fallthru
          _
        // Predicated region
        $region53: #{tpu_custom_call.1} parent=47 // pred_check
          %p296 = pneg %p67
        $region54: #{tpu_custom_call.1} parent=47 // pred_check_branch
          %298 = sbr.rel (%p296) target = $region56
        $region55: #{tpu_custom_call.1} parent=47 // pred_region
          %300 = dma.done [#allocation8], 2304
        $region56: #{tpu_custom_call.1} parent=47 // pred_fallthru
          _
        // Predicated region
        $region57: #{tpu_custom_call.1} parent=47 // pred_check
          %p301 = pneg %p130
        $region58: #{tpu_custom_call.1} parent=47 // pred_check_branch
          %303 = sbr.rel (%p301) target = $region60
        $region59: #{tpu_custom_call.1} parent=47 // pred_region
          %305 = dma.done [#allocation8], 2304
        $region60: #{tpu_custom_call.1} parent=47 // pred_fallthru
          _
        %s306 = sand.u32 %s33, 1
        %s307 = scalar_lea.sflag [#allocation5], %s306
        %s308 = sand.u32 %s33, 1
        %s309 = smul.addr %s308, 256
        %s310 = scalar_lea.vmem [#allocation4], %s309
        %p311 = pneg %p46
        %p312 = pneg %p43
        %p313 = pneg %p67
        %p314 = pneg %p64
        %p315 = pneg %p88
        %p316 = pneg %p85
        %p317 = pneg %p109
        %p318 = pneg %p106
        %p319 = pneg %p130
        %p320 = pneg %p127
        %p321 = pneg %p151
        %p322 = pneg %p148
        %p323 = pneg %p172
        %p324 = pneg %p169
        %p325 = pneg %p198
        %p326 = pneg %p195
        %s327 = sand.u32 %s185, 1
        %s328 = scalar_lea.sflag [#allocation6], %s327
        %s329 = sand.u32 %s185, 1
        %s330 = smul.addr %s329, 256
        %s331 = scalar_lea.vmem [#allocation10], %s330
        %vm333 = vcmask 261120
        %334 = vst.msk [vmem:[#allocation2] sm:$0xff] %vm333, 0.0
        %335 = vst.msk [vmem:[#allocation2 + $0x8] sm:$0xff] %vm333, 0.0
        %336 = vst.msk [vmem:[#allocation2 + $0x10] sm:$0xff] %vm333, 0.0
        %vm337 = vcmask 253952
        %338 = vst.msk [vmem:[#allocation2 + $0x18] sm:$0x1] %vm337, 0.0
        %339 = vst.msk [vmem:[#allocation2 + $0x20] sm:$0xff] %vm333, 0.0
        %340 = vst.msk [vmem:[#allocation2 + $0x28] sm:$0xff] %vm333, 0.0
        %341 = vst.msk [vmem:[#allocation2 + $0x30] sm:$0xff] %vm333, 0.0
        %342 = vst.msk [vmem:[#allocation2 + $0x38] sm:$0x1] %vm337, 0.0
        %343 = vst.msk [vmem:[#allocation2 + $0x40] sm:$0xff] %vm333, 0.0
        %344 = vst.msk [vmem:[#allocation2 + $0x48] sm:$0xff] %vm333, 0.0
        %345 = vst.msk [vmem:[#allocation2 + $0x50] sm:$0xff] %vm333, 0.0
        %346 = vst.msk [vmem:[#allocation2 + $0x58] sm:$0x1] %vm337, 0.0
        %347 = vst.msk [vmem:[#allocation2 + $0x60] sm:$0xff] %vm333, 0.0
        %348 = vst.msk [vmem:[#allocation2 + $0x68] sm:$0xff] %vm333, 0.0
        %349 = vst.msk [vmem:[#allocation2 + $0x70] sm:$0xff] %vm333, 0.0
        %350 = vst.msk [vmem:[#allocation2 + $0x78] sm:$0x1] %vm337, 0.0
        %351 = vst.msk [vmem:[#allocation2 + $0x80] sm:$0xff] %vm333, 0.0
        %352 = vst.msk [vmem:[#allocation2 + $0x88] sm:$0xff] %vm333, 0.0
        %353 = vst.msk [vmem:[#allocation2 + $0x90] sm:$0xff] %vm333, 0.0
        %354 = vst.msk [vmem:[#allocation2 + $0x98] sm:$0x1] %vm337, 0.0
        %355 = vst.msk [vmem:[#allocation2 + $0xa0] sm:$0xff] %vm333, 0.0
        %356 = vst.msk [vmem:[#allocation2 + $0xa8] sm:$0xff] %vm333, 0.0
        %357 = vst.msk [vmem:[#allocation2 + $0xb0] sm:$0xff] %vm333, 0.0
        %358 = vst.msk [vmem:[#allocation2 + $0xb8] sm:$0x1] %vm337, 0.0
        %359 = vst.msk [vmem:[#allocation2 + $0xc0] sm:$0xff] %vm333, 0.0
        %360 = vst.msk [vmem:[#allocation2 + $0xc8] sm:$0xff] %vm333, 0.0
        %361 = vst.msk [vmem:[#allocation2 + $0xd0] sm:$0xff] %vm333, 0.0
        %362 = vst.msk [vmem:[#allocation2 + $0xd8] sm:$0x1] %vm337, 0.0
        %363 = vst.msk [vmem:[#allocation2 + $0xe0] sm:$0xff] %vm333, 0.0
        %364 = vst.msk [vmem:[#allocation2 + $0xe8] sm:$0xff] %vm333, 0.0
        %365 = vst.msk [vmem:[#allocation2 + $0xf0] sm:$0xff] %vm333, 0.0
        %366 = vst.msk [vmem:[#allocation2 + $0xf8] sm:$0x1] %vm337, 0.0
        %367 = vst.msk [vmem:[#allocation2 + $0x100] sm:$0xff] %vm333, 0.0
        %368 = vst.msk [vmem:[#allocation2 + $0x108] sm:$0xff] %vm333, 0.0
        %369 = vst.msk [vmem:[#allocation2 + $0x110] sm:$0xff] %vm333, 0.0
        %370 = vst.msk [vmem:[#allocation2 + $0x118] sm:$0x1] %vm337, 0.0
        %371 = vst.msk [vmem:[#allocation2 + $0x120] sm:$0xff] %vm333, 0.0
        %372 = vst.msk [vmem:[#allocation2 + $0x128] sm:$0xff] %vm333, 0.0
        %373 = vst.msk [vmem:[#allocation2 + $0x130] sm:$0xff] %vm333, 0.0
        %374 = vst.msk [vmem:[#allocation2 + $0x138] sm:$0x1] %vm337, 0.0
        %375 = vst.msk [vmem:[#allocation2 + $0x140] sm:$0xff] %vm333, 0.0
        %376 = vst.msk [vmem:[#allocation2 + $0x148] sm:$0xff] %vm333, 0.0
        %377 = vst.msk [vmem:[#allocation2 + $0x150] sm:$0xff] %vm333, 0.0
        %378 = vst.msk [vmem:[#allocation2 + $0x158] sm:$0x1] %vm337, 0.0
        %379 = vst.msk [vmem:[#allocation2 + $0x160] sm:$0xff] %vm333, 0.0
        %380 = vst.msk [vmem:[#allocation2 + $0x168] sm:$0xff] %vm333, 0.0
        %381 = vst.msk [vmem:[#allocation2 + $0x170] sm:$0xff] %vm333, 0.0
        %382 = vst.msk [vmem:[#allocation2 + $0x178] sm:$0x1] %vm337, 0.0
        %383 = vst.msk [vmem:[#allocation2 + $0x180] sm:$0xff] %vm333, 0.0
        %384 = vst.msk [vmem:[#allocation2 + $0x188] sm:$0xff] %vm333, 0.0
        %385 = vst.msk [vmem:[#allocation2 + $0x190] sm:$0xff] %vm333, 0.0
        %386 = vst.msk [vmem:[#allocation2 + $0x198] sm:$0x1] %vm337, 0.0
        %387 = vst.msk [vmem:[#allocation2 + $0x1a0] sm:$0xff] %vm333, 0.0
        %388 = vst.msk [vmem:[#allocation2 + $0x1a8] sm:$0xff] %vm333, 0.0
        %389 = vst.msk [vmem:[#allocation2 + $0x1b0] sm:$0xff] %vm333, 0.0
        %390 = vst.msk [vmem:[#allocation2 + $0x1b8] sm:$0x1] %vm337, 0.0
        %391 = vst.msk [vmem:[#allocation2 + $0x1c0] sm:$0xff] %vm333, 0.0
        %392 = vst.msk [vmem:[#allocation2 + $0x1c8] sm:$0xff] %vm333, 0.0
        %393 = vst.msk [vmem:[#allocation2 + $0x1d0] sm:$0xff] %vm333, 0.0
        %394 = vst.msk [vmem:[#allocation2 + $0x1d8] sm:$0x1] %vm337, 0.0
        %395 = vst.msk [vmem:[#allocation2 + $0x1e0] sm:$0xff] %vm333, 0.0
        %396 = vst.msk [vmem:[#allocation2 + $0x1e8] sm:$0xff] %vm333, 0.0
        %397 = vst.msk [vmem:[#allocation2 + $0x1f0] sm:$0xff] %vm333, 0.0
        %398 = vst.msk [vmem:[#allocation2 + $0x1f8] sm:$0x1] %vm337, 0.0
        %399 = vst.msk [vmem:[#allocation2 + $0x200] sm:$0xff] %vm333, 0.0
        %400 = vst.msk [vmem:[#allocation2 + $0x208] sm:$0xff] %vm333, 0.0
        %401 = vst.msk [vmem:[#allocation2 + $0x210] sm:$0xff] %vm333, 0.0
        %402 = vst.msk [vmem:[#allocation2 + $0x218] sm:$0x1] %vm337, 0.0
        %403 = vst.msk [vmem:[#allocation2 + $0x220] sm:$0xff] %vm333, 0.0
        %404 = vst.msk [vmem:[#allocation2 + $0x228] sm:$0xff] %vm333, 0.0
        %405 = vst.msk [vmem:[#allocation2 + $0x230] sm:$0xff] %vm333, 0.0
        %406 = vst.msk [vmem:[#allocation2 + $0x238] sm:$0x1] %vm337, 0.0
        %407 = vst.msk [vmem:[#allocation3] sm:$0xff] %vm333, 0.0
        %408 = vst.msk [vmem:[#allocation3 + $0x8] sm:$0xff] %vm333, 0.0
        %409 = vst.msk [vmem:[#allocation3 + $0x10] sm:$0xff] %vm333, 0.0
        %410 = vst.msk [vmem:[#allocation3 + $0x18] sm:$0x1] %vm337, 0.0
        %411 = vst.msk [vmem:[#allocation3 + $0x20] sm:$0xff] %vm333, 0.0
        %412 = vst.msk [vmem:[#allocation3 + $0x28] sm:$0xff] %vm333, 0.0
        %413 = vst.msk [vmem:[#allocation3 + $0x30] sm:$0xff] %vm333, 0.0
        %414 = vst.msk [vmem:[#allocation3 + $0x38] sm:$0x1] %vm337, 0.0
        %415 = vst.msk [vmem:[#allocation3 + $0x40] sm:$0xff] %vm333, 0.0
        %416 = vst.msk [vmem:[#allocation3 + $0x48] sm:$0xff] %vm333, 0.0
        %417 = vst.msk [vmem:[#allocation3 + $0x50] sm:$0xff] %vm333, 0.0
        %418 = vst.msk [vmem:[#allocation3 + $0x58] sm:$0x1] %vm337, 0.0
        %419 = vst.msk [vmem:[#allocation3 + $0x60] sm:$0xff] %vm333, 0.0
        %420 = vst.msk [vmem:[#allocation3 + $0x68] sm:$0xff] %vm333, 0.0
        %421 = vst.msk [vmem:[#allocation3 + $0x70] sm:$0xff] %vm333, 0.0
        %422 = vst.msk [vmem:[#allocation3 + $0x78] sm:$0x1] %vm337, 0.0
        %423 = vst.msk [vmem:[#allocation3 + $0x80] sm:$0xff] %vm333, 0.0
        %424 = vst.msk [vmem:[#allocation3 + $0x88] sm:$0xff] %vm333, 0.0
        %425 = vst.msk [vmem:[#allocation3 + $0x90] sm:$0xff] %vm333, 0.0
        %426 = vst.msk [vmem:[#allocation3 + $0x98] sm:$0x1] %vm337, 0.0
        %427 = vst.msk [vmem:[#allocation3 + $0xa0] sm:$0xff] %vm333, 0.0
        %428 = vst.msk [vmem:[#allocation3 + $0xa8] sm:$0xff] %vm333, 0.0
        %429 = vst.msk [vmem:[#allocation3 + $0xb0] sm:$0xff] %vm333, 0.0
        %430 = vst.msk [vmem:[#allocation3 + $0xb8] sm:$0x1] %vm337, 0.0
        %431 = vst.msk [vmem:[#allocation3 + $0xc0] sm:$0xff] %vm333, 0.0
        %432 = vst.msk [vmem:[#allocation3 + $0xc8] sm:$0xff] %vm333, 0.0
        %433 = vst.msk [vmem:[#allocation3 + $0xd0] sm:$0xff] %vm333, 0.0
        %434 = vst.msk [vmem:[#allocation3 + $0xd8] sm:$0x1] %vm337, 0.0
        %435 = vst.msk [vmem:[#allocation3 + $0xe0] sm:$0xff] %vm333, 0.0
        %436 = vst.msk [vmem:[#allocation3 + $0xe8] sm:$0xff] %vm333, 0.0
        %437 = vst.msk [vmem:[#allocation3 + $0xf0] sm:$0xff] %vm333, 0.0
        %438 = vst.msk [vmem:[#allocation3 + $0xf8] sm:$0x1] %vm337, 0.0
        %439 = vst.msk [vmem:[#allocation3 + $0x100] sm:$0xff] %vm333, 0.0
        %440 = vst.msk [vmem:[#allocation3 + $0x108] sm:$0xff] %vm333, 0.0
        %441 = vst.msk [vmem:[#allocation3 + $0x110] sm:$0xff] %vm333, 0.0
        %442 = vst.msk [vmem:[#allocation3 + $0x118] sm:$0x1] %vm337, 0.0
        %443 = vst.msk [vmem:[#allocation3 + $0x120] sm:$0xff] %vm333, 0.0
        %444 = vst.msk [vmem:[#allocation3 + $0x128] sm:$0xff] %vm333, 0.0
        %445 = vst.msk [vmem:[#allocation3 + $0x130] sm:$0xff] %vm333, 0.0
        %446 = vst.msk [vmem:[#allocation3 + $0x138] sm:$0x1] %vm337, 0.0
        %447 = vst.msk [vmem:[#allocation3 + $0x140] sm:$0xff] %vm333, 0.0
        %448 = vst.msk [vmem:[#allocation3 + $0x148] sm:$0xff] %vm333, 0.0
        %449 = vst.msk [vmem:[#allocation3 + $0x150] sm:$0xff] %vm333, 0.0
        %450 = vst.msk [vmem:[#allocation3 + $0x158] sm:$0x1] %vm337, 0.0
        %451 = vst.msk [vmem:[#allocation3 + $0x160] sm:$0xff] %vm333, 0.0
        %452 = vst.msk [vmem:[#allocation3 + $0x168] sm:$0xff] %vm333, 0.0
        %453 = vst.msk [vmem:[#allocation3 + $0x170] sm:$0xff] %vm333, 0.0
        %454 = vst.msk [vmem:[#allocation3 + $0x178] sm:$0x1] %vm337, 0.0
        %455 = vst.msk [vmem:[#allocation3 + $0x180] sm:$0xff] %vm333, 0.0
        %456 = vst.msk [vmem:[#allocation3 + $0x188] sm:$0xff] %vm333, 0.0
        %457 = vst.msk [vmem:[#allocation3 + $0x190] sm:$0xff] %vm333, 0.0
        %458 = vst.msk [vmem:[#allocation3 + $0x198] sm:$0x1] %vm337, 0.0
        %459 = vst.msk [vmem:[#allocation3 + $0x1a0] sm:$0xff] %vm333, 0.0
        %460 = vst.msk [vmem:[#allocation3 + $0x1a8] sm:$0xff] %vm333, 0.0
        %461 = vst.msk [vmem:[#allocation3 + $0x1b0] sm:$0xff] %vm333, 0.0
        %462 = vst.msk [vmem:[#allocation3 + $0x1b8] sm:$0x1] %vm337, 0.0
        %463 = vst.msk [vmem:[#allocation3 + $0x1c0] sm:$0xff] %vm333, 0.0
        %464 = vst.msk [vmem:[#allocation3 + $0x1c8] sm:$0xff] %vm333, 0.0
        %465 = vst.msk [vmem:[#allocation3 + $0x1d0] sm:$0xff] %vm333, 0.0
        %466 = vst.msk [vmem:[#allocation3 + $0x1d8] sm:$0x1] %vm337, 0.0
        %467 = vst.msk [vmem:[#allocation3 + $0x1e0] sm:$0xff] %vm333, 0.0
        %468 = vst.msk [vmem:[#allocation3 + $0x1e8] sm:$0xff] %vm333, 0.0
        %469 = vst.msk [vmem:[#allocation3 + $0x1f0] sm:$0xff] %vm333, 0.0
        %470 = vst.msk [vmem:[#allocation3 + $0x1f8] sm:$0x1] %vm337, 0.0
        %471 = vst.msk [vmem:[#allocation3 + $0x200] sm:$0xff] %vm333, 0.0
        %472 = vst.msk [vmem:[#allocation3 + $0x208] sm:$0xff] %vm333, 0.0
        %473 = vst.msk [vmem:[#allocation3 + $0x210] sm:$0xff] %vm333, 0.0
        %474 = vst.msk [vmem:[#allocation3 + $0x218] sm:$0x1] %vm337, 0.0
        %475 = vst.msk [vmem:[#allocation3 + $0x220] sm:$0xff] %vm333, 0.0
        %476 = vst.msk [vmem:[#allocation3 + $0x228] sm:$0xff] %vm333, 0.0
        %477 = vst.msk [vmem:[#allocation3 + $0x230] sm:$0xff] %vm333, 0.0
        %478 = vst.msk [vmem:[#allocation3 + $0x238] sm:$0x1] %vm337, 0.0
        %v479 = vld [vmem:[%s290] sm:$0xff]
        %v480 = vld [vmem:[%s290 + $0x8] sm:$0xff]
        %v481 = vld [vmem:[%s290 + $0x10] sm:$0xff]
        %v482 = vld [vmem:[%s290 + $0x18] sm:$0xff]
        %v483 = vld [vmem:[%s290 + $0x20] sm:$0xff]
        %v484 = vld [vmem:[%s290 + $0x28] sm:$0xff]
        %v485 = vld [vmem:[%s290 + $0x30] sm:$0xff]
        %v486 = vld [vmem:[%s290 + $0x38] sm:$0xff]
        %v487 = vld [vmem:[%s290 + $0x40] sm:$0xff]
        %v488 = vld [vmem:[%s290 + $0x48] sm:$0xff]
        %v489 = vld [vmem:[%s290 + $0x50] sm:$0xff]
        %v490 = vld [vmem:[%s290 + $0x58] sm:$0xff]
        %v491 = vld [vmem:[%s290 + $0x60] sm:$0xff]
        %v492 = vld [vmem:[%s290 + $0x68] sm:$0xff]
        %v493 = vld [vmem:[%s290 + $0x70] sm:$0xff]
        %v494 = vld [vmem:[%s290 + $0x78] sm:$0xff]
        %v495 = vld [vmem:[%s290 + $0x80] sm:$0xff]
        %v496 = vld [vmem:[%s290 + $0x88] sm:$0xff]
        %v497 = vld [vmem:[%s290 + $0x90] sm:$0xff]
        %v498 = vld [vmem:[%s290 + $0x98] sm:$0xff]
        %v499 = vld [vmem:[%s290 + $0xa0] sm:$0xff]
        %v500 = vld [vmem:[%s290 + $0xa8] sm:$0xff]
        %v501 = vld [vmem:[%s290 + $0xb0] sm:$0xff]
        %v502 = vld [vmem:[%s290 + $0xb8] sm:$0xff]
        %v503 = vld [vmem:[%s290 + $0xc0] sm:$0xff]
        %v504 = vld [vmem:[%s290 + $0xc8] sm:$0xff]
        %v505 = vld [vmem:[%s290 + $0xd0] sm:$0xff]
        %v506 = vld [vmem:[%s290 + $0xd8] sm:$0xff]
        %v507 = vld [vmem:[%s290 + $0xe0] sm:$0xff]
        %v508 = vld [vmem:[%s290 + $0xe8] sm:$0xff]
        %v509 = vld [vmem:[%s290 + $0xf0] sm:$0xff]
        %v510 = vld [vmem:[%s290 + $0xf8] sm:$0xff]
        %s511 = scalar_lea.vmem [#allocation2], 32
        %512 = vst.msk [vmem:[%s511 + $0x8] sm:$0xff] %vm333, %v479
        %513 = vst.msk [vmem:[%s511 + $0x10] sm:$0xff] %vm333, %v480
        %514 = vst.msk [vmem:[%s511 + $0x28] sm:$0xff] %vm333, %v481
        %515 = vst.msk [vmem:[%s511 + $0x30] sm:$0xff] %vm333, %v482
        %516 = vst.msk [vmem:[%s511 + $0x48] sm:$0xff] %vm333, %v483
        %517 = vst.msk [vmem:[%s511 + $0x50] sm:$0xff] %vm333, %v484
        %518 = vst.msk [vmem:[%s511 + $0x68] sm:$0xff] %vm333, %v485
        %519 = vst.msk [vmem:[%s511 + $0x70] sm:$0xff] %vm333, %v486
        %520 = vst.msk [vmem:[%s511 + $0x88] sm:$0xff] %vm333, %v487
        %521 = vst.msk [vmem:[%s511 + $0x90] sm:$0xff] %vm333, %v488
        %522 = vst.msk [vmem:[%s511 + $0xa8] sm:$0xff] %vm333, %v489
        %523 = vst.msk [vmem:[%s511 + $0xb0] sm:$0xff] %vm333, %v490
        %524 = vst.msk [vmem:[%s511 + $0xc8] sm:$0xff] %vm333, %v491
        %525 = vst.msk [vmem:[%s511 + $0xd0] sm:$0xff] %vm333, %v492
        %526 = vst.msk [vmem:[%s511 + $0xe8] sm:$0xff] %vm333, %v493
        %527 = vst.msk [vmem:[%s511 + $0xf0] sm:$0xff] %vm333, %v494
        %528 = vst.msk [vmem:[%s511 + $0x108] sm:$0xff] %vm333, %v495
        %529 = vst.msk [vmem:[%s511 + $0x110] sm:$0xff] %vm333, %v496
        %530 = vst.msk [vmem:[%s511 + $0x128] sm:$0xff] %vm333, %v497
        %531 = vst.msk [vmem:[%s511 + $0x130] sm:$0xff] %vm333, %v498
        %532 = vst.msk [vmem:[%s511 + $0x148] sm:$0xff] %vm333, %v499
        %533 = vst.msk [vmem:[%s511 + $0x150] sm:$0xff] %vm333, %v500
        %534 = vst.msk [vmem:[%s511 + $0x168] sm:$0xff] %vm333, %v501
        %535 = vst.msk [vmem:[%s511 + $0x170] sm:$0xff] %vm333, %v502
        %536 = vst.msk [vmem:[%s511 + $0x188] sm:$0xff] %vm333, %v503
        %537 = vst.msk [vmem:[%s511 + $0x190] sm:$0xff] %vm333, %v504
        %538 = vst.msk [vmem:[%s511 + $0x1a8] sm:$0xff] %vm333, %v505
        %539 = vst.msk [vmem:[%s511 + $0x1b0] sm:$0xff] %vm333, %v506
        %540 = vst.msk [vmem:[%s511 + $0x1c8] sm:$0xff] %vm333, %v507
        %541 = vst.msk [vmem:[%s511 + $0x1d0] sm:$0xff] %vm333, %v508
        %542 = vst.msk [vmem:[%s511 + $0x1e8] sm:$0xff] %vm333, %v509
        %543 = vst.msk [vmem:[%s511 + $0x1f0] sm:$0xff] %vm333, %v510
        %v544 = vld [vmem:[#allocation2 + $0x7] sm:$0xff]
        %v545 = vld [vmem:[#allocation2 + $0xf] sm:$0xff]
        %v546 = vld [vmem:[#allocation2 + $0x27] sm:$0xff]
        %v547 = vld [vmem:[#allocation2 + $0x2f] sm:$0xff]
        %v548 = vld [vmem:[#allocation2 + $0x47] sm:$0xff]
        %v549 = vld [vmem:[#allocation2 + $0x4f] sm:$0xff]
        %v550 = vld [vmem:[#allocation2 + $0x67] sm:$0xff]
        %v551 = vld [vmem:[#allocation2 + $0x6f] sm:$0xff]
        %v552 = vld [vmem:[#allocation2 + $0x87] sm:$0xff]
        %v553 = vld [vmem:[#allocation2 + $0x8f] sm:$0xff]
        %v554 = vld [vmem:[#allocation2 + $0xa7] sm:$0xff]
        %v555 = vld [vmem:[#allocation2 + $0xaf] sm:$0xff]
        %v556 = vld [vmem:[#allocation2 + $0xc7] sm:$0xff]
        %v557 = vld [vmem:[#allocation2 + $0xcf] sm:$0xff]
        %v558 = vld [vmem:[#allocation2 + $0xe7] sm:$0xff]
        %v559 = vld [vmem:[#allocation2 + $0xef] sm:$0xff]
        %v560 = vld [vmem:[#allocation2 + $0x107] sm:$0xff]
        %v561 = vld [vmem:[#allocation2 + $0x10f] sm:$0xff]
        %v562 = vld [vmem:[#allocation2 + $0x127] sm:$0xff]
        %v563 = vld [vmem:[#allocation2 + $0x12f] sm:$0xff]
        %v564 = vld [vmem:[#allocation2 + $0x147] sm:$0xff]
        %v565 = vld [vmem:[#allocation2 + $0x14f] sm:$0xff]
        %v566 = vld [vmem:[#allocation2 + $0x167] sm:$0xff]
        %v567 = vld [vmem:[#allocation2 + $0x16f] sm:$0xff]
        %v568 = vld [vmem:[#allocation2 + $0x187] sm:$0xff]
        %v569 = vld [vmem:[#allocation2 + $0x18f] sm:$0xff]
        %v570 = vld [vmem:[#allocation2 + $0x1a7] sm:$0xff]
        %v571 = vld [vmem:[#allocation2 + $0x1af] sm:$0xff]
        %v572 = vld [vmem:[#allocation2 + $0x1c7] sm:$0xff]
        %v573 = vld [vmem:[#allocation2 + $0x1cf] sm:$0xff]
        %v574 = vld [vmem:[#allocation2 + $0x1e7] sm:$0xff]
        %v575 = vld [vmem:[#allocation2 + $0x1ef] sm:$0xff]
        %v576 = vpack.c.bf16 %v545, %v544
        %v577 = vpack.c.bf16 %v547, %v546
        %v578 = vpack.c.bf16 %v549, %v548
        %v579 = vpack.c.bf16 %v551, %v550
        %v580 = vpack.c.bf16 %v553, %v552
        %v581 = vpack.c.bf16 %v555, %v554
        %v582 = vpack.c.bf16 %v557, %v556
        %v583 = vpack.c.bf16 %v559, %v558
        %v584 = vpack.c.bf16 %v561, %v560
        %v585 = vpack.c.bf16 %v563, %v562
        %v586 = vpack.c.bf16 %v565, %v564
        %v587 = vpack.c.bf16 %v567, %v566
        %v588 = vpack.c.bf16 %v569, %v568
        %v589 = vpack.c.bf16 %v571, %v570
        %v590 = vpack.c.bf16 %v573, %v572
        %v591 = vpack.c.bf16 %v575, %v574
        %v592 = vld [vmem:[#allocation7] sm:$0xf]
        %v593 = vld [vmem:[#allocation7 + $0x4] sm:$0xf]
        %v594 = vld [vmem:[#allocation7 + $0x8] sm:$0xf]
        %v595 = vld [vmem:[#allocation7 + $0xc] sm:$0xf]
        %v596 = vld [vmem:[#allocation2 + $0x8] sm:$0xff]
        %v597 = vld [vmem:[#allocation2 + $0x10] sm:$0xff]
        %v598 = vld [vmem:[#allocation2 + $0x28] sm:$0xff]
        %v599 = vld [vmem:[#allocation2 + $0x30] sm:$0xff]
        %v600 = vld [vmem:[#allocation2 + $0x48] sm:$0xff]
        %v601 = vld [vmem:[#allocation2 + $0x50] sm:$0xff]
        %v602 = vld [vmem:[#allocation2 + $0x68] sm:$0xff]
        %v603 = vld [vmem:[#allocation2 + $0x70] sm:$0xff]
        %v604 = vld [vmem:[#allocation2 + $0x88] sm:$0xff]
        %v605 = vld [vmem:[#allocation2 + $0x90] sm:$0xff]
        %v606 = vld [vmem:[#allocation2 + $0xa8] sm:$0xff]
        %v607 = vld [vmem:[#allocation2 + $0xb0] sm:$0xff]
        %v608 = vld [vmem:[#allocation2 + $0xc8] sm:$0xff]
        %v609 = vld [vmem:[#allocation2 + $0xd0] sm:$0xff]
        %v610 = vld [vmem:[#allocation2 + $0xe8] sm:$0xff]
        %v611 = vld [vmem:[#allocation2 + $0xf0] sm:$0xff]
        %v612 = vld [vmem:[#allocation2 + $0x108] sm:$0xff]
        %v613 = vld [vmem:[#allocation2 + $0x110] sm:$0xff]
        %v614 = vld [vmem:[#allocation2 + $0x128] sm:$0xff]
        %v615 = vld [vmem:[#allocation2 + $0x130] sm:$0xff]
        %v616 = vld [vmem:[#allocation2 + $0x148] sm:$0xff]
        %v617 = vld [vmem:[#allocation2 + $0x150] sm:$0xff]
        %v618 = vld [vmem:[#allocation2 + $0x168] sm:$0xff]
        %v619 = vld [vmem:[#allocation2 + $0x170] sm:$0xff]
        %v620 = vld [vmem:[#allocation2 + $0x188] sm:$0xff]
        %v621 = vld [vmem:[#allocation2 + $0x190] sm:$0xff]
        %v622 = vld [vmem:[#allocation2 + $0x1a8] sm:$0xff]
        %v623 = vld [vmem:[#allocation2 + $0x1b0] sm:$0xff]
        %v624 = vld [vmem:[#allocation2 + $0x1c8] sm:$0xff]
        %v625 = vld [vmem:[#allocation2 + $0x1d0] sm:$0xff]
        %v626 = vld [vmem:[#allocation2 + $0x1e8] sm:$0xff]
        %v627 = vld [vmem:[#allocation2 + $0x1f0] sm:$0xff]
        %v628 = vpack.c.bf16 %v597, %v596
        %v629 = vpack.c.bf16 %v599, %v598
        %v630 = vpack.c.bf16 %v601, %v600
        %v631 = vpack.c.bf16 %v603, %v602
        %v632 = vpack.c.bf16 %v605, %v604
        %v633 = vpack.c.bf16 %v607, %v606
        %v634 = vpack.c.bf16 %v609, %v608
        %v635 = vpack.c.bf16 %v611, %v610
        %v636 = vpack.c.bf16 %v613, %v612
        %v637 = vpack.c.bf16 %v615, %v614
        %v638 = vpack.c.bf16 %v617, %v616
        %v639 = vpack.c.bf16 %v619, %v618
        %v640 = vpack.c.bf16 %v621, %v620
        %v641 = vpack.c.bf16 %v623, %v622
        %v642 = vpack.c.bf16 %v625, %v624
        %v643 = vpack.c.bf16 %v627, %v626
        %s644 = scalar_lea.vmem [#allocation7], 16
        %v645 = vld [vmem:[%s644] sm:$0xf]
        %v646 = vld [vmem:[%s644 + $0x4] sm:$0xf]
        %v647 = vld [vmem:[%s644 + $0x8] sm:$0xf]
        %v648 = vld [vmem:[%s644 + $0xc] sm:$0xf]
        %v653 = vunpack.c.l.b16 %v645
        %v654 = vunpack.c.l.b16 %v646
        %v655 = vunpack.c.l.b16 %v647
        %v656 = vunpack.c.l.b16 %v648
        %v657 = vpack.c.b16 %v654, %v653
        %v658 = vpack.c.b16 %v656, %v655
        %v662 = vsel %vm333, %v628, 0
        %v665 = vsel %vm333, %v629, 0
        %v668 = vsel %vm333, %v630, 0
        %v671 = vsel %vm333, %v631, 0
        %v674 = vsel %vm333, %v632, 0
        %v677 = vsel %vm333, %v633, 0
        %v680 = vsel %vm333, %v634, 0
        %v683 = vsel %vm333, %v635, 0
        %v686 = vsel %vm333, %v636, 0
        %v689 = vsel %vm333, %v637, 0
        %v692 = vsel %vm333, %v638, 0
        %v695 = vsel %vm333, %v639, 0
        %v698 = vsel %vm333, %v640, 0
        %v701 = vsel %vm333, %v641, 0
        %v704 = vsel %vm333, %v642, 0
        %v707 = vsel %vm333, %v643, 0
        %709 = vmatpush.bf16.msra.mxu0 0
        %710 = vmatpush.bf16.msra.mxu0 0
        %711 = vmatpush.bf16.msra.mxu0 0
        %712 = vmatpush.bf16.msra.mxu0 0
        %713 = vmatpush.bf16.msra.mxu0 0
        %714 = vmatpush.bf16.msra.mxu0 0
        %715 = vmatpush.bf16.msra.mxu0 %v658
        %716 = vmatpush.bf16.msra.mxu0 %v657
        %717 = vmatmul.bf16.gmra.mxu0 %v662
        %v718 = vpop.f32.mrf.mxu0
        %v719 = vadd.f32 0.0, %v718
        %v720 = vpop.f32.mrf.mxu0
        %v721 = vadd.f32 0.0, %v720
        %722 = vmatmul.bf16.gmra.mxu0 %v665
        %v723 = vpop.f32.mrf.mxu0
        %v724 = vadd.f32 0.0, %v723
        %v725 = vpop.f32.mrf.mxu0
        %v726 = vadd.f32 0.0, %v725
        %727 = vmatmul.bf16.gmra.mxu0 %v668
        %v728 = vpop.f32.mrf.mxu0
        %v729 = vadd.f32 0.0, %v728
        %v730 = vpop.f32.mrf.mxu0
        %v731 = vadd.f32 0.0, %v730
        %732 = vmatmul.bf16.gmra.mxu0 %v671
        %v733 = vpop.f32.mrf.mxu0
        %v734 = vadd.f32 0.0, %v733
        %v735 = vpop.f32.mrf.mxu0
        %v736 = vadd.f32 0.0, %v735
        %737 = vmatmul.bf16.gmra.mxu0 %v674
        %v738 = vpop.f32.mrf.mxu0
        %v739 = vadd.f32 0.0, %v738
        %v740 = vpop.f32.mrf.mxu0
        %v741 = vadd.f32 0.0, %v740
        %742 = vmatmul.bf16.gmra.mxu0 %v677
        %v743 = vpop.f32.mrf.mxu0
        %v744 = vadd.f32 0.0, %v743
        %v745 = vpop.f32.mrf.mxu0
        %v746 = vadd.f32 0.0, %v745
        %747 = vmatmul.bf16.gmra.mxu0 %v680
        %v748 = vpop.f32.mrf.mxu0
        %v749 = vadd.f32 0.0, %v748
        %v750 = vpop.f32.mrf.mxu0
        %v751 = vadd.f32 0.0, %v750
        %752 = vmatmul.bf16.gmra.mxu0 %v683
        %v753 = vpop.f32.mrf.mxu0
        %v754 = vadd.f32 0.0, %v753
        %v755 = vpop.f32.mrf.mxu0
        %v756 = vadd.f32 0.0, %v755
        %757 = vmatmul.bf16.gmra.mxu0 %v686
        %v758 = vpop.f32.mrf.mxu0
        %v759 = vadd.f32 0.0, %v758
        %v760 = vpop.f32.mrf.mxu0
        %v761 = vadd.f32 0.0, %v760
        %762 = vmatmul.bf16.gmra.mxu0 %v689
        %v763 = vpop.f32.mrf.mxu0
        %v764 = vadd.f32 0.0, %v763
        %v765 = vpop.f32.mrf.mxu0
        %v766 = vadd.f32 0.0, %v765
        %767 = vmatmul.bf16.gmra.mxu0 %v692
        %v768 = vpop.f32.mrf.mxu0
        %v769 = vadd.f32 0.0, %v768
        %v770 = vpop.f32.mrf.mxu0
        %v771 = vadd.f32 0.0, %v770
        %772 = vmatmul.bf16.gmra.mxu0 %v695
        %v773 = vpop.f32.mrf.mxu0
        %v774 = vadd.f32 0.0, %v773
        %v775 = vpop.f32.mrf.mxu0
        %v776 = vadd.f32 0.0, %v775
        %777 = vmatmul.bf16.gmra.mxu0 %v698
        %v778 = vpop.f32.mrf.mxu0
        %v779 = vadd.f32 0.0, %v778
        %v780 = vpop.f32.mrf.mxu0
        %v781 = vadd.f32 0.0, %v780
        %782 = vmatmul.bf16.gmra.mxu0 %v701
        %v783 = vpop.f32.mrf.mxu0
        %v784 = vadd.f32 0.0, %v783
        %v785 = vpop.f32.mrf.mxu0
        %v786 = vadd.f32 0.0, %v785
        %787 = vmatmul.bf16.gmra.mxu0 %v704
        %v788 = vpop.f32.mrf.mxu0
        %v789 = vadd.f32 0.0, %v788
        %v790 = vpop.f32.mrf.mxu0
        %v791 = vadd.f32 0.0, %v790
        %792 = vmatmul.bf16.gmra.mxu0 %v707
        %v793 = vpop.f32.mrf.mxu0
        %v794 = vadd.f32 0.0, %v793
        %v795 = vpop.f32.mrf.mxu0
        %v796 = vadd.f32 0.0, %v795
        %797 = vdwg.mxu0
        %v802 = vunpack.c.l.b16 %v592
        %v803 = vunpack.c.l.b16 %v593
        %v804 = vunpack.c.l.b16 %v594
        %v805 = vunpack.c.l.b16 %v595
        %v806 = vpack.c.b16 %v803, %v802
        %v807 = vpack.c.b16 %v805, %v804
        %v811 = vsel %vm333, %v576, 0
        %v814 = vsel %vm333, %v577, 0
        %v817 = vsel %vm333, %v578, 0
        %v820 = vsel %vm333, %v579, 0
        %v823 = vsel %vm333, %v580, 0
        %v826 = vsel %vm333, %v581, 0
        %v829 = vsel %vm333, %v582, 0
        %v832 = vsel %vm333, %v583, 0
        %v835 = vsel %vm333, %v584, 0
        %v838 = vsel %vm333, %v585, 0
        %v841 = vsel %vm333, %v586, 0
        %v844 = vsel %vm333, %v587, 0
        %v847 = vsel %vm333, %v588, 0
        %v850 = vsel %vm333, %v589, 0
        %v853 = vsel %vm333, %v590, 0
        %v856 = vsel %vm333, %v591, 0
        %858 = vmatpush.bf16.msra.mxu0 0
        %859 = vmatpush.bf16.msra.mxu0 0
        %860 = vmatpush.bf16.msra.mxu0 0
        %861 = vmatpush.bf16.msra.mxu0 0
        %862 = vmatpush.bf16.msra.mxu0 0
        %863 = vmatpush.bf16.msra.mxu0 0
        %864 = vmatpush.bf16.msra.mxu0 %v807
        %865 = vmatpush.bf16.msra.mxu0 %v806
        %866 = vmatmul.bf16.gmra.mxu0 %v811
        %v867 = vpop.f32.mrf.mxu0
        %v868 = vadd.f32 %v719, %v867
        %v869 = vpop.f32.mrf.mxu0
        %v870 = vadd.f32 %v721, %v869
        %871 = vmatmul.bf16.gmra.mxu0 %v814
        %v872 = vpop.f32.mrf.mxu0
        %v873 = vadd.f32 %v724, %v872
        %v874 = vpop.f32.mrf.mxu0
        %v875 = vadd.f32 %v726, %v874
        %876 = vmatmul.bf16.gmra.mxu0 %v817
        %v877 = vpop.f32.mrf.mxu0
        %v878 = vadd.f32 %v729, %v877
        %v879 = vpop.f32.mrf.mxu0
        %v880 = vadd.f32 %v731, %v879
        %881 = vmatmul.bf16.gmra.mxu0 %v820
        %v882 = vpop.f32.mrf.mxu0
        %v883 = vadd.f32 %v734, %v882
        %v884 = vpop.f32.mrf.mxu0
        %v885 = vadd.f32 %v736, %v884
        %886 = vmatmul.bf16.gmra.mxu0 %v823
        %v887 = vpop.f32.mrf.mxu0
        %v888 = vadd.f32 %v739, %v887
        %v889 = vpop.f32.mrf.mxu0
        %v890 = vadd.f32 %v741, %v889
        %891 = vmatmul.bf16.gmra.mxu0 %v826
        %v892 = vpop.f32.mrf.mxu0
        %v893 = vadd.f32 %v744, %v892
        %v894 = vpop.f32.mrf.mxu0
        %v895 = vadd.f32 %v746, %v894
        %896 = vmatmul.bf16.gmra.mxu0 %v829
        %v897 = vpop.f32.mrf.mxu0
        %v898 = vadd.f32 %v749, %v897
        %v899 = vpop.f32.mrf.mxu0
        %v900 = vadd.f32 %v751, %v899
        %901 = vmatmul.bf16.gmra.mxu0 %v832
        %v902 = vpop.f32.mrf.mxu0
        %v903 = vadd.f32 %v754, %v902
        %v904 = vpop.f32.mrf.mxu0
        %v905 = vadd.f32 %v756, %v904
        %906 = vmatmul.bf16.gmra.mxu0 %v835
        %v907 = vpop.f32.mrf.mxu0
        %v908 = vadd.f32 %v759, %v907
        %v909 = vpop.f32.mrf.mxu0
        %v910 = vadd.f32 %v761, %v909
        %911 = vmatmul.bf16.gmra.mxu0 %v838
        %v912 = vpop.f32.mrf.mxu0
        %v913 = vadd.f32 %v764, %v912
        %v914 = vpop.f32.mrf.mxu0
        %v915 = vadd.f32 %v766, %v914
        %916 = vmatmul.bf16.gmra.mxu0 %v841
        %v917 = vpop.f32.mrf.mxu0
        %v918 = vadd.f32 %v769, %v917
        %v919 = vpop.f32.mrf.mxu0
        %v920 = vadd.f32 %v771, %v919
        %921 = vmatmul.bf16.gmra.mxu0 %v844
        %v922 = vpop.f32.mrf.mxu0
        %v923 = vadd.f32 %v774, %v922
        %v924 = vpop.f32.mrf.mxu0
        %v925 = vadd.f32 %v776, %v924
        %926 = vmatmul.bf16.gmra.mxu0 %v847
        %v927 = vpop.f32.mrf.mxu0
        %v928 = vadd.f32 %v779, %v927
        %v929 = vpop.f32.mrf.mxu0
        %v930 = vadd.f32 %v781, %v929
        %931 = vmatmul.bf16.gmra.mxu0 %v850
        %v932 = vpop.f32.mrf.mxu0
        %v933 = vadd.f32 %v784, %v932
        %v934 = vpop.f32.mrf.mxu0
        %v935 = vadd.f32 %v786, %v934
        %936 = vmatmul.bf16.gmra.mxu0 %v853
        %v937 = vpop.f32.mrf.mxu0
        %v938 = vadd.f32 %v789, %v937
        %v939 = vpop.f32.mrf.mxu0
        %v940 = vadd.f32 %v791, %v939
        %941 = vmatmul.bf16.gmra.mxu0 %v856
        %v942 = vpop.f32.mrf.mxu0
        %v943 = vadd.f32 %v794, %v942
        %v944 = vpop.f32.mrf.mxu0
        %v945 = vadd.f32 %v796, %v944
        %946 = vdwg.mxu0
        %v947 = vld [vmem:[#allocation2 + $0x9] sm:$0xff]
        %v948 = vld [vmem:[#allocation2 + $0x11] sm:$0xff]
        %v949 = vld [vmem:[#allocation2 + $0x29] sm:$0xff]
        %v950 = vld [vmem:[#allocation2 + $0x31] sm:$0xff]
        %v951 = vld [vmem:[#allocation2 + $0x49] sm:$0xff]
        %v952 = vld [vmem:[#allocation2 + $0x51] sm:$0xff]
        %v953 = vld [vmem:[#allocation2 + $0x69] sm:$0xff]
        %v954 = vld [vmem:[#allocation2 + $0x71] sm:$0xff]
        %v955 = vld [vmem:[#allocation2 + $0x89] sm:$0xff]
        %v956 = vld [vmem:[#allocation2 + $0x91] sm:$0xff]
        %v957 = vld [vmem:[#allocation2 + $0xa9] sm:$0xff]
        %v958 = vld [vmem:[#allocation2 + $0xb1] sm:$0xff]
        %v959 = vld [vmem:[#allocation2 + $0xc9] sm:$0xff]
        %v960 = vld [vmem:[#allocation2 + $0xd1] sm:$0xff]
        %v961 = vld [vmem:[#allocation2 + $0xe9] sm:$0xff]
        %v962 = vld [vmem:[#allocation2 + $0xf1] sm:$0xff]
        %v963 = vld [vmem:[#allocation2 + $0x109] sm:$0xff]
        %v964 = vld [vmem:[#allocation2 + $0x111] sm:$0xff]
        %v965 = vld [vmem:[#allocation2 + $0x129] sm:$0xff]
        %v966 = vld [vmem:[#allocation2 + $0x131] sm:$0xff]
        %v967 = vld [vmem:[#allocation2 + $0x149] sm:$0xff]
        %v968 = vld [vmem:[#allocation2 + $0x151] sm:$0xff]
        %v969 = vld [vmem:[#allocation2 + $0x169] sm:$0xff]
        %v970 = vld [vmem:[#allocation2 + $0x171] sm:$0xff]
        %v971 = vld [vmem:[#allocation2 + $0x189] sm:$0xff]
        %v972 = vld [vmem:[#allocation2 + $0x191] sm:$0xff]
        %v973 = vld [vmem:[#allocation2 + $0x1a9] sm:$0xff]
        %v974 = vld [vmem:[#allocation2 + $0x1b1] sm:$0xff]
        %v975 = vld [vmem:[#allocation2 + $0x1c9] sm:$0xff]
        %v976 = vld [vmem:[#allocation2 + $0x1d1] sm:$0xff]
        %v977 = vld [vmem:[#allocation2 + $0x1e9] sm:$0xff]
        %v978 = vld [vmem:[#allocation2 + $0x1f1] sm:$0xff]
        %v979 = vpack.c.bf16 %v948, %v947
        %v980 = vpack.c.bf16 %v950, %v949
        %v981 = vpack.c.bf16 %v952, %v951
        %v982 = vpack.c.bf16 %v954, %v953
        %v983 = vpack.c.bf16 %v956, %v955
        %v984 = vpack.c.bf16 %v958, %v957
        %v985 = vpack.c.bf16 %v960, %v959
        %v986 = vpack.c.bf16 %v962, %v961
        %v987 = vpack.c.bf16 %v964, %v963
        %v988 = vpack.c.bf16 %v966, %v965
        %v989 = vpack.c.bf16 %v968, %v967
        %v990 = vpack.c.bf16 %v970, %v969
        %v991 = vpack.c.bf16 %v972, %v971
        %v992 = vpack.c.bf16 %v974, %v973
        %v993 = vpack.c.bf16 %v976, %v975
        %v994 = vpack.c.bf16 %v978, %v977
        %s995 = scalar_lea.vmem [#allocation7], 32
        %v996 = vld [vmem:[%s995] sm:$0xf]
        %v997 = vld [vmem:[%s995 + $0x4] sm:$0xf]
        %v998 = vld [vmem:[%s995 + $0x8] sm:$0xf]
        %v999 = vld [vmem:[%s995 + $0xc] sm:$0xf]
        %v1004 = vunpack.c.l.b16 %v996
        %v1005 = vunpack.c.l.b16 %v997
        %v1006 = vunpack.c.l.b16 %v998
        %v1007 = vunpack.c.l.b16 %v999
        %v1008 = vpack.c.b16 %v1005, %v1004
        %v1009 = vpack.c.b16 %v1007, %v1006
        %v1013 = vsel %vm333, %v979, 0
        %v1016 = vsel %vm333, %v980, 0
        %v1019 = vsel %vm333, %v981, 0
        %v1022 = vsel %vm333, %v982, 0
        %v1025 = vsel %vm333, %v983, 0
        %v1028 = vsel %vm333, %v984, 0
        %v1031 = vsel %vm333, %v985, 0
        %v1034 = vsel %vm333, %v986, 0
        %v1037 = vsel %vm333, %v987, 0
        %v1040 = vsel %vm333, %v988, 0
        %v1043 = vsel %vm333, %v989, 0
        %v1046 = vsel %vm333, %v990, 0
        %v1049 = vsel %vm333, %v991, 0
        %v1052 = vsel %vm333, %v992, 0
        %v1055 = vsel %vm333, %v993, 0
        %v1058 = vsel %vm333, %v994, 0
        %1060 = vmatpush.bf16.msra.mxu0 0
        %1061 = vmatpush.bf16.msra.mxu0 0
        %1062 = vmatpush.bf16.msra.mxu0 0
        %1063 = vmatpush.bf16.msra.mxu0 0
        %1064 = vmatpush.bf16.msra.mxu0 0
        %1065 = vmatpush.bf16.msra.mxu0 0
        %1066 = vmatpush.bf16.msra.mxu0 %v1009
        %1067 = vmatpush.bf16.msra.mxu0 %v1008
        %1068 = vmatmul.bf16.gmra.mxu0 %v1013
        %v1069 = vpop.f32.mrf.mxu0
        %v1070 = vadd.f32 0.0, %v1069
        %v1071 = vpop.f32.mrf.mxu0
        %v1072 = vadd.f32 0.0, %v1071
        %1073 = vmatmul.bf16.gmra.mxu0 %v1016
        %v1074 = vpop.f32.mrf.mxu0
        %v1075 = vadd.f32 0.0, %v1074
        %v1076 = vpop.f32.mrf.mxu0
        %v1077 = vadd.f32 0.0, %v1076
        %1078 = vmatmul.bf16.gmra.mxu0 %v1019
        %v1079 = vpop.f32.mrf.mxu0
        %v1080 = vadd.f32 0.0, %v1079
        %v1081 = vpop.f32.mrf.mxu0
        %v1082 = vadd.f32 0.0, %v1081
        %1083 = vmatmul.bf16.gmra.mxu0 %v1022
        %v1084 = vpop.f32.mrf.mxu0
        %v1085 = vadd.f32 0.0, %v1084
        %v1086 = vpop.f32.mrf.mxu0
        %v1087 = vadd.f32 0.0, %v1086
        %1088 = vmatmul.bf16.gmra.mxu0 %v1025
        %v1089 = vpop.f32.mrf.mxu0
        %v1090 = vadd.f32 0.0, %v1089
        %v1091 = vpop.f32.mrf.mxu0
        %v1092 = vadd.f32 0.0, %v1091
        %1093 = vmatmul.bf16.gmra.mxu0 %v1028
        %v1094 = vpop.f32.mrf.mxu0
        %v1095 = vadd.f32 0.0, %v1094
        %v1096 = vpop.f32.mrf.mxu0
        %v1097 = vadd.f32 0.0, %v1096
        %1098 = vmatmul.bf16.gmra.mxu0 %v1031
        %v1099 = vpop.f32.mrf.mxu0
        %v1100 = vadd.f32 0.0, %v1099
        %v1101 = vpop.f32.mrf.mxu0
        %v1102 = vadd.f32 0.0, %v1101
        %1103 = vmatmul.bf16.gmra.mxu0 %v1034
        %v1104 = vpop.f32.mrf.mxu0
        %v1105 = vadd.f32 0.0, %v1104
        %v1106 = vpop.f32.mrf.mxu0
        %v1107 = vadd.f32 0.0, %v1106
        %1108 = vmatmul.bf16.gmra.mxu0 %v1037
        %v1109 = vpop.f32.mrf.mxu0
        %v1110 = vadd.f32 0.0, %v1109
        %v1111 = vpop.f32.mrf.mxu0
        %v1112 = vadd.f32 0.0, %v1111
        %1113 = vmatmul.bf16.gmra.mxu0 %v1040
        %v1114 = vpop.f32.mrf.mxu0
        %v1115 = vadd.f32 0.0, %v1114
        %v1116 = vpop.f32.mrf.mxu0
        %v1117 = vadd.f32 0.0, %v1116
        %1118 = vmatmul.bf16.gmra.mxu0 %v1043
        %v1119 = vpop.f32.mrf.mxu0
        %v1120 = vadd.f32 0.0, %v1119
        %v1121 = vpop.f32.mrf.mxu0
        %v1122 = vadd.f32 0.0, %v1121
        %1123 = vmatmul.bf16.gmra.mxu0 %v1046
        %v1124 = vpop.f32.mrf.mxu0
        %v1125 = vadd.f32 0.0, %v1124
        %v1126 = vpop.f32.mrf.mxu0
        %v1127 = vadd.f32 0.0, %v1126
        %1128 = vmatmul.bf16.gmra.mxu0 %v1049
        %v1129 = vpop.f32.mrf.mxu0
        %v1130 = vadd.f32 0.0, %v1129
        %v1131 = vpop.f32.mrf.mxu0
        %v1132 = vadd.f32 0.0, %v1131
        %1133 = vmatmul.bf16.gmra.mxu0 %v1052
        %v1134 = vpop.f32.mrf.mxu0
        %v1135 = vadd.f32 0.0, %v1134
        %v1136 = vpop.f32.mrf.mxu0
        %v1137 = vadd.f32 0.0, %v1136
        %1138 = vmatmul.bf16.gmra.mxu0 %v1055
        %v1139 = vpop.f32.mrf.mxu0
        %v1140 = vadd.f32 0.0, %v1139
        %v1141 = vpop.f32.mrf.mxu0
        %v1142 = vadd.f32 0.0, %v1141
        %1143 = vmatmul.bf16.gmra.mxu0 %v1058
        %v1144 = vpop.f32.mrf.mxu0
        %v1145 = vadd.f32 0.0, %v1144
        %v1146 = vpop.f32.mrf.mxu0
        %v1147 = vadd.f32 0.0, %v1146
        %1148 = vdwg.mxu0
        %v1149 = vadd.f32 %v868, %v1070
        %v1150 = vadd.f32 %v870, %v1072
        %v1151 = vadd.f32 %v873, %v1075
        %v1152 = vadd.f32 %v875, %v1077
        %v1153 = vadd.f32 %v878, %v1080
        %v1154 = vadd.f32 %v880, %v1082
        %v1155 = vadd.f32 %v883, %v1085
        %v1156 = vadd.f32 %v885, %v1087
        %v1157 = vadd.f32 %v888, %v1090
        %v1158 = vadd.f32 %v890, %v1092
        %v1159 = vadd.f32 %v893, %v1095
        %v1160 = vadd.f32 %v895, %v1097
        %v1161 = vadd.f32 %v898, %v1100
        %v1162 = vadd.f32 %v900, %v1102
        %v1163 = vadd.f32 %v903, %v1105
        %v1164 = vadd.f32 %v905, %v1107
        %v1165 = vadd.f32 %v908, %v1110
        %v1166 = vadd.f32 %v910, %v1112
        %v1167 = vadd.f32 %v913, %v1115
        %v1168 = vadd.f32 %v915, %v1117
        %v1169 = vadd.f32 %v918, %v1120
        %v1170 = vadd.f32 %v920, %v1122
        %v1171 = vadd.f32 %v923, %v1125
        %v1172 = vadd.f32 %v925, %v1127
        %v1173 = vadd.f32 %v928, %v1130
        %v1174 = vadd.f32 %v930, %v1132
        %v1175 = vadd.f32 %v933, %v1135
        %v1176 = vadd.f32 %v935, %v1137
        %v1177 = vadd.f32 %v938, %v1140
        %v1178 = vadd.f32 %v940, %v1142
        %v1179 = vadd.f32 %v943, %v1145
        %v1180 = vadd.f32 %v945, %v1147
        %v1181 = vld [vmem:[%s511 + $0x7] sm:$0xff]
        %v1182 = vld [vmem:[%s511 + $0xf] sm:$0xff]
        %v1183 = vld [vmem:[%s511 + $0x27] sm:$0xff]
        %v1184 = vld [vmem:[%s511 + $0x2f] sm:$0xff]
        %v1185 = vld [vmem:[%s511 + $0x47] sm:$0xff]
        %v1186 = vld [vmem:[%s511 + $0x4f] sm:$0xff]
        %v1187 = vld [vmem:[%s511 + $0x67] sm:$0xff]
        %v1188 = vld [vmem:[%s511 + $0x6f] sm:$0xff]
        %v1189 = vld [vmem:[%s511 + $0x87] sm:$0xff]
        %v1190 = vld [vmem:[%s511 + $0x8f] sm:$0xff]
        %v1191 = vld [vmem:[%s511 + $0xa7] sm:$0xff]
        %v1192 = vld [vmem:[%s511 + $0xaf] sm:$0xff]
        %v1193 = vld [vmem:[%s511 + $0xc7] sm:$0xff]
        %v1194 = vld [vmem:[%s511 + $0xcf] sm:$0xff]
        %v1195 = vld [vmem:[%s511 + $0xe7] sm:$0xff]
        %v1196 = vld [vmem:[%s511 + $0xef] sm:$0xff]
        %v1197 = vld [vmem:[%s511 + $0x107] sm:$0xff]
        %v1198 = vld [vmem:[%s511 + $0x10f] sm:$0xff]
        %v1199 = vld [vmem:[%s511 + $0x127] sm:$0xff]
        %v1200 = vld [vmem:[%s511 + $0x12f] sm:$0xff]
        %v1201 = vld [vmem:[%s511 + $0x147] sm:$0xff]
        %v1202 = vld [vmem:[%s511 + $0x14f] sm:$0xff]
        %v1203 = vld [vmem:[%s511 + $0x167] sm:$0xff]
        %v1204 = vld [vmem:[%s511 + $0x16f] sm:$0xff]
        %v1205 = vld [vmem:[%s511 + $0x187] sm:$0xff]
        %v1206 = vld [vmem:[%s511 + $0x18f] sm:$0xff]
        %v1207 = vld [vmem:[%s511 + $0x1a7] sm:$0xff]
        %v1208 = vld [vmem:[%s511 + $0x1af] sm:$0xff]
        %v1209 = vld [vmem:[%s511 + $0x1c7] sm:$0xff]
        %v1210 = vld [vmem:[%s511 + $0x1cf] sm:$0xff]
        %v1211 = vld [vmem:[%s511 + $0x1e7] sm:$0xff]
        %v1212 = vld [vmem:[%s511 + $0x1ef] sm:$0xff]
        %v1213 = vpack.c.bf16 %v1182, %v1181
        %v1214 = vpack.c.bf16 %v1184, %v1183
        %v1215 = vpack.c.bf16 %v1186, %v1185
        %v1216 = vpack.c.bf16 %v1188, %v1187
        %v1217 = vpack.c.bf16 %v1190, %v1189
        %v1218 = vpack.c.bf16 %v1192, %v1191
        %v1219 = vpack.c.bf16 %v1194, %v1193
        %v1220 = vpack.c.bf16 %v1196, %v1195
        %v1221 = vpack.c.bf16 %v1198, %v1197
        %v1222 = vpack.c.bf16 %v1200, %v1199
        %v1223 = vpack.c.bf16 %v1202, %v1201
        %v1224 = vpack.c.bf16 %v1204, %v1203
        %v1225 = vpack.c.bf16 %v1206, %v1205
        %v1226 = vpack.c.bf16 %v1208, %v1207
        %v1227 = vpack.c.bf16 %v1210, %v1209
        %v1228 = vpack.c.bf16 %v1212, %v1211
        %s1229 = scalar_lea.vmem [#allocation7], 48
        %v1230 = vld [vmem:[%s1229] sm:$0xf]
        %v1231 = vld [vmem:[%s1229 + $0x4] sm:$0xf]
        %v1232 = vld [vmem:[%s1229 + $0x8] sm:$0xf]
        %v1233 = vld [vmem:[%s1229 + $0xc] sm:$0xf]
        %v1238 = vunpack.c.l.b16 %v1230
        %v1239 = vunpack.c.l.b16 %v1231
        %v1240 = vunpack.c.l.b16 %v1232
        %v1241 = vunpack.c.l.b16 %v1233
        %v1242 = vpack.c.b16 %v1239, %v1238
        %v1243 = vpack.c.b16 %v1241, %v1240
        %v1247 = vsel %vm333, %v1213, 0
        %v1250 = vsel %vm333, %v1214, 0
        %v1253 = vsel %vm333, %v1215, 0
        %v1256 = vsel %vm333, %v1216, 0
        %v1259 = vsel %vm333, %v1217, 0
        %v1262 = vsel %vm333, %v1218, 0
        %v1265 = vsel %vm333, %v1219, 0
        %v1268 = vsel %vm333, %v1220, 0
        %v1271 = vsel %vm333, %v1221, 0
        %v1274 = vsel %vm333, %v1222, 0
        %v1277 = vsel %vm333, %v1223, 0
        %v1280 = vsel %vm333, %v1224, 0
        %v1283 = vsel %vm333, %v1225, 0
        %v1286 = vsel %vm333, %v1226, 0
        %v1289 = vsel %vm333, %v1227, 0
        %v1292 = vsel %vm333, %v1228, 0
        %1294 = vmatpush.bf16.msra.mxu0 0
        %1295 = vmatpush.bf16.msra.mxu0 0
        %1296 = vmatpush.bf16.msra.mxu0 0
        %1297 = vmatpush.bf16.msra.mxu0 0
        %1298 = vmatpush.bf16.msra.mxu0 0
        %1299 = vmatpush.bf16.msra.mxu0 0
        %1300 = vmatpush.bf16.msra.mxu0 %v1243
        %1301 = vmatpush.bf16.msra.mxu0 %v1242
        %1302 = vmatmul.bf16.gmra.mxu0 %v1247
        %v1303 = vpop.f32.mrf.mxu0
        %v1304 = vadd.f32 0.0, %v1303
        %v1305 = vpop.f32.mrf.mxu0
        %v1306 = vadd.f32 0.0, %v1305
        %1307 = vmatmul.bf16.gmra.mxu0 %v1250
        %v1308 = vpop.f32.mrf.mxu0
        %v1309 = vadd.f32 0.0, %v1308
        %v1310 = vpop.f32.mrf.mxu0
        %v1311 = vadd.f32 0.0, %v1310
        %1312 = vmatmul.bf16.gmra.mxu0 %v1253
        %v1313 = vpop.f32.mrf.mxu0
        %v1314 = vadd.f32 0.0, %v1313
        %v1315 = vpop.f32.mrf.mxu0
        %v1316 = vadd.f32 0.0, %v1315
        %1317 = vmatmul.bf16.gmra.mxu0 %v1256
        %v1318 = vpop.f32.mrf.mxu0
        %v1319 = vadd.f32 0.0, %v1318
        %v1320 = vpop.f32.mrf.mxu0
        %v1321 = vadd.f32 0.0, %v1320
        %1322 = vmatmul.bf16.gmra.mxu0 %v1259
        %v1323 = vpop.f32.mrf.mxu0
        %v1324 = vadd.f32 0.0, %v1323
        %v1325 = vpop.f32.mrf.mxu0
        %v1326 = vadd.f32 0.0, %v1325
        %1327 = vmatmul.bf16.gmra.mxu0 %v1262
        %v1328 = vpop.f32.mrf.mxu0
        %v1329 = vadd.f32 0.0, %v1328
        %v1330 = vpop.f32.mrf.mxu0
        %v1331 = vadd.f32 0.0, %v1330
        %1332 = vmatmul.bf16.gmra.mxu0 %v1265
        %v1333 = vpop.f32.mrf.mxu0
        %v1334 = vadd.f32 0.0, %v1333
        %v1335 = vpop.f32.mrf.mxu0
        %v1336 = vadd.f32 0.0, %v1335
        %1337 = vmatmul.bf16.gmra.mxu0 %v1268
        %v1338 = vpop.f32.mrf.mxu0
        %v1339 = vadd.f32 0.0, %v1338
        %v1340 = vpop.f32.mrf.mxu0
        %v1341 = vadd.f32 0.0, %v1340
        %1342 = vmatmul.bf16.gmra.mxu0 %v1271
        %v1343 = vpop.f32.mrf.mxu0
        %v1344 = vadd.f32 0.0, %v1343
        %v1345 = vpop.f32.mrf.mxu0
        %v1346 = vadd.f32 0.0, %v1345
        %1347 = vmatmul.bf16.gmra.mxu0 %v1274
        %v1348 = vpop.f32.mrf.mxu0
        %v1349 = vadd.f32 0.0, %v1348
        %v1350 = vpop.f32.mrf.mxu0
        %v1351 = vadd.f32 0.0, %v1350
        %1352 = vmatmul.bf16.gmra.mxu0 %v1277
        %v1353 = vpop.f32.mrf.mxu0
        %v1354 = vadd.f32 0.0, %v1353
        %v1355 = vpop.f32.mrf.mxu0
        %v1356 = vadd.f32 0.0, %v1355
        %1357 = vmatmul.bf16.gmra.mxu0 %v1280
        %v1358 = vpop.f32.mrf.mxu0
        %v1359 = vadd.f32 0.0, %v1358
        %v1360 = vpop.f32.mrf.mxu0
        %v1361 = vadd.f32 0.0, %v1360
        %1362 = vmatmul.bf16.gmra.mxu0 %v1283
        %v1363 = vpop.f32.mrf.mxu0
        %v1364 = vadd.f32 0.0, %v1363
        %v1365 = vpop.f32.mrf.mxu0
        %v1366 = vadd.f32 0.0, %v1365
        %1367 = vmatmul.bf16.gmra.mxu0 %v1286
        %v1368 = vpop.f32.mrf.mxu0
        %v1369 = vadd.f32 0.0, %v1368
        %v1370 = vpop.f32.mrf.mxu0
        %v1371 = vadd.f32 0.0, %v1370
        %1372 = vmatmul.bf16.gmra.mxu0 %v1289
        %v1373 = vpop.f32.mrf.mxu0
        %v1374 = vadd.f32 0.0, %v1373
        %v1375 = vpop.f32.mrf.mxu0
        %v1376 = vadd.f32 0.0, %v1375
        %1377 = vmatmul.bf16.gmra.mxu0 %v1292
        %v1378 = vpop.f32.mrf.mxu0
        %v1379 = vadd.f32 0.0, %v1378
        %v1380 = vpop.f32.mrf.mxu0
        %v1381 = vadd.f32 0.0, %v1380
        %1382 = vdwg.mxu0
        %v1383 = vadd.f32 %v1149, %v1304
        %v1384 = vadd.f32 %v1150, %v1306
        %v1385 = vadd.f32 %v1151, %v1309
        %v1386 = vadd.f32 %v1152, %v1311
        %v1387 = vadd.f32 %v1153, %v1314
        %v1388 = vadd.f32 %v1154, %v1316
        %v1389 = vadd.f32 %v1155, %v1319
        %v1390 = vadd.f32 %v1156, %v1321
        %v1391 = vadd.f32 %v1157, %v1324
        %v1392 = vadd.f32 %v1158, %v1326
        %v1393 = vadd.f32 %v1159, %v1329
        %v1394 = vadd.f32 %v1160, %v1331
        %v1395 = vadd.f32 %v1161, %v1334
        %v1396 = vadd.f32 %v1162, %v1336
        %v1397 = vadd.f32 %v1163, %v1339
        %v1398 = vadd.f32 %v1164, %v1341
        %v1399 = vadd.f32 %v1165, %v1344
        %v1400 = vadd.f32 %v1166, %v1346
        %v1401 = vadd.f32 %v1167, %v1349
        %v1402 = vadd.f32 %v1168, %v1351
        %v1403 = vadd.f32 %v1169, %v1354
        %v1404 = vadd.f32 %v1170, %v1356
        %v1405 = vadd.f32 %v1171, %v1359
        %v1406 = vadd.f32 %v1172, %v1361
        %v1407 = vadd.f32 %v1173, %v1364
        %v1408 = vadd.f32 %v1174, %v1366
        %v1409 = vadd.f32 %v1175, %v1369
        %v1410 = vadd.f32 %v1176, %v1371
        %v1411 = vadd.f32 %v1177, %v1374
        %v1412 = vadd.f32 %v1178, %v1376
        %v1413 = vadd.f32 %v1179, %v1379
        %v1414 = vadd.f32 %v1180, %v1381
        %v1415 = vld [vmem:[%s511 + $0x8] sm:$0xff]
        %v1416 = vld [vmem:[%s511 + $0x10] sm:$0xff]
        %v1417 = vld [vmem:[%s511 + $0x28] sm:$0xff]
        %v1418 = vld [vmem:[%s511 + $0x30] sm:$0xff]
        %v1419 = vld [vmem:[%s511 + $0x48] sm:$0xff]
        %v1420 = vld [vmem:[%s511 + $0x50] sm:$0xff]
        %v1421 = vld [vmem:[%s511 + $0x68] sm:$0xff]
        %v1422 = vld [vmem:[%s511 + $0x70] sm:$0xff]
        %v1423 = vld [vmem:[%s511 + $0x88] sm:$0xff]
        %v1424 = vld [vmem:[%s511 + $0x90] sm:$0xff]
        %v1425 = vld [vmem:[%s511 + $0xa8] sm:$0xff]
        %v1426 = vld [vmem:[%s511 + $0xb0] sm:$0xff]
        %v1427 = vld [vmem:[%s511 + $0xc8] sm:$0xff]
        %v1428 = vld [vmem:[%s511 + $0xd0] sm:$0xff]
        %v1429 = vld [vmem:[%s511 + $0xe8] sm:$0xff]
        %v1430 = vld [vmem:[%s511 + $0xf0] sm:$0xff]
        %v1431 = vld [vmem:[%s511 + $0x108] sm:$0xff]
        %v1432 = vld [vmem:[%s511 + $0x110] sm:$0xff]
        %v1433 = vld [vmem:[%s511 + $0x128] sm:$0xff]
        %v1434 = vld [vmem:[%s511 + $0x130] sm:$0xff]
        %v1435 = vld [vmem:[%s511 + $0x148] sm:$0xff]
        %v1436 = vld [vmem:[%s511 + $0x150] sm:$0xff]
        %v1437 = vld [vmem:[%s511 + $0x168] sm:$0xff]
        %v1438 = vld [vmem:[%s511 + $0x170] sm:$0xff]
        %v1439 = vld [vmem:[%s511 + $0x188] sm:$0xff]
        %v1440 = vld [vmem:[%s511 + $0x190] sm:$0xff]
        %v1441 = vld [vmem:[%s511 + $0x1a8] sm:$0xff]
        %v1442 = vld [vmem:[%s511 + $0x1b0] sm:$0xff]
        %v1443 = vld [vmem:[%s511 + $0x1c8] sm:$0xff]
        %v1444 = vld [vmem:[%s511 + $0x1d0] sm:$0xff]
        %v1445 = vld [vmem:[%s511 + $0x1e8] sm:$0xff]
        %v1446 = vld [vmem:[%s511 + $0x1f0] sm:$0xff]
        %v1447 = vpack.c.bf16 %v1416, %v1415
        %v1448 = vpack.c.bf16 %v1418, %v1417
        %v1449 = vpack.c.bf16 %v1420, %v1419
        %v1450 = vpack.c.bf16 %v1422, %v1421
        %v1451 = vpack.c.bf16 %v1424, %v1423
        %v1452 = vpack.c.bf16 %v1426, %v1425
        %v1453 = vpack.c.bf16 %v1428, %v1427
        %v1454 = vpack.c.bf16 %v1430, %v1429
        %v1455 = vpack.c.bf16 %v1432, %v1431
        %v1456 = vpack.c.bf16 %v1434, %v1433
        %v1457 = vpack.c.bf16 %v1436, %v1435
        %v1458 = vpack.c.bf16 %v1438, %v1437
        %v1459 = vpack.c.bf16 %v1440, %v1439
        %v1460 = vpack.c.bf16 %v1442, %v1441
        %v1461 = vpack.c.bf16 %v1444, %v1443
        %v1462 = vpack.c.bf16 %v1446, %v1445
        %s1463 = scalar_lea.vmem [#allocation7], 64
        %v1464 = vld [vmem:[%s1463] sm:$0xf]
        %v1465 = vld [vmem:[%s1463 + $0x4] sm:$0xf]
        %v1466 = vld [vmem:[%s1463 + $0x8] sm:$0xf]
        %v1467 = vld [vmem:[%s1463 + $0xc] sm:$0xf]
        %v1472 = vunpack.c.l.b16 %v1464
        %v1473 = vunpack.c.l.b16 %v1465
        %v1474 = vunpack.c.l.b16 %v1466
        %v1475 = vunpack.c.l.b16 %v1467
        %v1476 = vpack.c.b16 %v1473, %v1472
        %v1477 = vpack.c.b16 %v1475, %v1474
        %v1481 = vsel %vm333, %v1447, 0
        %v1484 = vsel %vm333, %v1448, 0
        %v1487 = vsel %vm333, %v1449, 0
        %v1490 = vsel %vm333, %v1450, 0
        %v1493 = vsel %vm333, %v1451, 0
        %v1496 = vsel %vm333, %v1452, 0
        %v1499 = vsel %vm333, %v1453, 0
        %v1502 = vsel %vm333, %v1454, 0
        %v1505 = vsel %vm333, %v1455, 0
        %v1508 = vsel %vm333, %v1456, 0
        %v1511 = vsel %vm333, %v1457, 0
        %v1514 = vsel %vm333, %v1458, 0
        %v1517 = vsel %vm333, %v1459, 0
        %v1520 = vsel %vm333, %v1460, 0
        %v1523 = vsel %vm333, %v1461, 0
        %v1526 = vsel %vm333, %v1462, 0
        %1528 = vmatpush.bf16.msra.mxu0 0
        %1529 = vmatpush.bf16.msra.mxu0 0
        %1530 = vmatpush.bf16.msra.mxu0 0
        %1531 = vmatpush.bf16.msra.mxu0 0
        %1532 = vmatpush.bf16.msra.mxu0 0
        %1533 = vmatpush.bf16.msra.mxu0 0
        %1534 = vmatpush.bf16.msra.mxu0 %v1477
        %1535 = vmatpush.bf16.msra.mxu0 %v1476
        %1536 = vmatmul.bf16.gmra.mxu0 %v1481
        %v1537 = vpop.f32.mrf.mxu0
        %v1538 = vadd.f32 0.0, %v1537
        %v1539 = vpop.f32.mrf.mxu0
        %v1540 = vadd.f32 0.0, %v1539
        %1541 = vmatmul.bf16.gmra.mxu0 %v1484
        %v1542 = vpop.f32.mrf.mxu0
        %v1543 = vadd.f32 0.0, %v1542
        %v1544 = vpop.f32.mrf.mxu0
        %v1545 = vadd.f32 0.0, %v1544
        %1546 = vmatmul.bf16.gmra.mxu0 %v1487
        %v1547 = vpop.f32.mrf.mxu0
        %v1548 = vadd.f32 0.0, %v1547
        %v1549 = vpop.f32.mrf.mxu0
        %v1550 = vadd.f32 0.0, %v1549
        %1551 = vmatmul.bf16.gmra.mxu0 %v1490
        %v1552 = vpop.f32.mrf.mxu0
        %v1553 = vadd.f32 0.0, %v1552
        %v1554 = vpop.f32.mrf.mxu0
        %v1555 = vadd.f32 0.0, %v1554
        %1556 = vmatmul.bf16.gmra.mxu0 %v1493
        %v1557 = vpop.f32.mrf.mxu0
        %v1558 = vadd.f32 0.0, %v1557
        %v1559 = vpop.f32.mrf.mxu0
        %v1560 = vadd.f32 0.0, %v1559
        %1561 = vmatmul.bf16.gmra.mxu0 %v1496
        %v1562 = vpop.f32.mrf.mxu0
        %v1563 = vadd.f32 0.0, %v1562
        %v1564 = vpop.f32.mrf.mxu0
        %v1565 = vadd.f32 0.0, %v1564
        %1566 = vmatmul.bf16.gmra.mxu0 %v1499
        %v1567 = vpop.f32.mrf.mxu0
        %v1568 = vadd.f32 0.0, %v1567
        %v1569 = vpop.f32.mrf.mxu0
        %v1570 = vadd.f32 0.0, %v1569
        %1571 = vmatmul.bf16.gmra.mxu0 %v1502
        %v1572 = vpop.f32.mrf.mxu0
        %v1573 = vadd.f32 0.0, %v1572
        %v1574 = vpop.f32.mrf.mxu0
        %v1575 = vadd.f32 0.0, %v1574
        %1576 = vmatmul.bf16.gmra.mxu0 %v1505
        %v1577 = vpop.f32.mrf.mxu0
        %v1578 = vadd.f32 0.0, %v1577
        %v1579 = vpop.f32.mrf.mxu0
        %v1580 = vadd.f32 0.0, %v1579
        %1581 = vmatmul.bf16.gmra.mxu0 %v1508
        %v1582 = vpop.f32.mrf.mxu0
        %v1583 = vadd.f32 0.0, %v1582
        %v1584 = vpop.f32.mrf.mxu0
        %v1585 = vadd.f32 0.0, %v1584
        %1586 = vmatmul.bf16.gmra.mxu0 %v1511
        %v1587 = vpop.f32.mrf.mxu0
        %v1588 = vadd.f32 0.0, %v1587
        %v1589 = vpop.f32.mrf.mxu0
        %v1590 = vadd.f32 0.0, %v1589
        %1591 = vmatmul.bf16.gmra.mxu0 %v1514
        %v1592 = vpop.f32.mrf.mxu0
        %v1593 = vadd.f32 0.0, %v1592
        %v1594 = vpop.f32.mrf.mxu0
        %v1595 = vadd.f32 0.0, %v1594
        %1596 = vmatmul.bf16.gmra.mxu0 %v1517
        %v1597 = vpop.f32.mrf.mxu0
        %v1598 = vadd.f32 0.0, %v1597
        %v1599 = vpop.f32.mrf.mxu0
        %v1600 = vadd.f32 0.0, %v1599
        %1601 = vmatmul.bf16.gmra.mxu0 %v1520
        %v1602 = vpop.f32.mrf.mxu0
        %v1603 = vadd.f32 0.0, %v1602
        %v1604 = vpop.f32.mrf.mxu0
        %v1605 = vadd.f32 0.0, %v1604
        %1606 = vmatmul.bf16.gmra.mxu0 %v1523
        %v1607 = vpop.f32.mrf.mxu0
        %v1608 = vadd.f32 0.0, %v1607
        %v1609 = vpop.f32.mrf.mxu0
        %v1610 = vadd.f32 0.0, %v1609
        %1611 = vmatmul.bf16.gmra.mxu0 %v1526
        %v1612 = vpop.f32.mrf.mxu0
        %v1613 = vadd.f32 0.0, %v1612
        %v1614 = vpop.f32.mrf.mxu0
        %v1615 = vadd.f32 0.0, %v1614
        %1616 = vdwg.mxu0
        %v1617 = vadd.f32 %v1383, %v1538
        %v1618 = vadd.f32 %v1384, %v1540
        %v1619 = vadd.f32 %v1385, %v1543
        %v1620 = vadd.f32 %v1386, %v1545
        %v1621 = vadd.f32 %v1387, %v1548
        %v1622 = vadd.f32 %v1388, %v1550
        %v1623 = vadd.f32 %v1389, %v1553
        %v1624 = vadd.f32 %v1390, %v1555
        %v1625 = vadd.f32 %v1391, %v1558
        %v1626 = vadd.f32 %v1392, %v1560
        %v1627 = vadd.f32 %v1393, %v1563
        %v1628 = vadd.f32 %v1394, %v1565
        %v1629 = vadd.f32 %v1395, %v1568
        %v1630 = vadd.f32 %v1396, %v1570
        %v1631 = vadd.f32 %v1397, %v1573
        %v1632 = vadd.f32 %v1398, %v1575
        %v1633 = vadd.f32 %v1399, %v1578
        %v1634 = vadd.f32 %v1400, %v1580
        %v1635 = vadd.f32 %v1401, %v1583
        %v1636 = vadd.f32 %v1402, %v1585
        %v1637 = vadd.f32 %v1403, %v1588
        %v1638 = vadd.f32 %v1404, %v1590
        %v1639 = vadd.f32 %v1405, %v1593
        %v1640 = vadd.f32 %v1406, %v1595
        %v1641 = vadd.f32 %v1407, %v1598
        %v1642 = vadd.f32 %v1408, %v1600
        %v1643 = vadd.f32 %v1409, %v1603
        %v1644 = vadd.f32 %v1410, %v1605
        %v1645 = vadd.f32 %v1411, %v1608
        %v1646 = vadd.f32 %v1412, %v1610
        %v1647 = vadd.f32 %v1413, %v1613
        %v1648 = vadd.f32 %v1414, %v1615
        %v1649 = vld [vmem:[%s511 + $0x9] sm:$0xff]
        %v1650 = vld [vmem:[%s511 + $0x11] sm:$0xff]
        %v1651 = vld [vmem:[%s511 + $0x29] sm:$0xff]
        %v1652 = vld [vmem:[%s511 + $0x31] sm:$0xff]
        %v1653 = vld [vmem:[%s511 + $0x49] sm:$0xff]
        %v1654 = vld [vmem:[%s511 + $0x51] sm:$0xff]
        %v1655 = vld [vmem:[%s511 + $0x69] sm:$0xff]
        %v1656 = vld [vmem:[%s511 + $0x71] sm:$0xff]
        %v1657 = vld [vmem:[%s511 + $0x89] sm:$0xff]
        %v1658 = vld [vmem:[%s511 + $0x91] sm:$0xff]
        %v1659 = vld [vmem:[%s511 + $0xa9] sm:$0xff]
        %v1660 = vld [vmem:[%s511 + $0xb1] sm:$0xff]
        %v1661 = vld [vmem:[%s511 + $0xc9] sm:$0xff]
        %v1662 = vld [vmem:[%s511 + $0xd1] sm:$0xff]
        %v1663 = vld [vmem:[%s511 + $0xe9] sm:$0xff]
        %v1664 = vld [vmem:[%s511 + $0xf1] sm:$0xff]
        %v1665 = vld [vmem:[%s511 + $0x109] sm:$0xff]
        %v1666 = vld [vmem:[%s511 + $0x111] sm:$0xff]
        %v1667 = vld [vmem:[%s511 + $0x129] sm:$0xff]
        %v1668 = vld [vmem:[%s511 + $0x131] sm:$0xff]
        %v1669 = vld [vmem:[%s511 + $0x149] sm:$0xff]
        %v1670 = vld [vmem:[%s511 + $0x151] sm:$0xff]
        %v1671 = vld [vmem:[%s511 + $0x169] sm:$0xff]
        %v1672 = vld [vmem:[%s511 + $0x171] sm:$0xff]
        %v1673 = vld [vmem:[%s511 + $0x189] sm:$0xff]
        %v1674 = vld [vmem:[%s511 + $0x191] sm:$0xff]
        %v1675 = vld [vmem:[%s511 + $0x1a9] sm:$0xff]
        %v1676 = vld [vmem:[%s511 + $0x1b1] sm:$0xff]
        %v1677 = vld [vmem:[%s511 + $0x1c9] sm:$0xff]
        %v1678 = vld [vmem:[%s511 + $0x1d1] sm:$0xff]
        %v1679 = vld [vmem:[%s511 + $0x1e9] sm:$0xff]
        %v1680 = vld [vmem:[%s511 + $0x1f1] sm:$0xff]
        %v1681 = vpack.c.bf16 %v1650, %v1649
        %v1682 = vpack.c.bf16 %v1652, %v1651
        %v1683 = vpack.c.bf16 %v1654, %v1653
        %v1684 = vpack.c.bf16 %v1656, %v1655
        %v1685 = vpack.c.bf16 %v1658, %v1657
        %v1686 = vpack.c.bf16 %v1660, %v1659
        %v1687 = vpack.c.bf16 %v1662, %v1661
        %v1688 = vpack.c.bf16 %v1664, %v1663
        %v1689 = vpack.c.bf16 %v1666, %v1665
        %v1690 = vpack.c.bf16 %v1668, %v1667
        %v1691 = vpack.c.bf16 %v1670, %v1669
        %v1692 = vpack.c.bf16 %v1672, %v1671
        %v1693 = vpack.c.bf16 %v1674, %v1673
        %v1694 = vpack.c.bf16 %v1676, %v1675
        %v1695 = vpack.c.bf16 %v1678, %v1677
        %v1696 = vpack.c.bf16 %v1680, %v1679
        %s1697 = scalar_lea.vmem [#allocation7], 80
        %v1698 = vld [vmem:[%s1697] sm:$0xf]
        %v1699 = vld [vmem:[%s1697 + $0x4] sm:$0xf]
        %v1700 = vld [vmem:[%s1697 + $0x8] sm:$0xf]
        %v1701 = vld [vmem:[%s1697 + $0xc] sm:$0xf]
        %v1706 = vunpack.c.l.b16 %v1698
        %v1707 = vunpack.c.l.b16 %v1699
        %v1708 = vunpack.c.l.b16 %v1700
        %v1709 = vunpack.c.l.b16 %v1701
        %v1710 = vpack.c.b16 %v1707, %v1706
        %v1711 = vpack.c.b16 %v1709, %v1708
        %v1715 = vsel %vm333, %v1681, 0
        %v1718 = vsel %vm333, %v1682, 0
        %v1721 = vsel %vm333, %v1683, 0
        %v1724 = vsel %vm333, %v1684, 0
        %v1727 = vsel %vm333, %v1685, 0
        %v1730 = vsel %vm333, %v1686, 0
        %v1733 = vsel %vm333, %v1687, 0
        %v1736 = vsel %vm333, %v1688, 0
        %v1739 = vsel %vm333, %v1689, 0
        %v1742 = vsel %vm333, %v1690, 0
        %v1745 = vsel %vm333, %v1691, 0
        %v1748 = vsel %vm333, %v1692, 0
        %v1751 = vsel %vm333, %v1693, 0
        %v1754 = vsel %vm333, %v1694, 0
        %v1757 = vsel %vm333, %v1695, 0
        %v1760 = vsel %vm333, %v1696, 0
        %1762 = vmatpush.bf16.msra.mxu0 0
        %1763 = vmatpush.bf16.msra.mxu0 0
        %1764 = vmatpush.bf16.msra.mxu0 0
        %1765 = vmatpush.bf16.msra.mxu0 0
        %1766 = vmatpush.bf16.msra.mxu0 0
        %1767 = vmatpush.bf16.msra.mxu0 0
        %1768 = vmatpush.bf16.msra.mxu0 %v1711
        %1769 = vmatpush.bf16.msra.mxu0 %v1710
        %1770 = vmatmul.bf16.gmra.mxu0 %v1715
        %v1771 = vpop.f32.mrf.mxu0
        %v1772 = vadd.f32 0.0, %v1771
        %v1773 = vpop.f32.mrf.mxu0
        %v1774 = vadd.f32 0.0, %v1773
        %1775 = vmatmul.bf16.gmra.mxu0 %v1718
        %v1776 = vpop.f32.mrf.mxu0
        %v1777 = vadd.f32 0.0, %v1776
        %v1778 = vpop.f32.mrf.mxu0
        %v1779 = vadd.f32 0.0, %v1778
        %1780 = vmatmul.bf16.gmra.mxu0 %v1721
        %v1781 = vpop.f32.mrf.mxu0
        %v1782 = vadd.f32 0.0, %v1781
        %v1783 = vpop.f32.mrf.mxu0
        %v1784 = vadd.f32 0.0, %v1783
        %1785 = vmatmul.bf16.gmra.mxu0 %v1724
        %v1786 = vpop.f32.mrf.mxu0
        %v1787 = vadd.f32 0.0, %v1786
        %v1788 = vpop.f32.mrf.mxu0
        %v1789 = vadd.f32 0.0, %v1788
        %1790 = vmatmul.bf16.gmra.mxu0 %v1727
        %v1791 = vpop.f32.mrf.mxu0
        %v1792 = vadd.f32 0.0, %v1791
        %v1793 = vpop.f32.mrf.mxu0
        %v1794 = vadd.f32 0.0, %v1793
        %1795 = vmatmul.bf16.gmra.mxu0 %v1730
        %v1796 = vpop.f32.mrf.mxu0
        %v1797 = vadd.f32 0.0, %v1796
        %v1798 = vpop.f32.mrf.mxu0
        %v1799 = vadd.f32 0.0, %v1798
        %1800 = vmatmul.bf16.gmra.mxu0 %v1733
        %v1801 = vpop.f32.mrf.mxu0
        %v1802 = vadd.f32 0.0, %v1801
        %v1803 = vpop.f32.mrf.mxu0
        %v1804 = vadd.f32 0.0, %v1803
        %1805 = vmatmul.bf16.gmra.mxu0 %v1736
        %v1806 = vpop.f32.mrf.mxu0
        %v1807 = vadd.f32 0.0, %v1806
        %v1808 = vpop.f32.mrf.mxu0
        %v1809 = vadd.f32 0.0, %v1808
        %1810 = vmatmul.bf16.gmra.mxu0 %v1739
        %v1811 = vpop.f32.mrf.mxu0
        %v1812 = vadd.f32 0.0, %v1811
        %v1813 = vpop.f32.mrf.mxu0
        %v1814 = vadd.f32 0.0, %v1813
        %1815 = vmatmul.bf16.gmra.mxu0 %v1742
        %v1816 = vpop.f32.mrf.mxu0
        %v1817 = vadd.f32 0.0, %v1816
        %v1818 = vpop.f32.mrf.mxu0
        %v1819 = vadd.f32 0.0, %v1818
        %1820 = vmatmul.bf16.gmra.mxu0 %v1745
        %v1821 = vpop.f32.mrf.mxu0
        %v1822 = vadd.f32 0.0, %v1821
        %v1823 = vpop.f32.mrf.mxu0
        %v1824 = vadd.f32 0.0, %v1823
        %1825 = vmatmul.bf16.gmra.mxu0 %v1748
        %v1826 = vpop.f32.mrf.mxu0
        %v1827 = vadd.f32 0.0, %v1826
        %v1828 = vpop.f32.mrf.mxu0
        %v1829 = vadd.f32 0.0, %v1828
        %1830 = vmatmul.bf16.gmra.mxu0 %v1751
        %v1831 = vpop.f32.mrf.mxu0
        %v1832 = vadd.f32 0.0, %v1831
        %v1833 = vpop.f32.mrf.mxu0
        %v1834 = vadd.f32 0.0, %v1833
        %1835 = vmatmul.bf16.gmra.mxu0 %v1754
        %v1836 = vpop.f32.mrf.mxu0
        %v1837 = vadd.f32 0.0, %v1836
        %v1838 = vpop.f32.mrf.mxu0
        %v1839 = vadd.f32 0.0, %v1838
        %1840 = vmatmul.bf16.gmra.mxu0 %v1757
        %v1841 = vpop.f32.mrf.mxu0
        %v1842 = vadd.f32 0.0, %v1841
        %v1843 = vpop.f32.mrf.mxu0
        %v1844 = vadd.f32 0.0, %v1843
        %1845 = vmatmul.bf16.gmra.mxu0 %v1760
        %v1846 = vpop.f32.mrf.mxu0
        %v1847 = vadd.f32 0.0, %v1846
        %v1848 = vpop.f32.mrf.mxu0
        %v1849 = vadd.f32 0.0, %v1848
        %1850 = vdwg.mxu0
        %v1851 = vadd.f32 %v1617, %v1772
        %v1852 = vadd.f32 %v1618, %v1774
        %v1853 = vadd.f32 %v1619, %v1777
        %v1854 = vadd.f32 %v1620, %v1779
        %v1855 = vadd.f32 %v1621, %v1782
        %v1856 = vadd.f32 %v1622, %v1784
        %v1857 = vadd.f32 %v1623, %v1787
        %v1858 = vadd.f32 %v1624, %v1789
        %v1859 = vadd.f32 %v1625, %v1792
        %v1860 = vadd.f32 %v1626, %v1794
        %v1861 = vadd.f32 %v1627, %v1797
        %v1862 = vadd.f32 %v1628, %v1799
        %v1863 = vadd.f32 %v1629, %v1802
        %v1864 = vadd.f32 %v1630, %v1804
        %v1865 = vadd.f32 %v1631, %v1807
        %v1866 = vadd.f32 %v1632, %v1809
        %v1867 = vadd.f32 %v1633, %v1812
        %v1868 = vadd.f32 %v1634, %v1814
        %v1869 = vadd.f32 %v1635, %v1817
        %v1870 = vadd.f32 %v1636, %v1819
        %v1871 = vadd.f32 %v1637, %v1822
        %v1872 = vadd.f32 %v1638, %v1824
        %v1873 = vadd.f32 %v1639, %v1827
        %v1874 = vadd.f32 %v1640, %v1829
        %v1875 = vadd.f32 %v1641, %v1832
        %v1876 = vadd.f32 %v1642, %v1834
        %v1877 = vadd.f32 %v1643, %v1837
        %v1878 = vadd.f32 %v1644, %v1839
        %v1879 = vadd.f32 %v1645, %v1842
        %v1880 = vadd.f32 %v1646, %v1844
        %v1881 = vadd.f32 %v1647, %v1847
        %v1882 = vadd.f32 %v1648, %v1849
        %s1883 = scalar_lea.vmem [#allocation2], 64
        %v1884 = vld [vmem:[%s1883 + $0x7] sm:$0xff]
        %v1885 = vld [vmem:[%s1883 + $0xf] sm:$0xff]
        %v1886 = vld [vmem:[%s1883 + $0x27] sm:$0xff]
        %v1887 = vld [vmem:[%s1883 + $0x2f] sm:$0xff]
        %v1888 = vld [vmem:[%s1883 + $0x47] sm:$0xff]
        %v1889 = vld [vmem:[%s1883 + $0x4f] sm:$0xff]
        %v1890 = vld [vmem:[%s1883 + $0x67] sm:$0xff]
        %v1891 = vld [vmem:[%s1883 + $0x6f] sm:$0xff]
        %v1892 = vld [vmem:[%s1883 + $0x87] sm:$0xff]
        %v1893 = vld [vmem:[%s1883 + $0x8f] sm:$0xff]
        %v1894 = vld [vmem:[%s1883 + $0xa7] sm:$0xff]
        %v1895 = vld [vmem:[%s1883 + $0xaf] sm:$0xff]
        %v1896 = vld [vmem:[%s1883 + $0xc7] sm:$0xff]
        %v1897 = vld [vmem:[%s1883 + $0xcf] sm:$0xff]
        %v1898 = vld [vmem:[%s1883 + $0xe7] sm:$0xff]
        %v1899 = vld [vmem:[%s1883 + $0xef] sm:$0xff]
        %v1900 = vld [vmem:[%s1883 + $0x107] sm:$0xff]
        %v1901 = vld [vmem:[%s1883 + $0x10f] sm:$0xff]
        %v1902 = vld [vmem:[%s1883 + $0x127] sm:$0xff]
        %v1903 = vld [vmem:[%s1883 + $0x12f] sm:$0xff]
        %v1904 = vld [vmem:[%s1883 + $0x147] sm:$0xff]
        %v1905 = vld [vmem:[%s1883 + $0x14f] sm:$0xff]
        %v1906 = vld [vmem:[%s1883 + $0x167] sm:$0xff]
        %v1907 = vld [vmem:[%s1883 + $0x16f] sm:$0xff]
        %v1908 = vld [vmem:[%s1883 + $0x187] sm:$0xff]
        %v1909 = vld [vmem:[%s1883 + $0x18f] sm:$0xff]
        %v1910 = vld [vmem:[%s1883 + $0x1a7] sm:$0xff]
        %v1911 = vld [vmem:[%s1883 + $0x1af] sm:$0xff]
        %v1912 = vld [vmem:[%s1883 + $0x1c7] sm:$0xff]
        %v1913 = vld [vmem:[%s1883 + $0x1cf] sm:$0xff]
        %v1914 = vld [vmem:[%s1883 + $0x1e7] sm:$0xff]
        %v1915 = vld [vmem:[%s1883 + $0x1ef] sm:$0xff]
        %v1916 = vpack.c.bf16 %v1885, %v1884
        %v1917 = vpack.c.bf16 %v1887, %v1886
        %v1918 = vpack.c.bf16 %v1889, %v1888
        %v1919 = vpack.c.bf16 %v1891, %v1890
        %v1920 = vpack.c.bf16 %v1893, %v1892
        %v1921 = vpack.c.bf16 %v1895, %v1894
        %v1922 = vpack.c.bf16 %v1897, %v1896
        %v1923 = vpack.c.bf16 %v1899, %v1898
        %v1924 = vpack.c.bf16 %v1901, %v1900
        %v1925 = vpack.c.bf16 %v1903, %v1902
        %v1926 = vpack.c.bf16 %v1905, %v1904
        %v1927 = vpack.c.bf16 %v1907, %v1906
        %v1928 = vpack.c.bf16 %v1909, %v1908
        %v1929 = vpack.c.bf16 %v1911, %v1910
        %v1930 = vpack.c.bf16 %v1913, %v1912
        %v1931 = vpack.c.bf16 %v1915, %v1914
        %s1932 = scalar_lea.vmem [#allocation7], 96
        %v1933 = vld [vmem:[%s1932] sm:$0xf]
        %v1934 = vld [vmem:[%s1932 + $0x4] sm:$0xf]
        %v1935 = vld [vmem:[%s1932 + $0x8] sm:$0xf]
        %v1936 = vld [vmem:[%s1932 + $0xc] sm:$0xf]
        %v1941 = vunpack.c.l.b16 %v1933
        %v1942 = vunpack.c.l.b16 %v1934
        %v1943 = vunpack.c.l.b16 %v1935
        %v1944 = vunpack.c.l.b16 %v1936
        %v1945 = vpack.c.b16 %v1942, %v1941
        %v1946 = vpack.c.b16 %v1944, %v1943
        %v1950 = vsel %vm333, %v1916, 0
        %v1953 = vsel %vm333, %v1917, 0
        %v1956 = vsel %vm333, %v1918, 0
        %v1959 = vsel %vm333, %v1919, 0
        %v1962 = vsel %vm333, %v1920, 0
        %v1965 = vsel %vm333, %v1921, 0
        %v1968 = vsel %vm333, %v1922, 0
        %v1971 = vsel %vm333, %v1923, 0
        %v1974 = vsel %vm333, %v1924, 0
        %v1977 = vsel %vm333, %v1925, 0
        %v1980 = vsel %vm333, %v1926, 0
        %v1983 = vsel %vm333, %v1927, 0
        %v1986 = vsel %vm333, %v1928, 0
        %v1989 = vsel %vm333, %v1929, 0
        %v1992 = vsel %vm333, %v1930, 0
        %v1995 = vsel %vm333, %v1931, 0
        %1997 = vmatpush.bf16.msra.mxu0 0
        %1998 = vmatpush.bf16.msra.mxu0 0
        %1999 = vmatpush.bf16.msra.mxu0 0
        %2000 = vmatpush.bf16.msra.mxu0 0
        %2001 = vmatpush.bf16.msra.mxu0 0
        %2002 = vmatpush.bf16.msra.mxu0 0
        %2003 = vmatpush.bf16.msra.mxu0 %v1946
        %2004 = vmatpush.bf16.msra.mxu0 %v1945
        %2005 = vmatmul.bf16.gmra.mxu0 %v1950
        %v2006 = vpop.f32.mrf.mxu0
        %v2007 = vadd.f32 0.0, %v2006
        %v2008 = vpop.f32.mrf.mxu0
        %v2009 = vadd.f32 0.0, %v2008
        %2010 = vmatmul.bf16.gmra.mxu0 %v1953
        %v2011 = vpop.f32.mrf.mxu0
        %v2012 = vadd.f32 0.0, %v2011
        %v2013 = vpop.f32.mrf.mxu0
        %v2014 = vadd.f32 0.0, %v2013
        %2015 = vmatmul.bf16.gmra.mxu0 %v1956
        %v2016 = vpop.f32.mrf.mxu0
        %v2017 = vadd.f32 0.0, %v2016
        %v2018 = vpop.f32.mrf.mxu0
        %v2019 = vadd.f32 0.0, %v2018
        %2020 = vmatmul.bf16.gmra.mxu0 %v1959
        %v2021 = vpop.f32.mrf.mxu0
        %v2022 = vadd.f32 0.0, %v2021
        %v2023 = vpop.f32.mrf.mxu0
        %v2024 = vadd.f32 0.0, %v2023
        %2025 = vmatmul.bf16.gmra.mxu0 %v1962
        %v2026 = vpop.f32.mrf.mxu0
        %v2027 = vadd.f32 0.0, %v2026
        %v2028 = vpop.f32.mrf.mxu0
        %v2029 = vadd.f32 0.0, %v2028
        %2030 = vmatmul.bf16.gmra.mxu0 %v1965
        %v2031 = vpop.f32.mrf.mxu0
        %v2032 = vadd.f32 0.0, %v2031
        %v2033 = vpop.f32.mrf.mxu0
        %v2034 = vadd.f32 0.0, %v2033
        %2035 = vmatmul.bf16.gmra.mxu0 %v1968
        %v2036 = vpop.f32.mrf.mxu0
        %v2037 = vadd.f32 0.0, %v2036
        %v2038 = vpop.f32.mrf.mxu0
        %v2039 = vadd.f32 0.0, %v2038
        %2040 = vmatmul.bf16.gmra.mxu0 %v1971
        %v2041 = vpop.f32.mrf.mxu0
        %v2042 = vadd.f32 0.0, %v2041
        %v2043 = vpop.f32.mrf.mxu0
        %v2044 = vadd.f32 0.0, %v2043
        %2045 = vmatmul.bf16.gmra.mxu0 %v1974
        %v2046 = vpop.f32.mrf.mxu0
        %v2047 = vadd.f32 0.0, %v2046
        %v2048 = vpop.f32.mrf.mxu0
        %v2049 = vadd.f32 0.0, %v2048
        %2050 = vmatmul.bf16.gmra.mxu0 %v1977
        %v2051 = vpop.f32.mrf.mxu0
        %v2052 = vadd.f32 0.0, %v2051
        %v2053 = vpop.f32.mrf.mxu0
        %v2054 = vadd.f32 0.0, %v2053
        %2055 = vmatmul.bf16.gmra.mxu0 %v1980
        %v2056 = vpop.f32.mrf.mxu0
        %v2057 = vadd.f32 0.0, %v2056
        %v2058 = vpop.f32.mrf.mxu0
        %v2059 = vadd.f32 0.0, %v2058
        %2060 = vmatmul.bf16.gmra.mxu0 %v1983
        %v2061 = vpop.f32.mrf.mxu0
        %v2062 = vadd.f32 0.0, %v2061
        %v2063 = vpop.f32.mrf.mxu0
        %v2064 = vadd.f32 0.0, %v2063
        %2065 = vmatmul.bf16.gmra.mxu0 %v1986
        %v2066 = vpop.f32.mrf.mxu0
        %v2067 = vadd.f32 0.0, %v2066
        %v2068 = vpop.f32.mrf.mxu0
        %v2069 = vadd.f32 0.0, %v2068
        %2070 = vmatmul.bf16.gmra.mxu0 %v1989
        %v2071 = vpop.f32.mrf.mxu0
        %v2072 = vadd.f32 0.0, %v2071
        %v2073 = vpop.f32.mrf.mxu0
        %v2074 = vadd.f32 0.0, %v2073
        %2075 = vmatmul.bf16.gmra.mxu0 %v1992
        %v2076 = vpop.f32.mrf.mxu0
        %v2077 = vadd.f32 0.0, %v2076
        %v2078 = vpop.f32.mrf.mxu0
        %v2079 = vadd.f32 0.0, %v2078
        %2080 = vmatmul.bf16.gmra.mxu0 %v1995
        %v2081 = vpop.f32.mrf.mxu0
        %v2082 = vadd.f32 0.0, %v2081
        %v2083 = vpop.f32.mrf.mxu0
        %v2084 = vadd.f32 0.0, %v2083
        %2085 = vdwg.mxu0
        %v2086 = vadd.f32 %v1851, %v2007
        %v2087 = vadd.f32 %v1852, %v2009
        %v2088 = vadd.f32 %v1853, %v2012
        %v2089 = vadd.f32 %v1854, %v2014
        %v2090 = vadd.f32 %v1855, %v2017
        %v2091 = vadd.f32 %v1856, %v2019
        %v2092 = vadd.f32 %v1857, %v2022
        %v2093 = vadd.f32 %v1858, %v2024
        %v2094 = vadd.f32 %v1859, %v2027
        %v2095 = vadd.f32 %v1860, %v2029
        %v2096 = vadd.f32 %v1861, %v2032
        %v2097 = vadd.f32 %v1862, %v2034
        %v2098 = vadd.f32 %v1863, %v2037
        %v2099 = vadd.f32 %v1864, %v2039
        %v2100 = vadd.f32 %v1865, %v2042
        %v2101 = vadd.f32 %v1866, %v2044
        %v2102 = vadd.f32 %v1867, %v2047
        %v2103 = vadd.f32 %v1868, %v2049
        %v2104 = vadd.f32 %v1869, %v2052
        %v2105 = vadd.f32 %v1870, %v2054
        %v2106 = vadd.f32 %v1871, %v2057
        %v2107 = vadd.f32 %v1872, %v2059
        %v2108 = vadd.f32 %v1873, %v2062
        %v2109 = vadd.f32 %v1874, %v2064
        %v2110 = vadd.f32 %v1875, %v2067
        %v2111 = vadd.f32 %v1876, %v2069
        %v2112 = vadd.f32 %v1877, %v2072
        %v2113 = vadd.f32 %v1878, %v2074
        %v2114 = vadd.f32 %v1879, %v2077
        %v2115 = vadd.f32 %v1880, %v2079
        %v2116 = vadd.f32 %v1881, %v2082
        %v2117 = vadd.f32 %v1882, %v2084
        %v2118 = vld [vmem:[%s1883 + $0x8] sm:$0xff]
        %v2119 = vld [vmem:[%s1883 + $0x10] sm:$0xff]
        %v2120 = vld [vmem:[%s1883 + $0x28] sm:$0xff]
        %v2121 = vld [vmem:[%s1883 + $0x30] sm:$0xff]
        %v2122 = vld [vmem:[%s1883 + $0x48] sm:$0xff]
        %v2123 = vld [vmem:[%s1883 + $0x50] sm:$0xff]
        %v2124 = vld [vmem:[%s1883 + $0x68] sm:$0xff]
        %v2125 = vld [vmem:[%s1883 + $0x70] sm:$0xff]
        %v2126 = vld [vmem:[%s1883 + $0x88] sm:$0xff]
        %v2127 = vld [vmem:[%s1883 + $0x90] sm:$0xff]
        %v2128 = vld [vmem:[%s1883 + $0xa8] sm:$0xff]
        %v2129 = vld [vmem:[%s1883 + $0xb0] sm:$0xff]
        %v2130 = vld [vmem:[%s1883 + $0xc8] sm:$0xff]
        %v2131 = vld [vmem:[%s1883 + $0xd0] sm:$0xff]
        %v2132 = vld [vmem:[%s1883 + $0xe8] sm:$0xff]
        %v2133 = vld [vmem:[%s1883 + $0xf0] sm:$0xff]
        %v2134 = vld [vmem:[%s1883 + $0x108] sm:$0xff]
        %v2135 = vld [vmem:[%s1883 + $0x110] sm:$0xff]
        %v2136 = vld [vmem:[%s1883 + $0x128] sm:$0xff]
        %v2137 = vld [vmem:[%s1883 + $0x130] sm:$0xff]
        %v2138 = vld [vmem:[%s1883 + $0x148] sm:$0xff]
        %v2139 = vld [vmem:[%s1883 + $0x150] sm:$0xff]
        %v2140 = vld [vmem:[%s1883 + $0x168] sm:$0xff]
        %v2141 = vld [vmem:[%s1883 + $0x170] sm:$0xff]
        %v2142 = vld [vmem:[%s1883 + $0x188] sm:$0xff]
        %v2143 = vld [vmem:[%s1883 + $0x190] sm:$0xff]
        %v2144 = vld [vmem:[%s1883 + $0x1a8] sm:$0xff]
        %v2145 = vld [vmem:[%s1883 + $0x1b0] sm:$0xff]
        %v2146 = vld [vmem:[%s1883 + $0x1c8] sm:$0xff]
        %v2147 = vld [vmem:[%s1883 + $0x1d0] sm:$0xff]
        %v2148 = vld [vmem:[%s1883 + $0x1e8] sm:$0xff]
        %v2149 = vld [vmem:[%s1883 + $0x1f0] sm:$0xff]
        %v2150 = vpack.c.bf16 %v2119, %v2118
        %v2151 = vpack.c.bf16 %v2121, %v2120
        %v2152 = vpack.c.bf16 %v2123, %v2122
        %v2153 = vpack.c.bf16 %v2125, %v2124
        %v2154 = vpack.c.bf16 %v2127, %v2126
        %v2155 = vpack.c.bf16 %v2129, %v2128
        %v2156 = vpack.c.bf16 %v2131, %v2130
        %v2157 = vpack.c.bf16 %v2133, %v2132
        %v2158 = vpack.c.bf16 %v2135, %v2134
        %v2159 = vpack.c.bf16 %v2137, %v2136
        %v2160 = vpack.c.bf16 %v2139, %v2138
        %v2161 = vpack.c.bf16 %v2141, %v2140
        %v2162 = vpack.c.bf16 %v2143, %v2142
        %v2163 = vpack.c.bf16 %v2145, %v2144
        %v2164 = vpack.c.bf16 %v2147, %v2146
        %v2165 = vpack.c.bf16 %v2149, %v2148
        %s2166 = scalar_lea.vmem [#allocation7], 112
        %v2167 = vld [vmem:[%s2166] sm:$0xf]
        %v2168 = vld [vmem:[%s2166 + $0x4] sm:$0xf]
        %v2169 = vld [vmem:[%s2166 + $0x8] sm:$0xf]
        %v2170 = vld [vmem:[%s2166 + $0xc] sm:$0xf]
        %v2175 = vunpack.c.l.b16 %v2167
        %v2176 = vunpack.c.l.b16 %v2168
        %v2177 = vunpack.c.l.b16 %v2169
        %v2178 = vunpack.c.l.b16 %v2170
        %v2179 = vpack.c.b16 %v2176, %v2175
        %v2180 = vpack.c.b16 %v2178, %v2177
        %v2184 = vsel %vm333, %v2150, 0
        %v2187 = vsel %vm333, %v2151, 0
        %v2190 = vsel %vm333, %v2152, 0
        %v2193 = vsel %vm333, %v2153, 0
        %v2196 = vsel %vm333, %v2154, 0
        %v2199 = vsel %vm333, %v2155, 0
        %v2202 = vsel %vm333, %v2156, 0
        %v2205 = vsel %vm333, %v2157, 0
        %v2208 = vsel %vm333, %v2158, 0
        %v2211 = vsel %vm333, %v2159, 0
        %v2214 = vsel %vm333, %v2160, 0
        %v2217 = vsel %vm333, %v2161, 0
        %v2220 = vsel %vm333, %v2162, 0
        %v2223 = vsel %vm333, %v2163, 0
        %v2226 = vsel %vm333, %v2164, 0
        %v2229 = vsel %vm333, %v2165, 0
        %2231 = vmatpush.bf16.msra.mxu0 0
        %2232 = vmatpush.bf16.msra.mxu0 0
        %2233 = vmatpush.bf16.msra.mxu0 0
        %2234 = vmatpush.bf16.msra.mxu0 0
        %2235 = vmatpush.bf16.msra.mxu0 0
        %2236 = vmatpush.bf16.msra.mxu0 0
        %2237 = vmatpush.bf16.msra.mxu0 %v2180
        %2238 = vmatpush.bf16.msra.mxu0 %v2179
        %2239 = vmatmul.bf16.gmra.mxu0 %v2184
        %v2240 = vpop.f32.mrf.mxu0
        %v2241 = vadd.f32 0.0, %v2240
        %v2242 = vpop.f32.mrf.mxu0
        %v2243 = vadd.f32 0.0, %v2242
        %2244 = vmatmul.bf16.gmra.mxu0 %v2187
        %v2245 = vpop.f32.mrf.mxu0
        %v2246 = vadd.f32 0.0, %v2245
        %v2247 = vpop.f32.mrf.mxu0
        %v2248 = vadd.f32 0.0, %v2247
        %2249 = vmatmul.bf16.gmra.mxu0 %v2190
        %v2250 = vpop.f32.mrf.mxu0
        %v2251 = vadd.f32 0.0, %v2250
        %v2252 = vpop.f32.mrf.mxu0
        %v2253 = vadd.f32 0.0, %v2252
        %2254 = vmatmul.bf16.gmra.mxu0 %v2193
        %v2255 = vpop.f32.mrf.mxu0
        %v2256 = vadd.f32 0.0, %v2255
        %v2257 = vpop.f32.mrf.mxu0
        %v2258 = vadd.f32 0.0, %v2257
        %2259 = vmatmul.bf16.gmra.mxu0 %v2196
        %v2260 = vpop.f32.mrf.mxu0
        %v2261 = vadd.f32 0.0, %v2260
        %v2262 = vpop.f32.mrf.mxu0
        %v2263 = vadd.f32 0.0, %v2262
        %2264 = vmatmul.bf16.gmra.mxu0 %v2199
        %v2265 = vpop.f32.mrf.mxu0
        %v2266 = vadd.f32 0.0, %v2265
        %v2267 = vpop.f32.mrf.mxu0
        %v2268 = vadd.f32 0.0, %v2267
        %2269 = vmatmul.bf16.gmra.mxu0 %v2202
        %v2270 = vpop.f32.mrf.mxu0
        %v2271 = vadd.f32 0.0, %v2270
        %v2272 = vpop.f32.mrf.mxu0
        %v2273 = vadd.f32 0.0, %v2272
        %2274 = vmatmul.bf16.gmra.mxu0 %v2205
        %v2275 = vpop.f32.mrf.mxu0
        %v2276 = vadd.f32 0.0, %v2275
        %v2277 = vpop.f32.mrf.mxu0
        %v2278 = vadd.f32 0.0, %v2277
        %2279 = vmatmul.bf16.gmra.mxu0 %v2208
        %v2280 = vpop.f32.mrf.mxu0
        %v2281 = vadd.f32 0.0, %v2280
        %v2282 = vpop.f32.mrf.mxu0
        %v2283 = vadd.f32 0.0, %v2282
        %2284 = vmatmul.bf16.gmra.mxu0 %v2211
        %v2285 = vpop.f32.mrf.mxu0
        %v2286 = vadd.f32 0.0, %v2285
        %v2287 = vpop.f32.mrf.mxu0
        %v2288 = vadd.f32 0.0, %v2287
        %2289 = vmatmul.bf16.gmra.mxu0 %v2214
        %v2290 = vpop.f32.mrf.mxu0
        %v2291 = vadd.f32 0.0, %v2290
        %v2292 = vpop.f32.mrf.mxu0
        %v2293 = vadd.f32 0.0, %v2292
        %2294 = vmatmul.bf16.gmra.mxu0 %v2217
        %v2295 = vpop.f32.mrf.mxu0
        %v2296 = vadd.f32 0.0, %v2295
        %v2297 = vpop.f32.mrf.mxu0
        %v2298 = vadd.f32 0.0, %v2297
        %2299 = vmatmul.bf16.gmra.mxu0 %v2220
        %v2300 = vpop.f32.mrf.mxu0
        %v2301 = vadd.f32 0.0, %v2300
        %v2302 = vpop.f32.mrf.mxu0
        %v2303 = vadd.f32 0.0, %v2302
        %2304 = vmatmul.bf16.gmra.mxu0 %v2223
        %v2305 = vpop.f32.mrf.mxu0
        %v2306 = vadd.f32 0.0, %v2305
        %v2307 = vpop.f32.mrf.mxu0
        %v2308 = vadd.f32 0.0, %v2307
        %2309 = vmatmul.bf16.gmra.mxu0 %v2226
        %v2310 = vpop.f32.mrf.mxu0
        %v2311 = vadd.f32 0.0, %v2310
        %v2312 = vpop.f32.mrf.mxu0
        %v2313 = vadd.f32 0.0, %v2312
        %2314 = vmatmul.bf16.gmra.mxu0 %v2229
        %v2315 = vpop.f32.mrf.mxu0
        %v2316 = vadd.f32 0.0, %v2315
        %v2317 = vpop.f32.mrf.mxu0
        %v2318 = vadd.f32 0.0, %v2317
        %2319 = vdwg.mxu0
        %v2320 = vadd.f32 %v2086, %v2241
        %v2321 = vadd.f32 %v2087, %v2243
        %v2322 = vadd.f32 %v2088, %v2246
        %v2323 = vadd.f32 %v2089, %v2248
        %v2324 = vadd.f32 %v2090, %v2251
        %v2325 = vadd.f32 %v2091, %v2253
        %v2326 = vadd.f32 %v2092, %v2256
        %v2327 = vadd.f32 %v2093, %v2258
        %v2328 = vadd.f32 %v2094, %v2261
        %v2329 = vadd.f32 %v2095, %v2263
        %v2330 = vadd.f32 %v2096, %v2266
        %v2331 = vadd.f32 %v2097, %v2268
        %v2332 = vadd.f32 %v2098, %v2271
        %v2333 = vadd.f32 %v2099, %v2273
        %v2334 = vadd.f32 %v2100, %v2276
        %v2335 = vadd.f32 %v2101, %v2278
        %v2336 = vadd.f32 %v2102, %v2281
        %v2337 = vadd.f32 %v2103, %v2283
        %v2338 = vadd.f32 %v2104, %v2286
        %v2339 = vadd.f32 %v2105, %v2288
        %v2340 = vadd.f32 %v2106, %v2291
        %v2341 = vadd.f32 %v2107, %v2293
        %v2342 = vadd.f32 %v2108, %v2296
        %v2343 = vadd.f32 %v2109, %v2298
        %v2344 = vadd.f32 %v2110, %v2301
        %v2345 = vadd.f32 %v2111, %v2303
        %v2346 = vadd.f32 %v2112, %v2306
        %v2347 = vadd.f32 %v2113, %v2308
        %v2348 = vadd.f32 %v2114, %v2311
        %v2349 = vadd.f32 %v2115, %v2313
        %v2350 = vadd.f32 %v2116, %v2316
        %v2351 = vadd.f32 %v2117, %v2318
        %v2352 = vld [vmem:[%s1883 + $0x9] sm:$0xff]
        %v2353 = vld [vmem:[%s1883 + $0x11] sm:$0xff]
        %v2354 = vld [vmem:[%s1883 + $0x29] sm:$0xff]
        %v2355 = vld [vmem:[%s1883 + $0x31] sm:$0xff]
        %v2356 = vld [vmem:[%s1883 + $0x49] sm:$0xff]
        %v2357 = vld [vmem:[%s1883 + $0x51] sm:$0xff]
        %v2358 = vld [vmem:[%s1883 + $0x69] sm:$0xff]
        %v2359 = vld [vmem:[%s1883 + $0x71] sm:$0xff]
        %v2360 = vld [vmem:[%s1883 + $0x89] sm:$0xff]
        %v2361 = vld [vmem:[%s1883 + $0x91] sm:$0xff]
        %v2362 = vld [vmem:[%s1883 + $0xa9] sm:$0xff]
        %v2363 = vld [vmem:[%s1883 + $0xb1] sm:$0xff]
        %v2364 = vld [vmem:[%s1883 + $0xc9] sm:$0xff]
        %v2365 = vld [vmem:[%s1883 + $0xd1] sm:$0xff]
        %v2366 = vld [vmem:[%s1883 + $0xe9] sm:$0xff]
        %v2367 = vld [vmem:[%s1883 + $0xf1] sm:$0xff]
        %v2368 = vld [vmem:[%s1883 + $0x109] sm:$0xff]
        %v2369 = vld [vmem:[%s1883 + $0x111] sm:$0xff]
        %v2370 = vld [vmem:[%s1883 + $0x129] sm:$0xff]
        %v2371 = vld [vmem:[%s1883 + $0x131] sm:$0xff]
        %v2372 = vld [vmem:[%s1883 + $0x149] sm:$0xff]
        %v2373 = vld [vmem:[%s1883 + $0x151] sm:$0xff]
        %v2374 = vld [vmem:[%s1883 + $0x169] sm:$0xff]
        %v2375 = vld [vmem:[%s1883 + $0x171] sm:$0xff]
        %v2376 = vld [vmem:[%s1883 + $0x189] sm:$0xff]
        %v2377 = vld [vmem:[%s1883 + $0x191] sm:$0xff]
        %v2378 = vld [vmem:[%s1883 + $0x1a9] sm:$0xff]
        %v2379 = vld [vmem:[%s1883 + $0x1b1] sm:$0xff]
        %v2380 = vld [vmem:[%s1883 + $0x1c9] sm:$0xff]
        %v2381 = vld [vmem:[%s1883 + $0x1d1] sm:$0xff]
        %v2382 = vld [vmem:[%s1883 + $0x1e9] sm:$0xff]
        %v2383 = vld [vmem:[%s1883 + $0x1f1] sm:$0xff]
        %v2384 = vpack.c.bf16 %v2353, %v2352
        %v2385 = vpack.c.bf16 %v2355, %v2354
        %v2386 = vpack.c.bf16 %v2357, %v2356
        %v2387 = vpack.c.bf16 %v2359, %v2358
        %v2388 = vpack.c.bf16 %v2361, %v2360
        %v2389 = vpack.c.bf16 %v2363, %v2362
        %v2390 = vpack.c.bf16 %v2365, %v2364
        %v2391 = vpack.c.bf16 %v2367, %v2366
        %v2392 = vpack.c.bf16 %v2369, %v2368
        %v2393 = vpack.c.bf16 %v2371, %v2370
        %v2394 = vpack.c.bf16 %v2373, %v2372
        %v2395 = vpack.c.bf16 %v2375, %v2374
        %v2396 = vpack.c.bf16 %v2377, %v2376
        %v2397 = vpack.c.bf16 %v2379, %v2378
        %v2398 = vpack.c.bf16 %v2381, %v2380
        %v2399 = vpack.c.bf16 %v2383, %v2382
        %s2400 = scalar_lea.vmem [#allocation7], 128
        %v2401 = vld [vmem:[%s2400] sm:$0xf]
        %v2402 = vld [vmem:[%s2400 + $0x4] sm:$0xf]
        %v2403 = vld [vmem:[%s2400 + $0x8] sm:$0xf]
        %v2404 = vld [vmem:[%s2400 + $0xc] sm:$0xf]
        %v2409 = vunpack.c.l.b16 %v2401
        %v2410 = vunpack.c.l.b16 %v2402
        %v2411 = vunpack.c.l.b16 %v2403
        %v2412 = vunpack.c.l.b16 %v2404
        %v2413 = vpack.c.b16 %v2410, %v2409
        %v2414 = vpack.c.b16 %v2412, %v2411
        %v2418 = vsel %vm333, %v2384, 0
        %v2421 = vsel %vm333, %v2385, 0
        %v2424 = vsel %vm333, %v2386, 0
        %v2427 = vsel %vm333, %v2387, 0
        %v2430 = vsel %vm333, %v2388, 0
        %v2433 = vsel %vm333, %v2389, 0
        %v2436 = vsel %vm333, %v2390, 0
        %v2439 = vsel %vm333, %v2391, 0
        %v2442 = vsel %vm333, %v2392, 0
        %v2445 = vsel %vm333, %v2393, 0
        %v2448 = vsel %vm333, %v2394, 0
        %v2451 = vsel %vm333, %v2395, 0
        %v2454 = vsel %vm333, %v2396, 0
        %v2457 = vsel %vm333, %v2397, 0
        %v2460 = vsel %vm333, %v2398, 0
        %v2463 = vsel %vm333, %v2399, 0
        %2465 = vmatpush.bf16.msra.mxu0 0
        %2466 = vmatpush.bf16.msra.mxu0 0
        %2467 = vmatpush.bf16.msra.mxu0 0
        %2468 = vmatpush.bf16.msra.mxu0 0
        %2469 = vmatpush.bf16.msra.mxu0 0
        %2470 = vmatpush.bf16.msra.mxu0 0
        %2471 = vmatpush.bf16.msra.mxu0 %v2414
        %2472 = vmatpush.bf16.msra.mxu0 %v2413
        %2473 = vmatmul.bf16.gmra.mxu0 %v2418
        %v2474 = vpop.f32.mrf.mxu0
        %v2475 = vadd.f32 0.0, %v2474
        %v2476 = vpop.f32.mrf.mxu0
        %v2477 = vadd.f32 0.0, %v2476
        %2478 = vmatmul.bf16.gmra.mxu0 %v2421
        %v2479 = vpop.f32.mrf.mxu0
        %v2480 = vadd.f32 0.0, %v2479
        %v2481 = vpop.f32.mrf.mxu0
        %v2482 = vadd.f32 0.0, %v2481
        %2483 = vmatmul.bf16.gmra.mxu0 %v2424
        %v2484 = vpop.f32.mrf.mxu0
        %v2485 = vadd.f32 0.0, %v2484
        %v2486 = vpop.f32.mrf.mxu0
        %v2487 = vadd.f32 0.0, %v2486
        %2488 = vmatmul.bf16.gmra.mxu0 %v2427
        %v2489 = vpop.f32.mrf.mxu0
        %v2490 = vadd.f32 0.0, %v2489
        %v2491 = vpop.f32.mrf.mxu0
        %v2492 = vadd.f32 0.0, %v2491
        %2493 = vmatmul.bf16.gmra.mxu0 %v2430
        %v2494 = vpop.f32.mrf.mxu0
        %v2495 = vadd.f32 0.0, %v2494
        %v2496 = vpop.f32.mrf.mxu0
        %v2497 = vadd.f32 0.0, %v2496
        %2498 = vmatmul.bf16.gmra.mxu0 %v2433
        %v2499 = vpop.f32.mrf.mxu0
        %v2500 = vadd.f32 0.0, %v2499
        %v2501 = vpop.f32.mrf.mxu0
        %v2502 = vadd.f32 0.0, %v2501
        %2503 = vmatmul.bf16.gmra.mxu0 %v2436
        %v2504 = vpop.f32.mrf.mxu0
        %v2505 = vadd.f32 0.0, %v2504
        %v2506 = vpop.f32.mrf.mxu0
        %v2507 = vadd.f32 0.0, %v2506
        %2508 = vmatmul.bf16.gmra.mxu0 %v2439
        %v2509 = vpop.f32.mrf.mxu0
        %v2510 = vadd.f32 0.0, %v2509
        %v2511 = vpop.f32.mrf.mxu0
        %v2512 = vadd.f32 0.0, %v2511
        %2513 = vmatmul.bf16.gmra.mxu0 %v2442
        %v2514 = vpop.f32.mrf.mxu0
        %v2515 = vadd.f32 0.0, %v2514
        %v2516 = vpop.f32.mrf.mxu0
        %v2517 = vadd.f32 0.0, %v2516
        %2518 = vmatmul.bf16.gmra.mxu0 %v2445
        %v2519 = vpop.f32.mrf.mxu0
        %v2520 = vadd.f32 0.0, %v2519
        %v2521 = vpop.f32.mrf.mxu0
        %v2522 = vadd.f32 0.0, %v2521
        %2523 = vmatmul.bf16.gmra.mxu0 %v2448
        %v2524 = vpop.f32.mrf.mxu0
        %v2525 = vadd.f32 0.0, %v2524
        %v2526 = vpop.f32.mrf.mxu0
        %v2527 = vadd.f32 0.0, %v2526
        %2528 = vmatmul.bf16.gmra.mxu0 %v2451
        %v2529 = vpop.f32.mrf.mxu0
        %v2530 = vadd.f32 0.0, %v2529
        %v2531 = vpop.f32.mrf.mxu0
        %v2532 = vadd.f32 0.0, %v2531
        %2533 = vmatmul.bf16.gmra.mxu0 %v2454
        %v2534 = vpop.f32.mrf.mxu0
        %v2535 = vadd.f32 0.0, %v2534
        %v2536 = vpop.f32.mrf.mxu0
        %v2537 = vadd.f32 0.0, %v2536
        %2538 = vmatmul.bf16.gmra.mxu0 %v2457
        %v2539 = vpop.f32.mrf.mxu0
        %v2540 = vadd.f32 0.0, %v2539
        %v2541 = vpop.f32.mrf.mxu0
        %v2542 = vadd.f32 0.0, %v2541
        %2543 = vmatmul.bf16.gmra.mxu0 %v2460
        %v2544 = vpop.f32.mrf.mxu0
        %v2545 = vadd.f32 0.0, %v2544
        %v2546 = vpop.f32.mrf.mxu0
        %v2547 = vadd.f32 0.0, %v2546
        %2548 = vmatmul.bf16.gmra.mxu0 %v2463
        %v2549 = vpop.f32.mrf.mxu0
        %v2550 = vadd.f32 0.0, %v2549
        %v2551 = vpop.f32.mrf.mxu0
        %v2552 = vadd.f32 0.0, %v2551
        %2553 = vdwg.mxu0
        %v2554 = vadd.f32 %v2320, %v2475
        %v2555 = vadd.f32 %v2321, %v2477
        %v2556 = vadd.f32 %v2322, %v2480
        %v2557 = vadd.f32 %v2323, %v2482
        %v2558 = vadd.f32 %v2324, %v2485
        %v2559 = vadd.f32 %v2325, %v2487
        %v2560 = vadd.f32 %v2326, %v2490
        %v2561 = vadd.f32 %v2327, %v2492
        %v2562 = vadd.f32 %v2328, %v2495
        %v2563 = vadd.f32 %v2329, %v2497
        %v2564 = vadd.f32 %v2330, %v2500
        %v2565 = vadd.f32 %v2331, %v2502
        %v2566 = vadd.f32 %v2332, %v2505
        %v2567 = vadd.f32 %v2333, %v2507
        %v2568 = vadd.f32 %v2334, %v2510
        %v2569 = vadd.f32 %v2335, %v2512
        %v2570 = vadd.f32 %v2336, %v2515
        %v2571 = vadd.f32 %v2337, %v2517
        %v2572 = vadd.f32 %v2338, %v2520
        %v2573 = vadd.f32 %v2339, %v2522
        %v2574 = vadd.f32 %v2340, %v2525
        %v2575 = vadd.f32 %v2341, %v2527
        %v2576 = vadd.f32 %v2342, %v2530
        %v2577 = vadd.f32 %v2343, %v2532
        %v2578 = vadd.f32 %v2344, %v2535
        %v2579 = vadd.f32 %v2345, %v2537
        %v2580 = vadd.f32 %v2346, %v2540
        %v2581 = vadd.f32 %v2347, %v2542
        %v2582 = vadd.f32 %v2348, %v2545
        %v2583 = vadd.f32 %v2349, %v2547
        %v2584 = vadd.f32 %v2350, %v2550
        %v2585 = vadd.f32 %v2351, %v2552
        %v2586 = vld [vmem:[%s2] sm:$0x1]
        %v2588 = vperm.slane %v2586, 0
        %v2590 = vmul.f32 %v2554, %v2588
        %v2591 = vmul.f32 %v2555, %v2588
        %v2592 = vmul.f32 %v2556, %v2588
        %v2593 = vmul.f32 %v2557, %v2588
        %v2594 = vmul.f32 %v2558, %v2588
        %v2595 = vmul.f32 %v2559, %v2588
        %v2596 = vmul.f32 %v2560, %v2588
        %v2597 = vmul.f32 %v2561, %v2588
        %v2598 = vmul.f32 %v2562, %v2588
        %v2599 = vmul.f32 %v2563, %v2588
        %v2600 = vmul.f32 %v2564, %v2588
        %v2601 = vmul.f32 %v2565, %v2588
        %v2602 = vmul.f32 %v2566, %v2588
        %v2603 = vmul.f32 %v2567, %v2588
        %v2604 = vmul.f32 %v2568, %v2588
        %v2605 = vmul.f32 %v2569, %v2588
        %v2606 = vmul.f32 %v2570, %v2588
        %v2607 = vmul.f32 %v2571, %v2588
        %v2608 = vmul.f32 %v2572, %v2588
        %v2609 = vmul.f32 %v2573, %v2588
        %v2610 = vmul.f32 %v2574, %v2588
        %v2611 = vmul.f32 %v2575, %v2588
        %v2612 = vmul.f32 %v2576, %v2588
        %v2613 = vmul.f32 %v2577, %v2588
        %v2614 = vmul.f32 %v2578, %v2588
        %v2615 = vmul.f32 %v2579, %v2588
        %v2616 = vmul.f32 %v2580, %v2588
        %v2617 = vmul.f32 %v2581, %v2588
        %v2618 = vmul.f32 %v2582, %v2588
        %v2619 = vmul.f32 %v2583, %v2588
        %v2620 = vmul.f32 %v2584, %v2588
        %v2621 = vmul.f32 %v2585, %v2588
        %v2622 = vld [vmem:[%s3] sm:$0x1]
        %v2624 = vperm.slane %v2622, 0
        %v2626 = vadd.f32 %v2590, %v2624
        %v2627 = vadd.f32 %v2591, %v2624
        %v2628 = vadd.f32 %v2592, %v2624
        %v2629 = vadd.f32 %v2593, %v2624
        %v2630 = vadd.f32 %v2594, %v2624
        %v2631 = vadd.f32 %v2595, %v2624
        %v2632 = vadd.f32 %v2596, %v2624
        %v2633 = vadd.f32 %v2597, %v2624
        %v2634 = vadd.f32 %v2598, %v2624
        %v2635 = vadd.f32 %v2599, %v2624
        %v2636 = vadd.f32 %v2600, %v2624
        %v2637 = vadd.f32 %v2601, %v2624
        %v2638 = vadd.f32 %v2602, %v2624
        %v2639 = vadd.f32 %v2603, %v2624
        %v2640 = vadd.f32 %v2604, %v2624
        %v2641 = vadd.f32 %v2605, %v2624
        %v2642 = vadd.f32 %v2606, %v2624
        %v2643 = vadd.f32 %v2607, %v2624
        %v2644 = vadd.f32 %v2608, %v2624
        %v2645 = vadd.f32 %v2609, %v2624
        %v2646 = vadd.f32 %v2610, %v2624
        %v2647 = vadd.f32 %v2611, %v2624
        %v2648 = vadd.f32 %v2612, %v2624
        %v2649 = vadd.f32 %v2613, %v2624
        %v2650 = vadd.f32 %v2614, %v2624
        %v2651 = vadd.f32 %v2615, %v2624
        %v2652 = vadd.f32 %v2616, %v2624
        %v2653 = vadd.f32 %v2617, %v2624
        %v2654 = vadd.f32 %v2618, %v2624
        %v2655 = vadd.f32 %v2619, %v2624
        %v2656 = vadd.f32 %v2620, %v2624
        %v2657 = vadd.f32 %v2621, %v2624
        %v2658 = vmax.f32 %v2626, 0.0
        %v2659 = vmax.f32 %v2627, 0.0
        %v2660 = vmax.f32 %v2628, 0.0
        %v2661 = vmax.f32 %v2629, 0.0
        %v2662 = vmax.f32 %v2630, 0.0
        %v2663 = vmax.f32 %v2631, 0.0
        %v2664 = vmax.f32 %v2632, 0.0
        %v2665 = vmax.f32 %v2633, 0.0
        %v2666 = vmax.f32 %v2634, 0.0
        %v2667 = vmax.f32 %v2635, 0.0
        %v2668 = vmax.f32 %v2636, 0.0
        %v2669 = vmax.f32 %v2637, 0.0
        %v2670 = vmax.f32 %v2638, 0.0
        %v2671 = vmax.f32 %v2639, 0.0
        %v2672 = vmax.f32 %v2640, 0.0
        %v2673 = vmax.f32 %v2641, 0.0
        %v2674 = vmax.f32 %v2642, 0.0
        %v2675 = vmax.f32 %v2643, 0.0
        %v2676 = vmax.f32 %v2644, 0.0
        %v2677 = vmax.f32 %v2645, 0.0
        %v2678 = vmax.f32 %v2646, 0.0
        %v2679 = vmax.f32 %v2647, 0.0
        %v2680 = vmax.f32 %v2648, 0.0
        %v2681 = vmax.f32 %v2649, 0.0
        %v2682 = vmax.f32 %v2650, 0.0
        %v2683 = vmax.f32 %v2651, 0.0
        %v2684 = vmax.f32 %v2652, 0.0
        %v2685 = vmax.f32 %v2653, 0.0
        %v2686 = vmax.f32 %v2654, 0.0
        %v2687 = vmax.f32 %v2655, 0.0
        %v2688 = vmax.f32 %v2656, 0.0
        %v2689 = vmax.f32 %v2657, 0.0
        %s2690 = scalar_lea.vmem [#allocation3], 32
        %2691 = vst.msk [vmem:[%s2690 + $0x8] sm:$0xff] %vm333, %v2658
        %2692 = vst.msk [vmem:[%s2690 + $0x10] sm:$0xff] %vm333, %v2659
        %2693 = vst.msk [vmem:[%s2690 + $0x28] sm:$0xff] %vm333, %v2660
        %2694 = vst.msk [vmem:[%s2690 + $0x30] sm:$0xff] %vm333, %v2661
        %2695 = vst.msk [vmem:[%s2690 + $0x48] sm:$0xff] %vm333, %v2662
        %2696 = vst.msk [vmem:[%s2690 + $0x50] sm:$0xff] %vm333, %v2663
        %2697 = vst.msk [vmem:[%s2690 + $0x68] sm:$0xff] %vm333, %v2664
        %2698 = vst.msk [vmem:[%s2690 + $0x70] sm:$0xff] %vm333, %v2665
        %2699 = vst.msk [vmem:[%s2690 + $0x88] sm:$0xff] %vm333, %v2666
        %2700 = vst.msk [vmem:[%s2690 + $0x90] sm:$0xff] %vm333, %v2667
        %2701 = vst.msk [vmem:[%s2690 + $0xa8] sm:$0xff] %vm333, %v2668
        %2702 = vst.msk [vmem:[%s2690 + $0xb0] sm:$0xff] %vm333, %v2669
        %2703 = vst.msk [vmem:[%s2690 + $0xc8] sm:$0xff] %vm333, %v2670
        %2704 = vst.msk [vmem:[%s2690 + $0xd0] sm:$0xff] %vm333, %v2671
        %2705 = vst.msk [vmem:[%s2690 + $0xe8] sm:$0xff] %vm333, %v2672
        %2706 = vst.msk [vmem:[%s2690 + $0xf0] sm:$0xff] %vm333, %v2673
        %2707 = vst.msk [vmem:[%s2690 + $0x108] sm:$0xff] %vm333, %v2674
        %2708 = vst.msk [vmem:[%s2690 + $0x110] sm:$0xff] %vm333, %v2675
        %2709 = vst.msk [vmem:[%s2690 + $0x128] sm:$0xff] %vm333, %v2676
        %2710 = vst.msk [vmem:[%s2690 + $0x130] sm:$0xff] %vm333, %v2677
        %2711 = vst.msk [vmem:[%s2690 + $0x148] sm:$0xff] %vm333, %v2678
        %2712 = vst.msk [vmem:[%s2690 + $0x150] sm:$0xff] %vm333, %v2679
        %2713 = vst.msk [vmem:[%s2690 + $0x168] sm:$0xff] %vm333, %v2680
        %2714 = vst.msk [vmem:[%s2690 + $0x170] sm:$0xff] %vm333, %v2681
        %2715 = vst.msk [vmem:[%s2690 + $0x188] sm:$0xff] %vm333, %v2682
        %2716 = vst.msk [vmem:[%s2690 + $0x190] sm:$0xff] %vm333, %v2683
        %2717 = vst.msk [vmem:[%s2690 + $0x1a8] sm:$0xff] %vm333, %v2684
        %2718 = vst.msk [vmem:[%s2690 + $0x1b0] sm:$0xff] %vm333, %v2685
        %2719 = vst.msk [vmem:[%s2690 + $0x1c8] sm:$0xff] %vm333, %v2686
        %2720 = vst.msk [vmem:[%s2690 + $0x1d0] sm:$0xff] %vm333, %v2687
        %2721 = vst.msk [vmem:[%s2690 + $0x1e8] sm:$0xff] %vm333, %v2688
        %2722 = vst.msk [vmem:[%s2690 + $0x1f0] sm:$0xff] %vm333, %v2689
        %v2723 = vld [vmem:[#allocation3 + $0x7] sm:$0xff]
        %v2724 = vld [vmem:[#allocation3 + $0xf] sm:$0xff]
        %v2725 = vld [vmem:[#allocation3 + $0x27] sm:$0xff]
        %v2726 = vld [vmem:[#allocation3 + $0x2f] sm:$0xff]
        %v2727 = vld [vmem:[#allocation3 + $0x47] sm:$0xff]
        %v2728 = vld [vmem:[#allocation3 + $0x4f] sm:$0xff]
        %v2729 = vld [vmem:[#allocation3 + $0x67] sm:$0xff]
        %v2730 = vld [vmem:[#allocation3 + $0x6f] sm:$0xff]
        %v2731 = vld [vmem:[#allocation3 + $0x87] sm:$0xff]
        %v2732 = vld [vmem:[#allocation3 + $0x8f] sm:$0xff]
        %v2733 = vld [vmem:[#allocation3 + $0xa7] sm:$0xff]
        %v2734 = vld [vmem:[#allocation3 + $0xaf] sm:$0xff]
        %v2735 = vld [vmem:[#allocation3 + $0xc7] sm:$0xff]
        %v2736 = vld [vmem:[#allocation3 + $0xcf] sm:$0xff]
        %v2737 = vld [vmem:[#allocation3 + $0xe7] sm:$0xff]
        %v2738 = vld [vmem:[#allocation3 + $0xef] sm:$0xff]
        %v2739 = vld [vmem:[#allocation3 + $0x107] sm:$0xff]
        %v2740 = vld [vmem:[#allocation3 + $0x10f] sm:$0xff]
        %v2741 = vld [vmem:[#allocation3 + $0x127] sm:$0xff]
        %v2742 = vld [vmem:[#allocation3 + $0x12f] sm:$0xff]
        %v2743 = vld [vmem:[#allocation3 + $0x147] sm:$0xff]
        %v2744 = vld [vmem:[#allocation3 + $0x14f] sm:$0xff]
        %v2745 = vld [vmem:[#allocation3 + $0x167] sm:$0xff]
        %v2746 = vld [vmem:[#allocation3 + $0x16f] sm:$0xff]
        %v2747 = vld [vmem:[#allocation3 + $0x187] sm:$0xff]
        %v2748 = vld [vmem:[#allocation3 + $0x18f] sm:$0xff]
        %v2749 = vld [vmem:[#allocation3 + $0x1a7] sm:$0xff]
        %v2750 = vld [vmem:[#allocation3 + $0x1af] sm:$0xff]
        %v2751 = vld [vmem:[#allocation3 + $0x1c7] sm:$0xff]
        %v2752 = vld [vmem:[#allocation3 + $0x1cf] sm:$0xff]
        %v2753 = vld [vmem:[#allocation3 + $0x1e7] sm:$0xff]
        %v2754 = vld [vmem:[#allocation3 + $0x1ef] sm:$0xff]
        %v2755 = vpack.c.bf16 %v2724, %v2723
        %v2756 = vpack.c.bf16 %v2726, %v2725
        %v2757 = vpack.c.bf16 %v2728, %v2727
        %v2758 = vpack.c.bf16 %v2730, %v2729
        %v2759 = vpack.c.bf16 %v2732, %v2731
        %v2760 = vpack.c.bf16 %v2734, %v2733
        %v2761 = vpack.c.bf16 %v2736, %v2735
        %v2762 = vpack.c.bf16 %v2738, %v2737
        %v2763 = vpack.c.bf16 %v2740, %v2739
        %v2764 = vpack.c.bf16 %v2742, %v2741
        %v2765 = vpack.c.bf16 %v2744, %v2743
        %v2766 = vpack.c.bf16 %v2746, %v2745
        %v2767 = vpack.c.bf16 %v2748, %v2747
        %v2768 = vpack.c.bf16 %v2750, %v2749
        %v2769 = vpack.c.bf16 %v2752, %v2751
        %v2770 = vpack.c.bf16 %v2754, %v2753
        %v2771 = vld [vmem:[#allocation9] sm:$0xf]
        %v2772 = vld [vmem:[#allocation9 + $0x4] sm:$0xf]
        %v2773 = vld [vmem:[#allocation9 + $0x8] sm:$0xf]
        %v2774 = vld [vmem:[#allocation9 + $0xc] sm:$0xf]
        %v2775 = vld [vmem:[#allocation3 + $0x8] sm:$0xff]
        %v2776 = vld [vmem:[#allocation3 + $0x10] sm:$0xff]
        %v2777 = vld [vmem:[#allocation3 + $0x28] sm:$0xff]
        %v2778 = vld [vmem:[#allocation3 + $0x30] sm:$0xff]
        %v2779 = vld [vmem:[#allocation3 + $0x48] sm:$0xff]
        %v2780 = vld [vmem:[#allocation3 + $0x50] sm:$0xff]
        %v2781 = vld [vmem:[#allocation3 + $0x68] sm:$0xff]
        %v2782 = vld [vmem:[#allocation3 + $0x70] sm:$0xff]
        %v2783 = vld [vmem:[#allocation3 + $0x88] sm:$0xff]
        %v2784 = vld [vmem:[#allocation3 + $0x90] sm:$0xff]
        %v2785 = vld [vmem:[#allocation3 + $0xa8] sm:$0xff]
        %v2786 = vld [vmem:[#allocation3 + $0xb0] sm:$0xff]
        %v2787 = vld [vmem:[#allocation3 + $0xc8] sm:$0xff]
        %v2788 = vld [vmem:[#allocation3 + $0xd0] sm:$0xff]
        %v2789 = vld [vmem:[#allocation3 + $0xe8] sm:$0xff]
        %v2790 = vld [vmem:[#allocation3 + $0xf0] sm:$0xff]
        %v2791 = vld [vmem:[#allocation3 + $0x108] sm:$0xff]
        %v2792 = vld [vmem:[#allocation3 + $0x110] sm:$0xff]
        %v2793 = vld [vmem:[#allocation3 + $0x128] sm:$0xff]
        %v2794 = vld [vmem:[#allocation3 + $0x130] sm:$0xff]
        %v2795 = vld [vmem:[#allocation3 + $0x148] sm:$0xff]
        %v2796 = vld [vmem:[#allocation3 + $0x150] sm:$0xff]
        %v2797 = vld [vmem:[#allocation3 + $0x168] sm:$0xff]
        %v2798 = vld [vmem:[#allocation3 + $0x170] sm:$0xff]
        %v2799 = vld [vmem:[#allocation3 + $0x188] sm:$0xff]
        %v2800 = vld [vmem:[#allocation3 + $0x190] sm:$0xff]
        %v2801 = vld [vmem:[#allocation3 + $0x1a8] sm:$0xff]
        %v2802 = vld [vmem:[#allocation3 + $0x1b0] sm:$0xff]
        %v2803 = vld [vmem:[#allocation3 + $0x1c8] sm:$0xff]
        %v2804 = vld [vmem:[#allocation3 + $0x1d0] sm:$0xff]
        %v2805 = vld [vmem:[#allocation3 + $0x1e8] sm:$0xff]
        %v2806 = vld [vmem:[#allocation3 + $0x1f0] sm:$0xff]
        %v2807 = vpack.c.bf16 %v2776, %v2775
        %v2808 = vpack.c.bf16 %v2778, %v2777
        %v2809 = vpack.c.bf16 %v2780, %v2779
        %v2810 = vpack.c.bf16 %v2782, %v2781
        %v2811 = vpack.c.bf16 %v2784, %v2783
        %v2812 = vpack.c.bf16 %v2786, %v2785
        %v2813 = vpack.c.bf16 %v2788, %v2787
        %v2814 = vpack.c.bf16 %v2790, %v2789
        %v2815 = vpack.c.bf16 %v2792, %v2791
        %v2816 = vpack.c.bf16 %v2794, %v2793
        %v2817 = vpack.c.bf16 %v2796, %v2795
        %v2818 = vpack.c.bf16 %v2798, %v2797
        %v2819 = vpack.c.bf16 %v2800, %v2799
        %v2820 = vpack.c.bf16 %v2802, %v2801
        %v2821 = vpack.c.bf16 %v2804, %v2803
        %v2822 = vpack.c.bf16 %v2806, %v2805
        %s2823 = scalar_lea.vmem [#allocation9], 16
        %v2824 = vld [vmem:[%s2823] sm:$0xf]
        %v2825 = vld [vmem:[%s2823 + $0x4] sm:$0xf]
        %v2826 = vld [vmem:[%s2823 + $0x8] sm:$0xf]
        %v2827 = vld [vmem:[%s2823 + $0xc] sm:$0xf]
        %v2832 = vunpack.c.l.b16 %v2824
        %v2833 = vunpack.c.l.b16 %v2825
        %v2834 = vunpack.c.l.b16 %v2826
        %v2835 = vunpack.c.l.b16 %v2827
        %v2836 = vpack.c.b16 %v2833, %v2832
        %v2837 = vpack.c.b16 %v2835, %v2834
        %v2841 = vsel %vm333, %v2807, 0
        %v2844 = vsel %vm333, %v2808, 0
        %v2847 = vsel %vm333, %v2809, 0
        %v2850 = vsel %vm333, %v2810, 0
        %v2853 = vsel %vm333, %v2811, 0
        %v2856 = vsel %vm333, %v2812, 0
        %v2859 = vsel %vm333, %v2813, 0
        %v2862 = vsel %vm333, %v2814, 0
        %v2865 = vsel %vm333, %v2815, 0
        %v2868 = vsel %vm333, %v2816, 0
        %v2871 = vsel %vm333, %v2817, 0
        %v2874 = vsel %vm333, %v2818, 0
        %v2877 = vsel %vm333, %v2819, 0
        %v2880 = vsel %vm333, %v2820, 0
        %v2883 = vsel %vm333, %v2821, 0
        %v2886 = vsel %vm333, %v2822, 0
        %2888 = vmatpush.bf16.msra.mxu0 0
        %2889 = vmatpush.bf16.msra.mxu0 0
        %2890 = vmatpush.bf16.msra.mxu0 0
        %2891 = vmatpush.bf16.msra.mxu0 0
        %2892 = vmatpush.bf16.msra.mxu0 0
        %2893 = vmatpush.bf16.msra.mxu0 0
        %2894 = vmatpush.bf16.msra.mxu0 %v2837
        %2895 = vmatpush.bf16.msra.mxu0 %v2836
        %2896 = vmatmul.bf16.gmra.mxu0 %v2841
        %v2897 = vpop.f32.mrf.mxu0
        %v2898 = vadd.f32 0.0, %v2897
        %v2899 = vpop.f32.mrf.mxu0
        %v2900 = vadd.f32 0.0, %v2899
        %2901 = vmatmul.bf16.gmra.mxu0 %v2844
        %v2902 = vpop.f32.mrf.mxu0
        %v2903 = vadd.f32 0.0, %v2902
        %v2904 = vpop.f32.mrf.mxu0
        %v2905 = vadd.f32 0.0, %v2904
        %2906 = vmatmul.bf16.gmra.mxu0 %v2847
        %v2907 = vpop.f32.mrf.mxu0
        %v2908 = vadd.f32 0.0, %v2907
        %v2909 = vpop.f32.mrf.mxu0
        %v2910 = vadd.f32 0.0, %v2909
        %2911 = vmatmul.bf16.gmra.mxu0 %v2850
        %v2912 = vpop.f32.mrf.mxu0
        %v2913 = vadd.f32 0.0, %v2912
        %v2914 = vpop.f32.mrf.mxu0
        %v2915 = vadd.f32 0.0, %v2914
        %2916 = vmatmul.bf16.gmra.mxu0 %v2853
        %v2917 = vpop.f32.mrf.mxu0
        %v2918 = vadd.f32 0.0, %v2917
        %v2919 = vpop.f32.mrf.mxu0
        %v2920 = vadd.f32 0.0, %v2919
        %2921 = vmatmul.bf16.gmra.mxu0 %v2856
        %v2922 = vpop.f32.mrf.mxu0
        %v2923 = vadd.f32 0.0, %v2922
        %v2924 = vpop.f32.mrf.mxu0
        %v2925 = vadd.f32 0.0, %v2924
        %2926 = vmatmul.bf16.gmra.mxu0 %v2859
        %v2927 = vpop.f32.mrf.mxu0
        %v2928 = vadd.f32 0.0, %v2927
        %v2929 = vpop.f32.mrf.mxu0
        %v2930 = vadd.f32 0.0, %v2929
        %2931 = vmatmul.bf16.gmra.mxu0 %v2862
        %v2932 = vpop.f32.mrf.mxu0
        %v2933 = vadd.f32 0.0, %v2932
        %v2934 = vpop.f32.mrf.mxu0
        %v2935 = vadd.f32 0.0, %v2934
        %2936 = vmatmul.bf16.gmra.mxu0 %v2865
        %v2937 = vpop.f32.mrf.mxu0
        %v2938 = vadd.f32 0.0, %v2937
        %v2939 = vpop.f32.mrf.mxu0
        %v2940 = vadd.f32 0.0, %v2939
        %2941 = vmatmul.bf16.gmra.mxu0 %v2868
        %v2942 = vpop.f32.mrf.mxu0
        %v2943 = vadd.f32 0.0, %v2942
        %v2944 = vpop.f32.mrf.mxu0
        %v2945 = vadd.f32 0.0, %v2944
        %2946 = vmatmul.bf16.gmra.mxu0 %v2871
        %v2947 = vpop.f32.mrf.mxu0
        %v2948 = vadd.f32 0.0, %v2947
        %v2949 = vpop.f32.mrf.mxu0
        %v2950 = vadd.f32 0.0, %v2949
        %2951 = vmatmul.bf16.gmra.mxu0 %v2874
        %v2952 = vpop.f32.mrf.mxu0
        %v2953 = vadd.f32 0.0, %v2952
        %v2954 = vpop.f32.mrf.mxu0
        %v2955 = vadd.f32 0.0, %v2954
        %2956 = vmatmul.bf16.gmra.mxu0 %v2877
        %v2957 = vpop.f32.mrf.mxu0
        %v2958 = vadd.f32 0.0, %v2957
        %v2959 = vpop.f32.mrf.mxu0
        %v2960 = vadd.f32 0.0, %v2959
        %2961 = vmatmul.bf16.gmra.mxu0 %v2880
        %v2962 = vpop.f32.mrf.mxu0
        %v2963 = vadd.f32 0.0, %v2962
        %v2964 = vpop.f32.mrf.mxu0
        %v2965 = vadd.f32 0.0, %v2964
        %2966 = vmatmul.bf16.gmra.mxu0 %v2883
        %v2967 = vpop.f32.mrf.mxu0
        %v2968 = vadd.f32 0.0, %v2967
        %v2969 = vpop.f32.mrf.mxu0
        %v2970 = vadd.f32 0.0, %v2969
        %2971 = vmatmul.bf16.gmra.mxu0 %v2886
        %v2972 = vpop.f32.mrf.mxu0
        %v2973 = vadd.f32 0.0, %v2972
        %v2974 = vpop.f32.mrf.mxu0
        %v2975 = vadd.f32 0.0, %v2974
        %2976 = vdwg.mxu0
        %v2981 = vunpack.c.l.b16 %v2771
        %v2982 = vunpack.c.l.b16 %v2772
        %v2983 = vunpack.c.l.b16 %v2773
        %v2984 = vunpack.c.l.b16 %v2774
        %v2985 = vpack.c.b16 %v2982, %v2981
        %v2986 = vpack.c.b16 %v2984, %v2983
        %v2990 = vsel %vm333, %v2755, 0
        %v2993 = vsel %vm333, %v2756, 0
        %v2996 = vsel %vm333, %v2757, 0
        %v2999 = vsel %vm333, %v2758, 0
        %v3002 = vsel %vm333, %v2759, 0
        %v3005 = vsel %vm333, %v2760, 0
        %v3008 = vsel %vm333, %v2761, 0
        %v3011 = vsel %vm333, %v2762, 0
        %v3014 = vsel %vm333, %v2763, 0
        %v3017 = vsel %vm333, %v2764, 0
        %v3020 = vsel %vm333, %v2765, 0
        %v3023 = vsel %vm333, %v2766, 0
        %v3026 = vsel %vm333, %v2767, 0
        %v3029 = vsel %vm333, %v2768, 0
        %v3032 = vsel %vm333, %v2769, 0
        %v3035 = vsel %vm333, %v2770, 0
        %3037 = vmatpush.bf16.msra.mxu0 0
        %3038 = vmatpush.bf16.msra.mxu0 0
        %3039 = vmatpush.bf16.msra.mxu0 0
        %3040 = vmatpush.bf16.msra.mxu0 0
        %3041 = vmatpush.bf16.msra.mxu0 0
        %3042 = vmatpush.bf16.msra.mxu0 0
        %3043 = vmatpush.bf16.msra.mxu0 %v2986
        %3044 = vmatpush.bf16.msra.mxu0 %v2985
        %3045 = vmatmul.bf16.gmra.mxu0 %v2990
        %v3046 = vpop.f32.mrf.mxu0
        %v3047 = vadd.f32 %v2898, %v3046
        %v3048 = vpop.f32.mrf.mxu0
        %v3049 = vadd.f32 %v2900, %v3048
        %3050 = vmatmul.bf16.gmra.mxu0 %v2993
        %v3051 = vpop.f32.mrf.mxu0
        %v3052 = vadd.f32 %v2903, %v3051
        %v3053 = vpop.f32.mrf.mxu0
        %v3054 = vadd.f32 %v2905, %v3053
        %3055 = vmatmul.bf16.gmra.mxu0 %v2996
        %v3056 = vpop.f32.mrf.mxu0
        %v3057 = vadd.f32 %v2908, %v3056
        %v3058 = vpop.f32.mrf.mxu0
        %v3059 = vadd.f32 %v2910, %v3058
        %3060 = vmatmul.bf16.gmra.mxu0 %v2999
        %v3061 = vpop.f32.mrf.mxu0
        %v3062 = vadd.f32 %v2913, %v3061
        %v3063 = vpop.f32.mrf.mxu0
        %v3064 = vadd.f32 %v2915, %v3063
        %3065 = vmatmul.bf16.gmra.mxu0 %v3002
        %v3066 = vpop.f32.mrf.mxu0
        %v3067 = vadd.f32 %v2918, %v3066
        %v3068 = vpop.f32.mrf.mxu0
        %v3069 = vadd.f32 %v2920, %v3068
        %3070 = vmatmul.bf16.gmra.mxu0 %v3005
        %v3071 = vpop.f32.mrf.mxu0
        %v3072 = vadd.f32 %v2923, %v3071
        %v3073 = vpop.f32.mrf.mxu0
        %v3074 = vadd.f32 %v2925, %v3073
        %3075 = vmatmul.bf16.gmra.mxu0 %v3008
        %v3076 = vpop.f32.mrf.mxu0
        %v3077 = vadd.f32 %v2928, %v3076
        %v3078 = vpop.f32.mrf.mxu0
        %v3079 = vadd.f32 %v2930, %v3078
        %3080 = vmatmul.bf16.gmra.mxu0 %v3011
        %v3081 = vpop.f32.mrf.mxu0
        %v3082 = vadd.f32 %v2933, %v3081
        %v3083 = vpop.f32.mrf.mxu0
        %v3084 = vadd.f32 %v2935, %v3083
        %3085 = vmatmul.bf16.gmra.mxu0 %v3014
        %v3086 = vpop.f32.mrf.mxu0
        %v3087 = vadd.f32 %v2938, %v3086
        %v3088 = vpop.f32.mrf.mxu0
        %v3089 = vadd.f32 %v2940, %v3088
        %3090 = vmatmul.bf16.gmra.mxu0 %v3017
        %v3091 = vpop.f32.mrf.mxu0
        %v3092 = vadd.f32 %v2943, %v3091
        %v3093 = vpop.f32.mrf.mxu0
        %v3094 = vadd.f32 %v2945, %v3093
        %3095 = vmatmul.bf16.gmra.mxu0 %v3020
        %v3096 = vpop.f32.mrf.mxu0
        %v3097 = vadd.f32 %v2948, %v3096
        %v3098 = vpop.f32.mrf.mxu0
        %v3099 = vadd.f32 %v2950, %v3098
        %3100 = vmatmul.bf16.gmra.mxu0 %v3023
        %v3101 = vpop.f32.mrf.mxu0
        %v3102 = vadd.f32 %v2953, %v3101
        %v3103 = vpop.f32.mrf.mxu0
        %v3104 = vadd.f32 %v2955, %v3103
        %3105 = vmatmul.bf16.gmra.mxu0 %v3026
        %v3106 = vpop.f32.mrf.mxu0
        %v3107 = vadd.f32 %v2958, %v3106
        %v3108 = vpop.f32.mrf.mxu0
        %v3109 = vadd.f32 %v2960, %v3108
        %3110 = vmatmul.bf16.gmra.mxu0 %v3029
        %v3111 = vpop.f32.mrf.mxu0
        %v3112 = vadd.f32 %v2963, %v3111
        %v3113 = vpop.f32.mrf.mxu0
        %v3114 = vadd.f32 %v2965, %v3113
        %3115 = vmatmul.bf16.gmra.mxu0 %v3032
        %v3116 = vpop.f32.mrf.mxu0
        %v3117 = vadd.f32 %v2968, %v3116
        %v3118 = vpop.f32.mrf.mxu0
        %v3119 = vadd.f32 %v2970, %v3118
        %3120 = vmatmul.bf16.gmra.mxu0 %v3035
        %v3121 = vpop.f32.mrf.mxu0
        %v3122 = vadd.f32 %v2973, %v3121
        %v3123 = vpop.f32.mrf.mxu0
        %v3124 = vadd.f32 %v2975, %v3123
        %3125 = vdwg.mxu0
        %v3126 = vld [vmem:[#allocation3 + $0x9] sm:$0xff]
        %v3127 = vld [vmem:[#allocation3 + $0x11] sm:$0xff]
        %v3128 = vld [vmem:[#allocation3 + $0x29] sm:$0xff]
        %v3129 = vld [vmem:[#allocation3 + $0x31] sm:$0xff]
        %v3130 = vld [vmem:[#allocation3 + $0x49] sm:$0xff]
        %v3131 = vld [vmem:[#allocation3 + $0x51] sm:$0xff]
        %v3132 = vld [vmem:[#allocation3 + $0x69] sm:$0xff]
        %v3133 = vld [vmem:[#allocation3 + $0x71] sm:$0xff]
        %v3134 = vld [vmem:[#allocation3 + $0x89] sm:$0xff]
        %v3135 = vld [vmem:[#allocation3 + $0x91] sm:$0xff]
        %v3136 = vld [vmem:[#allocation3 + $0xa9] sm:$0xff]
        %v3137 = vld [vmem:[#allocation3 + $0xb1] sm:$0xff]
        %v3138 = vld [vmem:[#allocation3 + $0xc9] sm:$0xff]
        %v3139 = vld [vmem:[#allocation3 + $0xd1] sm:$0xff]
        %v3140 = vld [vmem:[#allocation3 + $0xe9] sm:$0xff]
        %v3141 = vld [vmem:[#allocation3 + $0xf1] sm:$0xff]
        %v3142 = vld [vmem:[#allocation3 + $0x109] sm:$0xff]
        %v3143 = vld [vmem:[#allocation3 + $0x111] sm:$0xff]
        %v3144 = vld [vmem:[#allocation3 + $0x129] sm:$0xff]
        %v3145 = vld [vmem:[#allocation3 + $0x131] sm:$0xff]
        %v3146 = vld [vmem:[#allocation3 + $0x149] sm:$0xff]
        %v3147 = vld [vmem:[#allocation3 + $0x151] sm:$0xff]
        %v3148 = vld [vmem:[#allocation3 + $0x169] sm:$0xff]
        %v3149 = vld [vmem:[#allocation3 + $0x171] sm:$0xff]
        %v3150 = vld [vmem:[#allocation3 + $0x189] sm:$0xff]
        %v3151 = vld [vmem:[#allocation3 + $0x191] sm:$0xff]
        %v3152 = vld [vmem:[#allocation3 + $0x1a9] sm:$0xff]
        %v3153 = vld [vmem:[#allocation3 + $0x1b1] sm:$0xff]
        %v3154 = vld [vmem:[#allocation3 + $0x1c9] sm:$0xff]
        %v3155 = vld [vmem:[#allocation3 + $0x1d1] sm:$0xff]
        %v3156 = vld [vmem:[#allocation3 + $0x1e9] sm:$0xff]
        %v3157 = vld [vmem:[#allocation3 + $0x1f1] sm:$0xff]
        %v3158 = vpack.c.bf16 %v3127, %v3126
        %v3159 = vpack.c.bf16 %v3129, %v3128
        %v3160 = vpack.c.bf16 %v3131, %v3130
        %v3161 = vpack.c.bf16 %v3133, %v3132
        %v3162 = vpack.c.bf16 %v3135, %v3134
        %v3163 = vpack.c.bf16 %v3137, %v3136
        %v3164 = vpack.c.bf16 %v3139, %v3138
        %v3165 = vpack.c.bf16 %v3141, %v3140
        %v3166 = vpack.c.bf16 %v3143, %v3142
        %v3167 = vpack.c.bf16 %v3145, %v3144
        %v3168 = vpack.c.bf16 %v3147, %v3146
        %v3169 = vpack.c.bf16 %v3149, %v3148
        %v3170 = vpack.c.bf16 %v3151, %v3150
        %v3171 = vpack.c.bf16 %v3153, %v3152
        %v3172 = vpack.c.bf16 %v3155, %v3154
        %v3173 = vpack.c.bf16 %v3157, %v3156
        %s3174 = scalar_lea.vmem [#allocation9], 32
        %v3175 = vld [vmem:[%s3174] sm:$0xf]
        %v3176 = vld [vmem:[%s3174 + $0x4] sm:$0xf]
        %v3177 = vld [vmem:[%s3174 + $0x8] sm:$0xf]
        %v3178 = vld [vmem:[%s3174 + $0xc] sm:$0xf]
        %v3183 = vunpack.c.l.b16 %v3175
        %v3184 = vunpack.c.l.b16 %v3176
        %v3185 = vunpack.c.l.b16 %v3177
        %v3186 = vunpack.c.l.b16 %v3178
        %v3187 = vpack.c.b16 %v3184, %v3183
        %v3188 = vpack.c.b16 %v3186, %v3185
        %v3192 = vsel %vm333, %v3158, 0
        %v3195 = vsel %vm333, %v3159, 0
        %v3198 = vsel %vm333, %v3160, 0
        %v3201 = vsel %vm333, %v3161, 0
        %v3204 = vsel %vm333, %v3162, 0
        %v3207 = vsel %vm333, %v3163, 0
        %v3210 = vsel %vm333, %v3164, 0
        %v3213 = vsel %vm333, %v3165, 0
        %v3216 = vsel %vm333, %v3166, 0
        %v3219 = vsel %vm333, %v3167, 0
        %v3222 = vsel %vm333, %v3168, 0
        %v3225 = vsel %vm333, %v3169, 0
        %v3228 = vsel %vm333, %v3170, 0
        %v3231 = vsel %vm333, %v3171, 0
        %v3234 = vsel %vm333, %v3172, 0
        %v3237 = vsel %vm333, %v3173, 0
        %3239 = vmatpush.bf16.msra.mxu0 0
        %3240 = vmatpush.bf16.msra.mxu0 0
        %3241 = vmatpush.bf16.msra.mxu0 0
        %3242 = vmatpush.bf16.msra.mxu0 0
        %3243 = vmatpush.bf16.msra.mxu0 0
        %3244 = vmatpush.bf16.msra.mxu0 0
        %3245 = vmatpush.bf16.msra.mxu0 %v3188
        %3246 = vmatpush.bf16.msra.mxu0 %v3187
        %3247 = vmatmul.bf16.gmra.mxu0 %v3192
        %v3248 = vpop.f32.mrf.mxu0
        %v3249 = vadd.f32 0.0, %v3248
        %v3250 = vpop.f32.mrf.mxu0
        %v3251 = vadd.f32 0.0, %v3250
        %3252 = vmatmul.bf16.gmra.mxu0 %v3195
        %v3253 = vpop.f32.mrf.mxu0
        %v3254 = vadd.f32 0.0, %v3253
        %v3255 = vpop.f32.mrf.mxu0
        %v3256 = vadd.f32 0.0, %v3255
        %3257 = vmatmul.bf16.gmra.mxu0 %v3198
        %v3258 = vpop.f32.mrf.mxu0
        %v3259 = vadd.f32 0.0, %v3258
        %v3260 = vpop.f32.mrf.mxu0
        %v3261 = vadd.f32 0.0, %v3260
        %3262 = vmatmul.bf16.gmra.mxu0 %v3201
        %v3263 = vpop.f32.mrf.mxu0
        %v3264 = vadd.f32 0.0, %v3263
        %v3265 = vpop.f32.mrf.mxu0
        %v3266 = vadd.f32 0.0, %v3265
        %3267 = vmatmul.bf16.gmra.mxu0 %v3204
        %v3268 = vpop.f32.mrf.mxu0
        %v3269 = vadd.f32 0.0, %v3268
        %v3270 = vpop.f32.mrf.mxu0
        %v3271 = vadd.f32 0.0, %v3270
        %3272 = vmatmul.bf16.gmra.mxu0 %v3207
        %v3273 = vpop.f32.mrf.mxu0
        %v3274 = vadd.f32 0.0, %v3273
        %v3275 = vpop.f32.mrf.mxu0
        %v3276 = vadd.f32 0.0, %v3275
        %3277 = vmatmul.bf16.gmra.mxu0 %v3210
        %v3278 = vpop.f32.mrf.mxu0
        %v3279 = vadd.f32 0.0, %v3278
        %v3280 = vpop.f32.mrf.mxu0
        %v3281 = vadd.f32 0.0, %v3280
        %3282 = vmatmul.bf16.gmra.mxu0 %v3213
        %v3283 = vpop.f32.mrf.mxu0
        %v3284 = vadd.f32 0.0, %v3283
        %v3285 = vpop.f32.mrf.mxu0
        %v3286 = vadd.f32 0.0, %v3285
        %3287 = vmatmul.bf16.gmra.mxu0 %v3216
        %v3288 = vpop.f32.mrf.mxu0
        %v3289 = vadd.f32 0.0, %v3288
        %v3290 = vpop.f32.mrf.mxu0
        %v3291 = vadd.f32 0.0, %v3290
        %3292 = vmatmul.bf16.gmra.mxu0 %v3219
        %v3293 = vpop.f32.mrf.mxu0
        %v3294 = vadd.f32 0.0, %v3293
        %v3295 = vpop.f32.mrf.mxu0
        %v3296 = vadd.f32 0.0, %v3295
        %3297 = vmatmul.bf16.gmra.mxu0 %v3222
        %v3298 = vpop.f32.mrf.mxu0
        %v3299 = vadd.f32 0.0, %v3298
        %v3300 = vpop.f32.mrf.mxu0
        %v3301 = vadd.f32 0.0, %v3300
        %3302 = vmatmul.bf16.gmra.mxu0 %v3225
        %v3303 = vpop.f32.mrf.mxu0
        %v3304 = vadd.f32 0.0, %v3303
        %v3305 = vpop.f32.mrf.mxu0
        %v3306 = vadd.f32 0.0, %v3305
        %3307 = vmatmul.bf16.gmra.mxu0 %v3228
        %v3308 = vpop.f32.mrf.mxu0
        %v3309 = vadd.f32 0.0, %v3308
        %v3310 = vpop.f32.mrf.mxu0
        %v3311 = vadd.f32 0.0, %v3310
        %3312 = vmatmul.bf16.gmra.mxu0 %v3231
        %v3313 = vpop.f32.mrf.mxu0
        %v3314 = vadd.f32 0.0, %v3313
        %v3315 = vpop.f32.mrf.mxu0
        %v3316 = vadd.f32 0.0, %v3315
        %3317 = vmatmul.bf16.gmra.mxu0 %v3234
        %v3318 = vpop.f32.mrf.mxu0
        %v3319 = vadd.f32 0.0, %v3318
        %v3320 = vpop.f32.mrf.mxu0
        %v3321 = vadd.f32 0.0, %v3320
        %3322 = vmatmul.bf16.gmra.mxu0 %v3237
        %v3323 = vpop.f32.mrf.mxu0
        %v3324 = vadd.f32 0.0, %v3323
        %v3325 = vpop.f32.mrf.mxu0
        %v3326 = vadd.f32 0.0, %v3325
        %3327 = vdwg.mxu0
        %v3328 = vadd.f32 %v3047, %v3249
        %v3329 = vadd.f32 %v3049, %v3251
        %v3330 = vadd.f32 %v3052, %v3254
        %v3331 = vadd.f32 %v3054, %v3256
        %v3332 = vadd.f32 %v3057, %v3259
        %v3333 = vadd.f32 %v3059, %v3261
        %v3334 = vadd.f32 %v3062, %v3264
        %v3335 = vadd.f32 %v3064, %v3266
        %v3336 = vadd.f32 %v3067, %v3269
        %v3337 = vadd.f32 %v3069, %v3271
        %v3338 = vadd.f32 %v3072, %v3274
        %v3339 = vadd.f32 %v3074, %v3276
        %v3340 = vadd.f32 %v3077, %v3279
        %v3341 = vadd.f32 %v3079, %v3281
        %v3342 = vadd.f32 %v3082, %v3284
        %v3343 = vadd.f32 %v3084, %v3286
        %v3344 = vadd.f32 %v3087, %v3289
        %v3345 = vadd.f32 %v3089, %v3291
        %v3346 = vadd.f32 %v3092, %v3294
        %v3347 = vadd.f32 %v3094, %v3296
        %v3348 = vadd.f32 %v3097, %v3299
        %v3349 = vadd.f32 %v3099, %v3301
        %v3350 = vadd.f32 %v3102, %v3304
        %v3351 = vadd.f32 %v3104, %v3306
        %v3352 = vadd.f32 %v3107, %v3309
        %v3353 = vadd.f32 %v3109, %v3311
        %v3354 = vadd.f32 %v3112, %v3314
        %v3355 = vadd.f32 %v3114, %v3316
        %v3356 = vadd.f32 %v3117, %v3319
        %v3357 = vadd.f32 %v3119, %v3321
        %v3358 = vadd.f32 %v3122, %v3324
        %v3359 = vadd.f32 %v3124, %v3326
        %v3360 = vld [vmem:[%s2690 + $0x7] sm:$0xff]
        %v3361 = vld [vmem:[%s2690 + $0xf] sm:$0xff]
        %v3362 = vld [vmem:[%s2690 + $0x27] sm:$0xff]
        %v3363 = vld [vmem:[%s2690 + $0x2f] sm:$0xff]
        %v3364 = vld [vmem:[%s2690 + $0x47] sm:$0xff]
        %v3365 = vld [vmem:[%s2690 + $0x4f] sm:$0xff]
        %v3366 = vld [vmem:[%s2690 + $0x67] sm:$0xff]
        %v3367 = vld [vmem:[%s2690 + $0x6f] sm:$0xff]
        %v3368 = vld [vmem:[%s2690 + $0x87] sm:$0xff]
        %v3369 = vld [vmem:[%s2690 + $0x8f] sm:$0xff]
        %v3370 = vld [vmem:[%s2690 + $0xa7] sm:$0xff]
        %v3371 = vld [vmem:[%s2690 + $0xaf] sm:$0xff]
        %v3372 = vld [vmem:[%s2690 + $0xc7] sm:$0xff]
        %v3373 = vld [vmem:[%s2690 + $0xcf] sm:$0xff]
        %v3374 = vld [vmem:[%s2690 + $0xe7] sm:$0xff]
        %v3375 = vld [vmem:[%s2690 + $0xef] sm:$0xff]
        %v3376 = vld [vmem:[%s2690 + $0x107] sm:$0xff]
        %v3377 = vld [vmem:[%s2690 + $0x10f] sm:$0xff]
        %v3378 = vld [vmem:[%s2690 + $0x127] sm:$0xff]
        %v3379 = vld [vmem:[%s2690 + $0x12f] sm:$0xff]
        %v3380 = vld [vmem:[%s2690 + $0x147] sm:$0xff]
        %v3381 = vld [vmem:[%s2690 + $0x14f] sm:$0xff]
        %v3382 = vld [vmem:[%s2690 + $0x167] sm:$0xff]
        %v3383 = vld [vmem:[%s2690 + $0x16f] sm:$0xff]
        %v3384 = vld [vmem:[%s2690 + $0x187] sm:$0xff]
        %v3385 = vld [vmem:[%s2690 + $0x18f] sm:$0xff]
        %v3386 = vld [vmem:[%s2690 + $0x1a7] sm:$0xff]
        %v3387 = vld [vmem:[%s2690 + $0x1af] sm:$0xff]
        %v3388 = vld [vmem:[%s2690 + $0x1c7] sm:$0xff]
        %v3389 = vld [vmem:[%s2690 + $0x1cf] sm:$0xff]
        %v3390 = vld [vmem:[%s2690 + $0x1e7] sm:$0xff]
        %v3391 = vld [vmem:[%s2690 + $0x1ef] sm:$0xff]
        %v3392 = vpack.c.bf16 %v3361, %v3360
        %v3393 = vpack.c.bf16 %v3363, %v3362
        %v3394 = vpack.c.bf16 %v3365, %v3364
        %v3395 = vpack.c.bf16 %v3367, %v3366
        %v3396 = vpack.c.bf16 %v3369, %v3368
        %v3397 = vpack.c.bf16 %v3371, %v3370
        %v3398 = vpack.c.bf16 %v3373, %v3372
        %v3399 = vpack.c.bf16 %v3375, %v3374
        %v3400 = vpack.c.bf16 %v3377, %v3376
        %v3401 = vpack.c.bf16 %v3379, %v3378
        %v3402 = vpack.c.bf16 %v3381, %v3380
        %v3403 = vpack.c.bf16 %v3383, %v3382
        %v3404 = vpack.c.bf16 %v3385, %v3384
        %v3405 = vpack.c.bf16 %v3387, %v3386
        %v3406 = vpack.c.bf16 %v3389, %v3388
        %v3407 = vpack.c.bf16 %v3391, %v3390
        %s3408 = scalar_lea.vmem [#allocation9], 48
        %v3409 = vld [vmem:[%s3408] sm:$0xf]
        %v3410 = vld [vmem:[%s3408 + $0x4] sm:$0xf]
        %v3411 = vld [vmem:[%s3408 + $0x8] sm:$0xf]
        %v3412 = vld [vmem:[%s3408 + $0xc] sm:$0xf]
        %v3417 = vunpack.c.l.b16 %v3409
        %v3418 = vunpack.c.l.b16 %v3410
        %v3419 = vunpack.c.l.b16 %v3411
        %v3420 = vunpack.c.l.b16 %v3412
        %v3421 = vpack.c.b16 %v3418, %v3417
        %v3422 = vpack.c.b16 %v3420, %v3419
        %v3426 = vsel %vm333, %v3392, 0
        %v3429 = vsel %vm333, %v3393, 0
        %v3432 = vsel %vm333, %v3394, 0
        %v3435 = vsel %vm333, %v3395, 0
        %v3438 = vsel %vm333, %v3396, 0
        %v3441 = vsel %vm333, %v3397, 0
        %v3444 = vsel %vm333, %v3398, 0
        %v3447 = vsel %vm333, %v3399, 0
        %v3450 = vsel %vm333, %v3400, 0
        %v3453 = vsel %vm333, %v3401, 0
        %v3456 = vsel %vm333, %v3402, 0
        %v3459 = vsel %vm333, %v3403, 0
        %v3462 = vsel %vm333, %v3404, 0
        %v3465 = vsel %vm333, %v3405, 0
        %v3468 = vsel %vm333, %v3406, 0
        %v3471 = vsel %vm333, %v3407, 0
        %3473 = vmatpush.bf16.msra.mxu0 0
        %3474 = vmatpush.bf16.msra.mxu0 0
        %3475 = vmatpush.bf16.msra.mxu0 0
        %3476 = vmatpush.bf16.msra.mxu0 0
        %3477 = vmatpush.bf16.msra.mxu0 0
        %3478 = vmatpush.bf16.msra.mxu0 0
        %3479 = vmatpush.bf16.msra.mxu0 %v3422
        %3480 = vmatpush.bf16.msra.mxu0 %v3421
        %3481 = vmatmul.bf16.gmra.mxu0 %v3426
        %v3482 = vpop.f32.mrf.mxu0
        %v3483 = vadd.f32 0.0, %v3482
        %v3484 = vpop.f32.mrf.mxu0
        %v3485 = vadd.f32 0.0, %v3484
        %3486 = vmatmul.bf16.gmra.mxu0 %v3429
        %v3487 = vpop.f32.mrf.mxu0
        %v3488 = vadd.f32 0.0, %v3487
        %v3489 = vpop.f32.mrf.mxu0
        %v3490 = vadd.f32 0.0, %v3489
        %3491 = vmatmul.bf16.gmra.mxu0 %v3432
        %v3492 = vpop.f32.mrf.mxu0
        %v3493 = vadd.f32 0.0, %v3492
        %v3494 = vpop.f32.mrf.mxu0
        %v3495 = vadd.f32 0.0, %v3494
        %3496 = vmatmul.bf16.gmra.mxu0 %v3435
        %v3497 = vpop.f32.mrf.mxu0
        %v3498 = vadd.f32 0.0, %v3497
        %v3499 = vpop.f32.mrf.mxu0
        %v3500 = vadd.f32 0.0, %v3499
        %3501 = vmatmul.bf16.gmra.mxu0 %v3438
        %v3502 = vpop.f32.mrf.mxu0
        %v3503 = vadd.f32 0.0, %v3502
        %v3504 = vpop.f32.mrf.mxu0
        %v3505 = vadd.f32 0.0, %v3504
        %3506 = vmatmul.bf16.gmra.mxu0 %v3441
        %v3507 = vpop.f32.mrf.mxu0
        %v3508 = vadd.f32 0.0, %v3507
        %v3509 = vpop.f32.mrf.mxu0
        %v3510 = vadd.f32 0.0, %v3509
        %3511 = vmatmul.bf16.gmra.mxu0 %v3444
        %v3512 = vpop.f32.mrf.mxu0
        %v3513 = vadd.f32 0.0, %v3512
        %v3514 = vpop.f32.mrf.mxu0
        %v3515 = vadd.f32 0.0, %v3514
        %3516 = vmatmul.bf16.gmra.mxu0 %v3447
        %v3517 = vpop.f32.mrf.mxu0
        %v3518 = vadd.f32 0.0, %v3517
        %v3519 = vpop.f32.mrf.mxu0
        %v3520 = vadd.f32 0.0, %v3519
        %3521 = vmatmul.bf16.gmra.mxu0 %v3450
        %v3522 = vpop.f32.mrf.mxu0
        %v3523 = vadd.f32 0.0, %v3522
        %v3524 = vpop.f32.mrf.mxu0
        %v3525 = vadd.f32 0.0, %v3524
        %3526 = vmatmul.bf16.gmra.mxu0 %v3453
        %v3527 = vpop.f32.mrf.mxu0
        %v3528 = vadd.f32 0.0, %v3527
        %v3529 = vpop.f32.mrf.mxu0
        %v3530 = vadd.f32 0.0, %v3529
        %3531 = vmatmul.bf16.gmra.mxu0 %v3456
        %v3532 = vpop.f32.mrf.mxu0
        %v3533 = vadd.f32 0.0, %v3532
        %v3534 = vpop.f32.mrf.mxu0
        %v3535 = vadd.f32 0.0, %v3534
        %3536 = vmatmul.bf16.gmra.mxu0 %v3459
        %v3537 = vpop.f32.mrf.mxu0
        %v3538 = vadd.f32 0.0, %v3537
        %v3539 = vpop.f32.mrf.mxu0
        %v3540 = vadd.f32 0.0, %v3539
        %3541 = vmatmul.bf16.gmra.mxu0 %v3462
        %v3542 = vpop.f32.mrf.mxu0
        %v3543 = vadd.f32 0.0, %v3542
        %v3544 = vpop.f32.mrf.mxu0
        %v3545 = vadd.f32 0.0, %v3544
        %3546 = vmatmul.bf16.gmra.mxu0 %v3465
        %v3547 = vpop.f32.mrf.mxu0
        %v3548 = vadd.f32 0.0, %v3547
        %v3549 = vpop.f32.mrf.mxu0
        %v3550 = vadd.f32 0.0, %v3549
        %3551 = vmatmul.bf16.gmra.mxu0 %v3468
        %v3552 = vpop.f32.mrf.mxu0
        %v3553 = vadd.f32 0.0, %v3552
        %v3554 = vpop.f32.mrf.mxu0
        %v3555 = vadd.f32 0.0, %v3554
        %3556 = vmatmul.bf16.gmra.mxu0 %v3471
        %v3557 = vpop.f32.mrf.mxu0
        %v3558 = vadd.f32 0.0, %v3557
        %v3559 = vpop.f32.mrf.mxu0
        %v3560 = vadd.f32 0.0, %v3559
        %3561 = vdwg.mxu0
        %v3562 = vadd.f32 %v3328, %v3483
        %v3563 = vadd.f32 %v3329, %v3485
        %v3564 = vadd.f32 %v3330, %v3488
        %v3565 = vadd.f32 %v3331, %v3490
        %v3566 = vadd.f32 %v3332, %v3493
        %v3567 = vadd.f32 %v3333, %v3495
        %v3568 = vadd.f32 %v3334, %v3498
        %v3569 = vadd.f32 %v3335, %v3500
        %v3570 = vadd.f32 %v3336, %v3503
        %v3571 = vadd.f32 %v3337, %v3505
        %v3572 = vadd.f32 %v3338, %v3508
        %v3573 = vadd.f32 %v3339, %v3510
        %v3574 = vadd.f32 %v3340, %v3513
        %v3575 = vadd.f32 %v3341, %v3515
        %v3576 = vadd.f32 %v3342, %v3518
        %v3577 = vadd.f32 %v3343, %v3520
        %v3578 = vadd.f32 %v3344, %v3523
        %v3579 = vadd.f32 %v3345, %v3525
        %v3580 = vadd.f32 %v3346, %v3528
        %v3581 = vadd.f32 %v3347, %v3530
        %v3582 = vadd.f32 %v3348, %v3533
        %v3583 = vadd.f32 %v3349, %v3535
        %v3584 = vadd.f32 %v3350, %v3538
        %v3585 = vadd.f32 %v3351, %v3540
        %v3586 = vadd.f32 %v3352, %v3543
        %v3587 = vadd.f32 %v3353, %v3545
        %v3588 = vadd.f32 %v3354, %v3548
        %v3589 = vadd.f32 %v3355, %v3550
        %v3590 = vadd.f32 %v3356, %v3553
        %v3591 = vadd.f32 %v3357, %v3555
        %v3592 = vadd.f32 %v3358, %v3558
        %v3593 = vadd.f32 %v3359, %v3560
        %v3594 = vld [vmem:[%s2690 + $0x8] sm:$0xff]
        %v3595 = vld [vmem:[%s2690 + $0x10] sm:$0xff]
        %v3596 = vld [vmem:[%s2690 + $0x28] sm:$0xff]
        %v3597 = vld [vmem:[%s2690 + $0x30] sm:$0xff]
        %v3598 = vld [vmem:[%s2690 + $0x48] sm:$0xff]
        %v3599 = vld [vmem:[%s2690 + $0x50] sm:$0xff]
        %v3600 = vld [vmem:[%s2690 + $0x68] sm:$0xff]
        %v3601 = vld [vmem:[%s2690 + $0x70] sm:$0xff]
        %v3602 = vld [vmem:[%s2690 + $0x88] sm:$0xff]
        %v3603 = vld [vmem:[%s2690 + $0x90] sm:$0xff]
        %v3604 = vld [vmem:[%s2690 + $0xa8] sm:$0xff]
        %v3605 = vld [vmem:[%s2690 + $0xb0] sm:$0xff]
        %v3606 = vld [vmem:[%s2690 + $0xc8] sm:$0xff]
        %v3607 = vld [vmem:[%s2690 + $0xd0] sm:$0xff]
        %v3608 = vld [vmem:[%s2690 + $0xe8] sm:$0xff]
        %v3609 = vld [vmem:[%s2690 + $0xf0] sm:$0xff]
        %v3610 = vld [vmem:[%s2690 + $0x108] sm:$0xff]
        %v3611 = vld [vmem:[%s2690 + $0x110] sm:$0xff]
        %v3612 = vld [vmem:[%s2690 + $0x128] sm:$0xff]
        %v3613 = vld [vmem:[%s2690 + $0x130] sm:$0xff]
        %v3614 = vld [vmem:[%s2690 + $0x148] sm:$0xff]
        %v3615 = vld [vmem:[%s2690 + $0x150] sm:$0xff]
        %v3616 = vld [vmem:[%s2690 + $0x168] sm:$0xff]
        %v3617 = vld [vmem:[%s2690 + $0x170] sm:$0xff]
        %v3618 = vld [vmem:[%s2690 + $0x188] sm:$0xff]
        %v3619 = vld [vmem:[%s2690 + $0x190] sm:$0xff]
        %v3620 = vld [vmem:[%s2690 + $0x1a8] sm:$0xff]
        %v3621 = vld [vmem:[%s2690 + $0x1b0] sm:$0xff]
        %v3622 = vld [vmem:[%s2690 + $0x1c8] sm:$0xff]
        %v3623 = vld [vmem:[%s2690 + $0x1d0] sm:$0xff]
        %v3624 = vld [vmem:[%s2690 + $0x1e8] sm:$0xff]
        %v3625 = vld [vmem:[%s2690 + $0x1f0] sm:$0xff]
        %v3626 = vpack.c.bf16 %v3595, %v3594
        %v3627 = vpack.c.bf16 %v3597, %v3596
        %v3628 = vpack.c.bf16 %v3599, %v3598
        %v3629 = vpack.c.bf16 %v3601, %v3600
        %v3630 = vpack.c.bf16 %v3603, %v3602
        %v3631 = vpack.c.bf16 %v3605, %v3604
        %v3632 = vpack.c.bf16 %v3607, %v3606
        %v3633 = vpack.c.bf16 %v3609, %v3608
        %v3634 = vpack.c.bf16 %v3611, %v3610
        %v3635 = vpack.c.bf16 %v3613, %v3612
        %v3636 = vpack.c.bf16 %v3615, %v3614
        %v3637 = vpack.c.bf16 %v3617, %v3616
        %v3638 = vpack.c.bf16 %v3619, %v3618
        %v3639 = vpack.c.bf16 %v3621, %v3620
        %v3640 = vpack.c.bf16 %v3623, %v3622
        %v3641 = vpack.c.bf16 %v3625, %v3624
        %s3642 = scalar_lea.vmem [#allocation9], 64
        %v3643 = vld [vmem:[%s3642] sm:$0xf]
        %v3644 = vld [vmem:[%s3642 + $0x4] sm:$0xf]
        %v3645 = vld [vmem:[%s3642 + $0x8] sm:$0xf]
        %v3646 = vld [vmem:[%s3642 + $0xc] sm:$0xf]
        %v3651 = vunpack.c.l.b16 %v3643
        %v3652 = vunpack.c.l.b16 %v3644
        %v3653 = vunpack.c.l.b16 %v3645
        %v3654 = vunpack.c.l.b16 %v3646
        %v3655 = vpack.c.b16 %v3652, %v3651
        %v3656 = vpack.c.b16 %v3654, %v3653
        %v3660 = vsel %vm333, %v3626, 0
        %v3663 = vsel %vm333, %v3627, 0
        %v3666 = vsel %vm333, %v3628, 0
        %v3669 = vsel %vm333, %v3629, 0
        %v3672 = vsel %vm333, %v3630, 0
        %v3675 = vsel %vm333, %v3631, 0
        %v3678 = vsel %vm333, %v3632, 0
        %v3681 = vsel %vm333, %v3633, 0
        %v3684 = vsel %vm333, %v3634, 0
        %v3687 = vsel %vm333, %v3635, 0
        %v3690 = vsel %vm333, %v3636, 0
        %v3693 = vsel %vm333, %v3637, 0
        %v3696 = vsel %vm333, %v3638, 0
        %v3699 = vsel %vm333, %v3639, 0
        %v3702 = vsel %vm333, %v3640, 0
        %v3705 = vsel %vm333, %v3641, 0
        %3707 = vmatpush.bf16.msra.mxu0 0
        %3708 = vmatpush.bf16.msra.mxu0 0
        %3709 = vmatpush.bf16.msra.mxu0 0
        %3710 = vmatpush.bf16.msra.mxu0 0
        %3711 = vmatpush.bf16.msra.mxu0 0
        %3712 = vmatpush.bf16.msra.mxu0 0
        %3713 = vmatpush.bf16.msra.mxu0 %v3656
        %3714 = vmatpush.bf16.msra.mxu0 %v3655
        %3715 = vmatmul.bf16.gmra.mxu0 %v3660
        %v3716 = vpop.f32.mrf.mxu0
        %v3717 = vadd.f32 0.0, %v3716
        %v3718 = vpop.f32.mrf.mxu0
        %v3719 = vadd.f32 0.0, %v3718
        %3720 = vmatmul.bf16.gmra.mxu0 %v3663
        %v3721 = vpop.f32.mrf.mxu0
        %v3722 = vadd.f32 0.0, %v3721
        %v3723 = vpop.f32.mrf.mxu0
        %v3724 = vadd.f32 0.0, %v3723
        %3725 = vmatmul.bf16.gmra.mxu0 %v3666
        %v3726 = vpop.f32.mrf.mxu0
        %v3727 = vadd.f32 0.0, %v3726
        %v3728 = vpop.f32.mrf.mxu0
        %v3729 = vadd.f32 0.0, %v3728
        %3730 = vmatmul.bf16.gmra.mxu0 %v3669
        %v3731 = vpop.f32.mrf.mxu0
        %v3732 = vadd.f32 0.0, %v3731
        %v3733 = vpop.f32.mrf.mxu0
        %v3734 = vadd.f32 0.0, %v3733
        %3735 = vmatmul.bf16.gmra.mxu0 %v3672
        %v3736 = vpop.f32.mrf.mxu0
        %v3737 = vadd.f32 0.0, %v3736
        %v3738 = vpop.f32.mrf.mxu0
        %v3739 = vadd.f32 0.0, %v3738
        %3740 = vmatmul.bf16.gmra.mxu0 %v3675
        %v3741 = vpop.f32.mrf.mxu0
        %v3742 = vadd.f32 0.0, %v3741
        %v3743 = vpop.f32.mrf.mxu0
        %v3744 = vadd.f32 0.0, %v3743
        %3745 = vmatmul.bf16.gmra.mxu0 %v3678
        %v3746 = vpop.f32.mrf.mxu0
        %v3747 = vadd.f32 0.0, %v3746
        %v3748 = vpop.f32.mrf.mxu0
        %v3749 = vadd.f32 0.0, %v3748
        %3750 = vmatmul.bf16.gmra.mxu0 %v3681
        %v3751 = vpop.f32.mrf.mxu0
        %v3752 = vadd.f32 0.0, %v3751
        %v3753 = vpop.f32.mrf.mxu0
        %v3754 = vadd.f32 0.0, %v3753
        %3755 = vmatmul.bf16.gmra.mxu0 %v3684
        %v3756 = vpop.f32.mrf.mxu0
        %v3757 = vadd.f32 0.0, %v3756
        %v3758 = vpop.f32.mrf.mxu0
        %v3759 = vadd.f32 0.0, %v3758
        %3760 = vmatmul.bf16.gmra.mxu0 %v3687
        %v3761 = vpop.f32.mrf.mxu0
        %v3762 = vadd.f32 0.0, %v3761
        %v3763 = vpop.f32.mrf.mxu0
        %v3764 = vadd.f32 0.0, %v3763
        %3765 = vmatmul.bf16.gmra.mxu0 %v3690
        %v3766 = vpop.f32.mrf.mxu0
        %v3767 = vadd.f32 0.0, %v3766
        %v3768 = vpop.f32.mrf.mxu0
        %v3769 = vadd.f32 0.0, %v3768
        %3770 = vmatmul.bf16.gmra.mxu0 %v3693
        %v3771 = vpop.f32.mrf.mxu0
        %v3772 = vadd.f32 0.0, %v3771
        %v3773 = vpop.f32.mrf.mxu0
        %v3774 = vadd.f32 0.0, %v3773
        %3775 = vmatmul.bf16.gmra.mxu0 %v3696
        %v3776 = vpop.f32.mrf.mxu0
        %v3777 = vadd.f32 0.0, %v3776
        %v3778 = vpop.f32.mrf.mxu0
        %v3779 = vadd.f32 0.0, %v3778
        %3780 = vmatmul.bf16.gmra.mxu0 %v3699
        %v3781 = vpop.f32.mrf.mxu0
        %v3782 = vadd.f32 0.0, %v3781
        %v3783 = vpop.f32.mrf.mxu0
        %v3784 = vadd.f32 0.0, %v3783
        %3785 = vmatmul.bf16.gmra.mxu0 %v3702
        %v3786 = vpop.f32.mrf.mxu0
        %v3787 = vadd.f32 0.0, %v3786
        %v3788 = vpop.f32.mrf.mxu0
        %v3789 = vadd.f32 0.0, %v3788
        %3790 = vmatmul.bf16.gmra.mxu0 %v3705
        %v3791 = vpop.f32.mrf.mxu0
        %v3792 = vadd.f32 0.0, %v3791
        %v3793 = vpop.f32.mrf.mxu0
        %v3794 = vadd.f32 0.0, %v3793
        %3795 = vdwg.mxu0
        %v3796 = vadd.f32 %v3562, %v3717
        %v3797 = vadd.f32 %v3563, %v3719
        %v3798 = vadd.f32 %v3564, %v3722
        %v3799 = vadd.f32 %v3565, %v3724
        %v3800 = vadd.f32 %v3566, %v3727
        %v3801 = vadd.f32 %v3567, %v3729
        %v3802 = vadd.f32 %v3568, %v3732
        %v3803 = vadd.f32 %v3569, %v3734
        %v3804 = vadd.f32 %v3570, %v3737
        %v3805 = vadd.f32 %v3571, %v3739
        %v3806 = vadd.f32 %v3572, %v3742
        %v3807 = vadd.f32 %v3573, %v3744
        %v3808 = vadd.f32 %v3574, %v3747
        %v3809 = vadd.f32 %v3575, %v3749
        %v3810 = vadd.f32 %v3576, %v3752
        %v3811 = vadd.f32 %v3577, %v3754
        %v3812 = vadd.f32 %v3578, %v3757
        %v3813 = vadd.f32 %v3579, %v3759
        %v3814 = vadd.f32 %v3580, %v3762
        %v3815 = vadd.f32 %v3581, %v3764
        %v3816 = vadd.f32 %v3582, %v3767
        %v3817 = vadd.f32 %v3583, %v3769
        %v3818 = vadd.f32 %v3584, %v3772
        %v3819 = vadd.f32 %v3585, %v3774
        %v3820 = vadd.f32 %v3586, %v3777
        %v3821 = vadd.f32 %v3587, %v3779
        %v3822 = vadd.f32 %v3588, %v3782
        %v3823 = vadd.f32 %v3589, %v3784
        %v3824 = vadd.f32 %v3590, %v3787
        %v3825 = vadd.f32 %v3591, %v3789
        %v3826 = vadd.f32 %v3592, %v3792
        %v3827 = vadd.f32 %v3593, %v3794
        %v3828 = vld [vmem:[%s2690 + $0x9] sm:$0xff]
        %v3829 = vld [vmem:[%s2690 + $0x11] sm:$0xff]
        %v3830 = vld [vmem:[%s2690 + $0x29] sm:$0xff]
        %v3831 = vld [vmem:[%s2690 + $0x31] sm:$0xff]
        %v3832 = vld [vmem:[%s2690 + $0x49] sm:$0xff]
        %v3833 = vld [vmem:[%s2690 + $0x51] sm:$0xff]
        %v3834 = vld [vmem:[%s2690 + $0x69] sm:$0xff]
        %v3835 = vld [vmem:[%s2690 + $0x71] sm:$0xff]
        %v3836 = vld [vmem:[%s2690 + $0x89] sm:$0xff]
        %v3837 = vld [vmem:[%s2690 + $0x91] sm:$0xff]
        %v3838 = vld [vmem:[%s2690 + $0xa9] sm:$0xff]
        %v3839 = vld [vmem:[%s2690 + $0xb1] sm:$0xff]
        %v3840 = vld [vmem:[%s2690 + $0xc9] sm:$0xff]
        %v3841 = vld [vmem:[%s2690 + $0xd1] sm:$0xff]
        %v3842 = vld [vmem:[%s2690 + $0xe9] sm:$0xff]
        %v3843 = vld [vmem:[%s2690 + $0xf1] sm:$0xff]
        %v3844 = vld [vmem:[%s2690 + $0x109] sm:$0xff]
        %v3845 = vld [vmem:[%s2690 + $0x111] sm:$0xff]
        %v3846 = vld [vmem:[%s2690 + $0x129] sm:$0xff]
        %v3847 = vld [vmem:[%s2690 + $0x131] sm:$0xff]
        %v3848 = vld [vmem:[%s2690 + $0x149] sm:$0xff]
        %v3849 = vld [vmem:[%s2690 + $0x151] sm:$0xff]
        %v3850 = vld [vmem:[%s2690 + $0x169] sm:$0xff]
        %v3851 = vld [vmem:[%s2690 + $0x171] sm:$0xff]
        %v3852 = vld [vmem:[%s2690 + $0x189] sm:$0xff]
        %v3853 = vld [vmem:[%s2690 + $0x191] sm:$0xff]
        %v3854 = vld [vmem:[%s2690 + $0x1a9] sm:$0xff]
        %v3855 = vld [vmem:[%s2690 + $0x1b1] sm:$0xff]
        %v3856 = vld [vmem:[%s2690 + $0x1c9] sm:$0xff]
        %v3857 = vld [vmem:[%s2690 + $0x1d1] sm:$0xff]
        %v3858 = vld [vmem:[%s2690 + $0x1e9] sm:$0xff]
        %v3859 = vld [vmem:[%s2690 + $0x1f1] sm:$0xff]
        %v3860 = vpack.c.bf16 %v3829, %v3828
        %v3861 = vpack.c.bf16 %v3831, %v3830
        %v3862 = vpack.c.bf16 %v3833, %v3832
        %v3863 = vpack.c.bf16 %v3835, %v3834
        %v3864 = vpack.c.bf16 %v3837, %v3836
        %v3865 = vpack.c.bf16 %v3839, %v3838
        %v3866 = vpack.c.bf16 %v3841, %v3840
        %v3867 = vpack.c.bf16 %v3843, %v3842
        %v3868 = vpack.c.bf16 %v3845, %v3844
        %v3869 = vpack.c.bf16 %v3847, %v3846
        %v3870 = vpack.c.bf16 %v3849, %v3848
        %v3871 = vpack.c.bf16 %v3851, %v3850
        %v3872 = vpack.c.bf16 %v3853, %v3852
        %v3873 = vpack.c.bf16 %v3855, %v3854
        %v3874 = vpack.c.bf16 %v3857, %v3856
        %v3875 = vpack.c.bf16 %v3859, %v3858
        %s3876 = scalar_lea.vmem [#allocation9], 80
        %v3877 = vld [vmem:[%s3876] sm:$0xf]
        %v3878 = vld [vmem:[%s3876 + $0x4] sm:$0xf]
        %v3879 = vld [vmem:[%s3876 + $0x8] sm:$0xf]
        %v3880 = vld [vmem:[%s3876 + $0xc] sm:$0xf]
        %v3885 = vunpack.c.l.b16 %v3877
        %v3886 = vunpack.c.l.b16 %v3878
        %v3887 = vunpack.c.l.b16 %v3879
        %v3888 = vunpack.c.l.b16 %v3880
        %v3889 = vpack.c.b16 %v3886, %v3885
        %v3890 = vpack.c.b16 %v3888, %v3887
        %v3894 = vsel %vm333, %v3860, 0
        %v3897 = vsel %vm333, %v3861, 0
        %v3900 = vsel %vm333, %v3862, 0
        %v3903 = vsel %vm333, %v3863, 0
        %v3906 = vsel %vm333, %v3864, 0
        %v3909 = vsel %vm333, %v3865, 0
        %v3912 = vsel %vm333, %v3866, 0
        %v3915 = vsel %vm333, %v3867, 0
        %v3918 = vsel %vm333, %v3868, 0
        %v3921 = vsel %vm333, %v3869, 0
        %v3924 = vsel %vm333, %v3870, 0
        %v3927 = vsel %vm333, %v3871, 0
        %v3930 = vsel %vm333, %v3872, 0
        %v3933 = vsel %vm333, %v3873, 0
        %v3936 = vsel %vm333, %v3874, 0
        %v3939 = vsel %vm333, %v3875, 0
        %3941 = vmatpush.bf16.msra.mxu0 0
        %3942 = vmatpush.bf16.msra.mxu0 0
        %3943 = vmatpush.bf16.msra.mxu0 0
        %3944 = vmatpush.bf16.msra.mxu0 0
        %3945 = vmatpush.bf16.msra.mxu0 0
        %3946 = vmatpush.bf16.msra.mxu0 0
        %3947 = vmatpush.bf16.msra.mxu0 %v3890
        %3948 = vmatpush.bf16.msra.mxu0 %v3889
        %3949 = vmatmul.bf16.gmra.mxu0 %v3894
        %v3950 = vpop.f32.mrf.mxu0
        %v3951 = vadd.f32 0.0, %v3950
        %v3952 = vpop.f32.mrf.mxu0
        %v3953 = vadd.f32 0.0, %v3952
        %3954 = vmatmul.bf16.gmra.mxu0 %v3897
        %v3955 = vpop.f32.mrf.mxu0
        %v3956 = vadd.f32 0.0, %v3955
        %v3957 = vpop.f32.mrf.mxu0
        %v3958 = vadd.f32 0.0, %v3957
        %3959 = vmatmul.bf16.gmra.mxu0 %v3900
        %v3960 = vpop.f32.mrf.mxu0
        %v3961 = vadd.f32 0.0, %v3960
        %v3962 = vpop.f32.mrf.mxu0
        %v3963 = vadd.f32 0.0, %v3962
        %3964 = vmatmul.bf16.gmra.mxu0 %v3903
        %v3965 = vpop.f32.mrf.mxu0
        %v3966 = vadd.f32 0.0, %v3965
        %v3967 = vpop.f32.mrf.mxu0
        %v3968 = vadd.f32 0.0, %v3967
        %3969 = vmatmul.bf16.gmra.mxu0 %v3906
        %v3970 = vpop.f32.mrf.mxu0
        %v3971 = vadd.f32 0.0, %v3970
        %v3972 = vpop.f32.mrf.mxu0
        %v3973 = vadd.f32 0.0, %v3972
        %3974 = vmatmul.bf16.gmra.mxu0 %v3909
        %v3975 = vpop.f32.mrf.mxu0
        %v3976 = vadd.f32 0.0, %v3975
        %v3977 = vpop.f32.mrf.mxu0
        %v3978 = vadd.f32 0.0, %v3977
        %3979 = vmatmul.bf16.gmra.mxu0 %v3912
        %v3980 = vpop.f32.mrf.mxu0
        %v3981 = vadd.f32 0.0, %v3980
        %v3982 = vpop.f32.mrf.mxu0
        %v3983 = vadd.f32 0.0, %v3982
        %3984 = vmatmul.bf16.gmra.mxu0 %v3915
        %v3985 = vpop.f32.mrf.mxu0
        %v3986 = vadd.f32 0.0, %v3985
        %v3987 = vpop.f32.mrf.mxu0
        %v3988 = vadd.f32 0.0, %v3987
        %3989 = vmatmul.bf16.gmra.mxu0 %v3918
        %v3990 = vpop.f32.mrf.mxu0
        %v3991 = vadd.f32 0.0, %v3990
        %v3992 = vpop.f32.mrf.mxu0
        %v3993 = vadd.f32 0.0, %v3992
        %3994 = vmatmul.bf16.gmra.mxu0 %v3921
        %v3995 = vpop.f32.mrf.mxu0
        %v3996 = vadd.f32 0.0, %v3995
        %v3997 = vpop.f32.mrf.mxu0
        %v3998 = vadd.f32 0.0, %v3997
        %3999 = vmatmul.bf16.gmra.mxu0 %v3924
        %v4000 = vpop.f32.mrf.mxu0
        %v4001 = vadd.f32 0.0, %v4000
        %v4002 = vpop.f32.mrf.mxu0
        %v4003 = vadd.f32 0.0, %v4002
        %4004 = vmatmul.bf16.gmra.mxu0 %v3927
        %v4005 = vpop.f32.mrf.mxu0
        %v4006 = vadd.f32 0.0, %v4005
        %v4007 = vpop.f32.mrf.mxu0
        %v4008 = vadd.f32 0.0, %v4007
        %4009 = vmatmul.bf16.gmra.mxu0 %v3930
        %v4010 = vpop.f32.mrf.mxu0
        %v4011 = vadd.f32 0.0, %v4010
        %v4012 = vpop.f32.mrf.mxu0
        %v4013 = vadd.f32 0.0, %v4012
        %4014 = vmatmul.bf16.gmra.mxu0 %v3933
        %v4015 = vpop.f32.mrf.mxu0
        %v4016 = vadd.f32 0.0, %v4015
        %v4017 = vpop.f32.mrf.mxu0
        %v4018 = vadd.f32 0.0, %v4017
        %4019 = vmatmul.bf16.gmra.mxu0 %v3936
        %v4020 = vpop.f32.mrf.mxu0
        %v4021 = vadd.f32 0.0, %v4020
        %v4022 = vpop.f32.mrf.mxu0
        %v4023 = vadd.f32 0.0, %v4022
        %4024 = vmatmul.bf16.gmra.mxu0 %v3939
        %v4025 = vpop.f32.mrf.mxu0
        %v4026 = vadd.f32 0.0, %v4025
        %v4027 = vpop.f32.mrf.mxu0
        %v4028 = vadd.f32 0.0, %v4027
        %4029 = vdwg.mxu0
        %v4030 = vadd.f32 %v3796, %v3951
        %v4031 = vadd.f32 %v3797, %v3953
        %v4032 = vadd.f32 %v3798, %v3956
        %v4033 = vadd.f32 %v3799, %v3958
        %v4034 = vadd.f32 %v3800, %v3961
        %v4035 = vadd.f32 %v3801, %v3963
        %v4036 = vadd.f32 %v3802, %v3966
        %v4037 = vadd.f32 %v3803, %v3968
        %v4038 = vadd.f32 %v3804, %v3971
        %v4039 = vadd.f32 %v3805, %v3973
        %v4040 = vadd.f32 %v3806, %v3976
        %v4041 = vadd.f32 %v3807, %v3978
        %v4042 = vadd.f32 %v3808, %v3981
        %v4043 = vadd.f32 %v3809, %v3983
        %v4044 = vadd.f32 %v3810, %v3986
        %v4045 = vadd.f32 %v3811, %v3988
        %v4046 = vadd.f32 %v3812, %v3991
        %v4047 = vadd.f32 %v3813, %v3993
        %v4048 = vadd.f32 %v3814, %v3996
        %v4049 = vadd.f32 %v3815, %v3998
        %v4050 = vadd.f32 %v3816, %v4001
        %v4051 = vadd.f32 %v3817, %v4003
        %v4052 = vadd.f32 %v3818, %v4006
        %v4053 = vadd.f32 %v3819, %v4008
        %v4054 = vadd.f32 %v3820, %v4011
        %v4055 = vadd.f32 %v3821, %v4013
        %v4056 = vadd.f32 %v3822, %v4016
        %v4057 = vadd.f32 %v3823, %v4018
        %v4058 = vadd.f32 %v3824, %v4021
        %v4059 = vadd.f32 %v3825, %v4023
        %v4060 = vadd.f32 %v3826, %v4026
        %v4061 = vadd.f32 %v3827, %v4028
        %s4062 = scalar_lea.vmem [#allocation3], 64
        %v4063 = vld [vmem:[%s4062 + $0x7] sm:$0xff]
        %v4064 = vld [vmem:[%s4062 + $0xf] sm:$0xff]
        %v4065 = vld [vmem:[%s4062 + $0x27] sm:$0xff]
        %v4066 = vld [vmem:[%s4062 + $0x2f] sm:$0xff]
        %v4067 = vld [vmem:[%s4062 + $0x47] sm:$0xff]
        %v4068 = vld [vmem:[%s4062 + $0x4f] sm:$0xff]
        %v4069 = vld [vmem:[%s4062 + $0x67] sm:$0xff]
        %v4070 = vld [vmem:[%s4062 + $0x6f] sm:$0xff]
        %v4071 = vld [vmem:[%s4062 + $0x87] sm:$0xff]
        %v4072 = vld [vmem:[%s4062 + $0x8f] sm:$0xff]
        %v4073 = vld [vmem:[%s4062 + $0xa7] sm:$0xff]
        %v4074 = vld [vmem:[%s4062 + $0xaf] sm:$0xff]
        %v4075 = vld [vmem:[%s4062 + $0xc7] sm:$0xff]
        %v4076 = vld [vmem:[%s4062 + $0xcf] sm:$0xff]
        %v4077 = vld [vmem:[%s4062 + $0xe7] sm:$0xff]
        %v4078 = vld [vmem:[%s4062 + $0xef] sm:$0xff]
        %v4079 = vld [vmem:[%s4062 + $0x107] sm:$0xff]
        %v4080 = vld [vmem:[%s4062 + $0x10f] sm:$0xff]
        %v4081 = vld [vmem:[%s4062 + $0x127] sm:$0xff]
        %v4082 = vld [vmem:[%s4062 + $0x12f] sm:$0xff]
        %v4083 = vld [vmem:[%s4062 + $0x147] sm:$0xff]
        %v4084 = vld [vmem:[%s4062 + $0x14f] sm:$0xff]
        %v4085 = vld [vmem:[%s4062 + $0x167] sm:$0xff]
        %v4086 = vld [vmem:[%s4062 + $0x16f] sm:$0xff]
        %v4087 = vld [vmem:[%s4062 + $0x187] sm:$0xff]
        %v4088 = vld [vmem:[%s4062 + $0x18f] sm:$0xff]
        %v4089 = vld [vmem:[%s4062 + $0x1a7] sm:$0xff]
        %v4090 = vld [vmem:[%s4062 + $0x1af] sm:$0xff]
        %v4091 = vld [vmem:[%s4062 + $0x1c7] sm:$0xff]
        %v4092 = vld [vmem:[%s4062 + $0x1cf] sm:$0xff]
        %v4093 = vld [vmem:[%s4062 + $0x1e7] sm:$0xff]
        %v4094 = vld [vmem:[%s4062 + $0x1ef] sm:$0xff]
        %v4095 = vpack.c.bf16 %v4064, %v4063
        %v4096 = vpack.c.bf16 %v4066, %v4065
        %v4097 = vpack.c.bf16 %v4068, %v4067
        %v4098 = vpack.c.bf16 %v4070, %v4069
        %v4099 = vpack.c.bf16 %v4072, %v4071
        %v4100 = vpack.c.bf16 %v4074, %v4073
        %v4101 = vpack.c.bf16 %v4076, %v4075
        %v4102 = vpack.c.bf16 %v4078, %v4077
        %v4103 = vpack.c.bf16 %v4080, %v4079
        %v4104 = vpack.c.bf16 %v4082, %v4081
        %v4105 = vpack.c.bf16 %v4084, %v4083
        %v4106 = vpack.c.bf16 %v4086, %v4085
        %v4107 = vpack.c.bf16 %v4088, %v4087
        %v4108 = vpack.c.bf16 %v4090, %v4089
        %v4109 = vpack.c.bf16 %v4092, %v4091
        %v4110 = vpack.c.bf16 %v4094, %v4093
        %s4111 = scalar_lea.vmem [#allocation9], 96
        %v4112 = vld [vmem:[%s4111] sm:$0xf]
        %v4113 = vld [vmem:[%s4111 + $0x4] sm:$0xf]
        %v4114 = vld [vmem:[%s4111 + $0x8] sm:$0xf]
        %v4115 = vld [vmem:[%s4111 + $0xc] sm:$0xf]
        %v4120 = vunpack.c.l.b16 %v4112
        %v4121 = vunpack.c.l.b16 %v4113
        %v4122 = vunpack.c.l.b16 %v4114
        %v4123 = vunpack.c.l.b16 %v4115
        %v4124 = vpack.c.b16 %v4121, %v4120
        %v4125 = vpack.c.b16 %v4123, %v4122
        %v4129 = vsel %vm333, %v4095, 0
        %v4132 = vsel %vm333, %v4096, 0
        %v4135 = vsel %vm333, %v4097, 0
        %v4138 = vsel %vm333, %v4098, 0
        %v4141 = vsel %vm333, %v4099, 0
        %v4144 = vsel %vm333, %v4100, 0
        %v4147 = vsel %vm333, %v4101, 0
        %v4150 = vsel %vm333, %v4102, 0
        %v4153 = vsel %vm333, %v4103, 0
        %v4156 = vsel %vm333, %v4104, 0
        %v4159 = vsel %vm333, %v4105, 0
        %v4162 = vsel %vm333, %v4106, 0
        %v4165 = vsel %vm333, %v4107, 0
        %v4168 = vsel %vm333, %v4108, 0
        %v4171 = vsel %vm333, %v4109, 0
        %v4174 = vsel %vm333, %v4110, 0
        %4176 = vmatpush.bf16.msra.mxu0 0
        %4177 = vmatpush.bf16.msra.mxu0 0
        %4178 = vmatpush.bf16.msra.mxu0 0
        %4179 = vmatpush.bf16.msra.mxu0 0
        %4180 = vmatpush.bf16.msra.mxu0 0
        %4181 = vmatpush.bf16.msra.mxu0 0
        %4182 = vmatpush.bf16.msra.mxu0 %v4125
        %4183 = vmatpush.bf16.msra.mxu0 %v4124
        %4184 = vmatmul.bf16.gmra.mxu0 %v4129
        %v4185 = vpop.f32.mrf.mxu0
        %v4186 = vadd.f32 0.0, %v4185
        %v4187 = vpop.f32.mrf.mxu0
        %v4188 = vadd.f32 0.0, %v4187
        %4189 = vmatmul.bf16.gmra.mxu0 %v4132
        %v4190 = vpop.f32.mrf.mxu0
        %v4191 = vadd.f32 0.0, %v4190
        %v4192 = vpop.f32.mrf.mxu0
        %v4193 = vadd.f32 0.0, %v4192
        %4194 = vmatmul.bf16.gmra.mxu0 %v4135
        %v4195 = vpop.f32.mrf.mxu0
        %v4196 = vadd.f32 0.0, %v4195
        %v4197 = vpop.f32.mrf.mxu0
        %v4198 = vadd.f32 0.0, %v4197
        %4199 = vmatmul.bf16.gmra.mxu0 %v4138
        %v4200 = vpop.f32.mrf.mxu0
        %v4201 = vadd.f32 0.0, %v4200
        %v4202 = vpop.f32.mrf.mxu0
        %v4203 = vadd.f32 0.0, %v4202
        %4204 = vmatmul.bf16.gmra.mxu0 %v4141
        %v4205 = vpop.f32.mrf.mxu0
        %v4206 = vadd.f32 0.0, %v4205
        %v4207 = vpop.f32.mrf.mxu0
        %v4208 = vadd.f32 0.0, %v4207
        %4209 = vmatmul.bf16.gmra.mxu0 %v4144
        %v4210 = vpop.f32.mrf.mxu0
        %v4211 = vadd.f32 0.0, %v4210
        %v4212 = vpop.f32.mrf.mxu0
        %v4213 = vadd.f32 0.0, %v4212
        %4214 = vmatmul.bf16.gmra.mxu0 %v4147
        %v4215 = vpop.f32.mrf.mxu0
        %v4216 = vadd.f32 0.0, %v4215
        %v4217 = vpop.f32.mrf.mxu0
        %v4218 = vadd.f32 0.0, %v4217
        %4219 = vmatmul.bf16.gmra.mxu0 %v4150
        %v4220 = vpop.f32.mrf.mxu0
        %v4221 = vadd.f32 0.0, %v4220
        %v4222 = vpop.f32.mrf.mxu0
        %v4223 = vadd.f32 0.0, %v4222
        %4224 = vmatmul.bf16.gmra.mxu0 %v4153
        %v4225 = vpop.f32.mrf.mxu0
        %v4226 = vadd.f32 0.0, %v4225
        %v4227 = vpop.f32.mrf.mxu0
        %v4228 = vadd.f32 0.0, %v4227
        %4229 = vmatmul.bf16.gmra.mxu0 %v4156
        %v4230 = vpop.f32.mrf.mxu0
        %v4231 = vadd.f32 0.0, %v4230
        %v4232 = vpop.f32.mrf.mxu0
        %v4233 = vadd.f32 0.0, %v4232
        %4234 = vmatmul.bf16.gmra.mxu0 %v4159
        %v4235 = vpop.f32.mrf.mxu0
        %v4236 = vadd.f32 0.0, %v4235
        %v4237 = vpop.f32.mrf.mxu0
        %v4238 = vadd.f32 0.0, %v4237
        %4239 = vmatmul.bf16.gmra.mxu0 %v4162
        %v4240 = vpop.f32.mrf.mxu0
        %v4241 = vadd.f32 0.0, %v4240
        %v4242 = vpop.f32.mrf.mxu0
        %v4243 = vadd.f32 0.0, %v4242
        %4244 = vmatmul.bf16.gmra.mxu0 %v4165
        %v4245 = vpop.f32.mrf.mxu0
        %v4246 = vadd.f32 0.0, %v4245
        %v4247 = vpop.f32.mrf.mxu0
        %v4248 = vadd.f32 0.0, %v4247
        %4249 = vmatmul.bf16.gmra.mxu0 %v4168
        %v4250 = vpop.f32.mrf.mxu0
        %v4251 = vadd.f32 0.0, %v4250
        %v4252 = vpop.f32.mrf.mxu0
        %v4253 = vadd.f32 0.0, %v4252
        %4254 = vmatmul.bf16.gmra.mxu0 %v4171
        %v4255 = vpop.f32.mrf.mxu0
        %v4256 = vadd.f32 0.0, %v4255
        %v4257 = vpop.f32.mrf.mxu0
        %v4258 = vadd.f32 0.0, %v4257
        %4259 = vmatmul.bf16.gmra.mxu0 %v4174
        %v4260 = vpop.f32.mrf.mxu0
        %v4261 = vadd.f32 0.0, %v4260
        %v4262 = vpop.f32.mrf.mxu0
        %v4263 = vadd.f32 0.0, %v4262
        %4264 = vdwg.mxu0
        %v4265 = vadd.f32 %v4030, %v4186
        %v4266 = vadd.f32 %v4031, %v4188
        %v4267 = vadd.f32 %v4032, %v4191
        %v4268 = vadd.f32 %v4033, %v4193
        %v4269 = vadd.f32 %v4034, %v4196
        %v4270 = vadd.f32 %v4035, %v4198
        %v4271 = vadd.f32 %v4036, %v4201
        %v4272 = vadd.f32 %v4037, %v4203
        %v4273 = vadd.f32 %v4038, %v4206
        %v4274 = vadd.f32 %v4039, %v4208
        %v4275 = vadd.f32 %v4040, %v4211
        %v4276 = vadd.f32 %v4041, %v4213
        %v4277 = vadd.f32 %v4042, %v4216
        %v4278 = vadd.f32 %v4043, %v4218
        %v4279 = vadd.f32 %v4044, %v4221
        %v4280 = vadd.f32 %v4045, %v4223
        %v4281 = vadd.f32 %v4046, %v4226
        %v4282 = vadd.f32 %v4047, %v4228
        %v4283 = vadd.f32 %v4048, %v4231
        %v4284 = vadd.f32 %v4049, %v4233
        %v4285 = vadd.f32 %v4050, %v4236
        %v4286 = vadd.f32 %v4051, %v4238
        %v4287 = vadd.f32 %v4052, %v4241
        %v4288 = vadd.f32 %v4053, %v4243
        %v4289 = vadd.f32 %v4054, %v4246
        %v4290 = vadd.f32 %v4055, %v4248
        %v4291 = vadd.f32 %v4056, %v4251
        %v4292 = vadd.f32 %v4057, %v4253
        %v4293 = vadd.f32 %v4058, %v4256
        %v4294 = vadd.f32 %v4059, %v4258
        %v4295 = vadd.f32 %v4060, %v4261
        %v4296 = vadd.f32 %v4061, %v4263
        %v4297 = vld [vmem:[%s4062 + $0x8] sm:$0xff]
        %v4298 = vld [vmem:[%s4062 + $0x10] sm:$0xff]
        %v4299 = vld [vmem:[%s4062 + $0x28] sm:$0xff]
        %v4300 = vld [vmem:[%s4062 + $0x30] sm:$0xff]
        %v4301 = vld [vmem:[%s4062 + $0x48] sm:$0xff]
        %v4302 = vld [vmem:[%s4062 + $0x50] sm:$0xff]
        %v4303 = vld [vmem:[%s4062 + $0x68] sm:$0xff]
        %v4304 = vld [vmem:[%s4062 + $0x70] sm:$0xff]
        %v4305 = vld [vmem:[%s4062 + $0x88] sm:$0xff]
        %v4306 = vld [vmem:[%s4062 + $0x90] sm:$0xff]
        %v4307 = vld [vmem:[%s4062 + $0xa8] sm:$0xff]
        %v4308 = vld [vmem:[%s4062 + $0xb0] sm:$0xff]
        %v4309 = vld [vmem:[%s4062 + $0xc8] sm:$0xff]
        %v4310 = vld [vmem:[%s4062 + $0xd0] sm:$0xff]
        %v4311 = vld [vmem:[%s4062 + $0xe8] sm:$0xff]
        %v4312 = vld [vmem:[%s4062 + $0xf0] sm:$0xff]
        %v4313 = vld [vmem:[%s4062 + $0x108] sm:$0xff]
        %v4314 = vld [vmem:[%s4062 + $0x110] sm:$0xff]
        %v4315 = vld [vmem:[%s4062 + $0x128] sm:$0xff]
        %v4316 = vld [vmem:[%s4062 + $0x130] sm:$0xff]
        %v4317 = vld [vmem:[%s4062 + $0x148] sm:$0xff]
        %v4318 = vld [vmem:[%s4062 + $0x150] sm:$0xff]
        %v4319 = vld [vmem:[%s4062 + $0x168] sm:$0xff]
        %v4320 = vld [vmem:[%s4062 + $0x170] sm:$0xff]
        %v4321 = vld [vmem:[%s4062 + $0x188] sm:$0xff]
        %v4322 = vld [vmem:[%s4062 + $0x190] sm:$0xff]
        %v4323 = vld [vmem:[%s4062 + $0x1a8] sm:$0xff]
        %v4324 = vld [vmem:[%s4062 + $0x1b0] sm:$0xff]
        %v4325 = vld [vmem:[%s4062 + $0x1c8] sm:$0xff]
        %v4326 = vld [vmem:[%s4062 + $0x1d0] sm:$0xff]
        %v4327 = vld [vmem:[%s4062 + $0x1e8] sm:$0xff]
        %v4328 = vld [vmem:[%s4062 + $0x1f0] sm:$0xff]
        %v4329 = vpack.c.bf16 %v4298, %v4297
        %v4330 = vpack.c.bf16 %v4300, %v4299
        %v4331 = vpack.c.bf16 %v4302, %v4301
        %v4332 = vpack.c.bf16 %v4304, %v4303
        %v4333 = vpack.c.bf16 %v4306, %v4305
        %v4334 = vpack.c.bf16 %v4308, %v4307
        %v4335 = vpack.c.bf16 %v4310, %v4309
        %v4336 = vpack.c.bf16 %v4312, %v4311
        %v4337 = vpack.c.bf16 %v4314, %v4313
        %v4338 = vpack.c.bf16 %v4316, %v4315
        %v4339 = vpack.c.bf16 %v4318, %v4317
        %v4340 = vpack.c.bf16 %v4320, %v4319
        %v4341 = vpack.c.bf16 %v4322, %v4321
        %v4342 = vpack.c.bf16 %v4324, %v4323
        %v4343 = vpack.c.bf16 %v4326, %v4325
        %v4344 = vpack.c.bf16 %v4328, %v4327
        %s4345 = scalar_lea.vmem [#allocation9], 112
        %v4346 = vld [vmem:[%s4345] sm:$0xf]
        %v4347 = vld [vmem:[%s4345 + $0x4] sm:$0xf]
        %v4348 = vld [vmem:[%s4345 + $0x8] sm:$0xf]
        %v4349 = vld [vmem:[%s4345 + $0xc] sm:$0xf]
        %v4354 = vunpack.c.l.b16 %v4346
        %v4355 = vunpack.c.l.b16 %v4347
        %v4356 = vunpack.c.l.b16 %v4348
        %v4357 = vunpack.c.l.b16 %v4349
        %v4358 = vpack.c.b16 %v4355, %v4354
        %v4359 = vpack.c.b16 %v4357, %v4356
        %v4363 = vsel %vm333, %v4329, 0
        %v4366 = vsel %vm333, %v4330, 0
        %v4369 = vsel %vm333, %v4331, 0
        %v4372 = vsel %vm333, %v4332, 0
        %v4375 = vsel %vm333, %v4333, 0
        %v4378 = vsel %vm333, %v4334, 0
        %v4381 = vsel %vm333, %v4335, 0
        %v4384 = vsel %vm333, %v4336, 0
        %v4387 = vsel %vm333, %v4337, 0
        %v4390 = vsel %vm333, %v4338, 0
        %v4393 = vsel %vm333, %v4339, 0
        %v4396 = vsel %vm333, %v4340, 0
        %v4399 = vsel %vm333, %v4341, 0
        %v4402 = vsel %vm333, %v4342, 0
        %v4405 = vsel %vm333, %v4343, 0
        %v4408 = vsel %vm333, %v4344, 0
        %4410 = vmatpush.bf16.msra.mxu0 0
        %4411 = vmatpush.bf16.msra.mxu0 0
        %4412 = vmatpush.bf16.msra.mxu0 0
        %4413 = vmatpush.bf16.msra.mxu0 0
        %4414 = vmatpush.bf16.msra.mxu0 0
        %4415 = vmatpush.bf16.msra.mxu0 0
        %4416 = vmatpush.bf16.msra.mxu0 %v4359
        %4417 = vmatpush.bf16.msra.mxu0 %v4358
        %4418 = vmatmul.bf16.gmra.mxu0 %v4363
        %v4419 = vpop.f32.mrf.mxu0
        %v4420 = vadd.f32 0.0, %v4419
        %v4421 = vpop.f32.mrf.mxu0
        %v4422 = vadd.f32 0.0, %v4421
        %4423 = vmatmul.bf16.gmra.mxu0 %v4366
        %v4424 = vpop.f32.mrf.mxu0
        %v4425 = vadd.f32 0.0, %v4424
        %v4426 = vpop.f32.mrf.mxu0
        %v4427 = vadd.f32 0.0, %v4426
        %4428 = vmatmul.bf16.gmra.mxu0 %v4369
        %v4429 = vpop.f32.mrf.mxu0
        %v4430 = vadd.f32 0.0, %v4429
        %v4431 = vpop.f32.mrf.mxu0
        %v4432 = vadd.f32 0.0, %v4431
        %4433 = vmatmul.bf16.gmra.mxu0 %v4372
        %v4434 = vpop.f32.mrf.mxu0
        %v4435 = vadd.f32 0.0, %v4434
        %v4436 = vpop.f32.mrf.mxu0
        %v4437 = vadd.f32 0.0, %v4436
        %4438 = vmatmul.bf16.gmra.mxu0 %v4375
        %v4439 = vpop.f32.mrf.mxu0
        %v4440 = vadd.f32 0.0, %v4439
        %v4441 = vpop.f32.mrf.mxu0
        %v4442 = vadd.f32 0.0, %v4441
        %4443 = vmatmul.bf16.gmra.mxu0 %v4378
        %v4444 = vpop.f32.mrf.mxu0
        %v4445 = vadd.f32 0.0, %v4444
        %v4446 = vpop.f32.mrf.mxu0
        %v4447 = vadd.f32 0.0, %v4446
        %4448 = vmatmul.bf16.gmra.mxu0 %v4381
        %v4449 = vpop.f32.mrf.mxu0
        %v4450 = vadd.f32 0.0, %v4449
        %v4451 = vpop.f32.mrf.mxu0
        %v4452 = vadd.f32 0.0, %v4451
        %4453 = vmatmul.bf16.gmra.mxu0 %v4384
        %v4454 = vpop.f32.mrf.mxu0
        %v4455 = vadd.f32 0.0, %v4454
        %v4456 = vpop.f32.mrf.mxu0
        %v4457 = vadd.f32 0.0, %v4456
        %4458 = vmatmul.bf16.gmra.mxu0 %v4387
        %v4459 = vpop.f32.mrf.mxu0
        %v4460 = vadd.f32 0.0, %v4459
        %v4461 = vpop.f32.mrf.mxu0
        %v4462 = vadd.f32 0.0, %v4461
        %4463 = vmatmul.bf16.gmra.mxu0 %v4390
        %v4464 = vpop.f32.mrf.mxu0
        %v4465 = vadd.f32 0.0, %v4464
        %v4466 = vpop.f32.mrf.mxu0
        %v4467 = vadd.f32 0.0, %v4466
        %4468 = vmatmul.bf16.gmra.mxu0 %v4393
        %v4469 = vpop.f32.mrf.mxu0
        %v4470 = vadd.f32 0.0, %v4469
        %v4471 = vpop.f32.mrf.mxu0
        %v4472 = vadd.f32 0.0, %v4471
        %4473 = vmatmul.bf16.gmra.mxu0 %v4396
        %v4474 = vpop.f32.mrf.mxu0
        %v4475 = vadd.f32 0.0, %v4474
        %v4476 = vpop.f32.mrf.mxu0
        %v4477 = vadd.f32 0.0, %v4476
        %4478 = vmatmul.bf16.gmra.mxu0 %v4399
        %v4479 = vpop.f32.mrf.mxu0
        %v4480 = vadd.f32 0.0, %v4479
        %v4481 = vpop.f32.mrf.mxu0
        %v4482 = vadd.f32 0.0, %v4481
        %4483 = vmatmul.bf16.gmra.mxu0 %v4402
        %v4484 = vpop.f32.mrf.mxu0
        %v4485 = vadd.f32 0.0, %v4484
        %v4486 = vpop.f32.mrf.mxu0
        %v4487 = vadd.f32 0.0, %v4486
        %4488 = vmatmul.bf16.gmra.mxu0 %v4405
        %v4489 = vpop.f32.mrf.mxu0
        %v4490 = vadd.f32 0.0, %v4489
        %v4491 = vpop.f32.mrf.mxu0
        %v4492 = vadd.f32 0.0, %v4491
        %4493 = vmatmul.bf16.gmra.mxu0 %v4408
        %v4494 = vpop.f32.mrf.mxu0
        %v4495 = vadd.f32 0.0, %v4494
        %v4496 = vpop.f32.mrf.mxu0
        %v4497 = vadd.f32 0.0, %v4496
        %4498 = vdwg.mxu0
        %v4499 = vadd.f32 %v4265, %v4420
        %v4500 = vadd.f32 %v4266, %v4422
        %v4501 = vadd.f32 %v4267, %v4425
        %v4502 = vadd.f32 %v4268, %v4427
        %v4503 = vadd.f32 %v4269, %v4430
        %v4504 = vadd.f32 %v4270, %v4432
        %v4505 = vadd.f32 %v4271, %v4435
        %v4506 = vadd.f32 %v4272, %v4437
        %v4507 = vadd.f32 %v4273, %v4440
        %v4508 = vadd.f32 %v4274, %v4442
        %v4509 = vadd.f32 %v4275, %v4445
        %v4510 = vadd.f32 %v4276, %v4447
        %v4511 = vadd.f32 %v4277, %v4450
        %v4512 = vadd.f32 %v4278, %v4452
        %v4513 = vadd.f32 %v4279, %v4455
        %v4514 = vadd.f32 %v4280, %v4457
        %v4515 = vadd.f32 %v4281, %v4460
        %v4516 = vadd.f32 %v4282, %v4462
        %v4517 = vadd.f32 %v4283, %v4465
        %v4518 = vadd.f32 %v4284, %v4467
        %v4519 = vadd.f32 %v4285, %v4470
        %v4520 = vadd.f32 %v4286, %v4472
        %v4521 = vadd.f32 %v4287, %v4475
        %v4522 = vadd.f32 %v4288, %v4477
        %v4523 = vadd.f32 %v4289, %v4480
        %v4524 = vadd.f32 %v4290, %v4482
        %v4525 = vadd.f32 %v4291, %v4485
        %v4526 = vadd.f32 %v4292, %v4487
        %v4527 = vadd.f32 %v4293, %v4490
        %v4528 = vadd.f32 %v4294, %v4492
        %v4529 = vadd.f32 %v4295, %v4495
        %v4530 = vadd.f32 %v4296, %v4497
        %v4531 = vld [vmem:[%s4062 + $0x9] sm:$0xff]
        %v4532 = vld [vmem:[%s4062 + $0x11] sm:$0xff]
        %v4533 = vld [vmem:[%s4062 + $0x29] sm:$0xff]
        %v4534 = vld [vmem:[%s4062 + $0x31] sm:$0xff]
        %v4535 = vld [vmem:[%s4062 + $0x49] sm:$0xff]
        %v4536 = vld [vmem:[%s4062 + $0x51] sm:$0xff]
        %v4537 = vld [vmem:[%s4062 + $0x69] sm:$0xff]
        %v4538 = vld [vmem:[%s4062 + $0x71] sm:$0xff]
        %v4539 = vld [vmem:[%s4062 + $0x89] sm:$0xff]
        %v4540 = vld [vmem:[%s4062 + $0x91] sm:$0xff]
        %v4541 = vld [vmem:[%s4062 + $0xa9] sm:$0xff]
        %v4542 = vld [vmem:[%s4062 + $0xb1] sm:$0xff]
        %v4543 = vld [vmem:[%s4062 + $0xc9] sm:$0xff]
        %v4544 = vld [vmem:[%s4062 + $0xd1] sm:$0xff]
        %v4545 = vld [vmem:[%s4062 + $0xe9] sm:$0xff]
        %v4546 = vld [vmem:[%s4062 + $0xf1] sm:$0xff]
        %v4547 = vld [vmem:[%s4062 + $0x109] sm:$0xff]
        %v4548 = vld [vmem:[%s4062 + $0x111] sm:$0xff]
        %v4549 = vld [vmem:[%s4062 + $0x129] sm:$0xff]
        %v4550 = vld [vmem:[%s4062 + $0x131] sm:$0xff]
        %v4551 = vld [vmem:[%s4062 + $0x149] sm:$0xff]
        %v4552 = vld [vmem:[%s4062 + $0x151] sm:$0xff]
        %v4553 = vld [vmem:[%s4062 + $0x169] sm:$0xff]
        %v4554 = vld [vmem:[%s4062 + $0x171] sm:$0xff]
        %v4555 = vld [vmem:[%s4062 + $0x189] sm:$0xff]
        %v4556 = vld [vmem:[%s4062 + $0x191] sm:$0xff]
        %v4557 = vld [vmem:[%s4062 + $0x1a9] sm:$0xff]
        %v4558 = vld [vmem:[%s4062 + $0x1b1] sm:$0xff]
        %v4559 = vld [vmem:[%s4062 + $0x1c9] sm:$0xff]
        %v4560 = vld [vmem:[%s4062 + $0x1d1] sm:$0xff]
        %v4561 = vld [vmem:[%s4062 + $0x1e9] sm:$0xff]
        %v4562 = vld [vmem:[%s4062 + $0x1f1] sm:$0xff]
        %v4563 = vpack.c.bf16 %v4532, %v4531
        %v4564 = vpack.c.bf16 %v4534, %v4533
        %v4565 = vpack.c.bf16 %v4536, %v4535
        %v4566 = vpack.c.bf16 %v4538, %v4537
        %v4567 = vpack.c.bf16 %v4540, %v4539
        %v4568 = vpack.c.bf16 %v4542, %v4541
        %v4569 = vpack.c.bf16 %v4544, %v4543
        %v4570 = vpack.c.bf16 %v4546, %v4545
        %v4571 = vpack.c.bf16 %v4548, %v4547
        %v4572 = vpack.c.bf16 %v4550, %v4549
        %v4573 = vpack.c.bf16 %v4552, %v4551
        %v4574 = vpack.c.bf16 %v4554, %v4553
        %v4575 = vpack.c.bf16 %v4556, %v4555
        %v4576 = vpack.c.bf16 %v4558, %v4557
        %v4577 = vpack.c.bf16 %v4560, %v4559
        %v4578 = vpack.c.bf16 %v4562, %v4561
        %s4579 = scalar_lea.vmem [#allocation9], 128
        %v4580 = vld [vmem:[%s4579] sm:$0xf]
        %v4581 = vld [vmem:[%s4579 + $0x4] sm:$0xf]
        %v4582 = vld [vmem:[%s4579 + $0x8] sm:$0xf]
        %v4583 = vld [vmem:[%s4579 + $0xc] sm:$0xf]
        %v4588 = vunpack.c.l.b16 %v4580
        %v4589 = vunpack.c.l.b16 %v4581
        %v4590 = vunpack.c.l.b16 %v4582
        %v4591 = vunpack.c.l.b16 %v4583
        %v4592 = vpack.c.b16 %v4589, %v4588
        %v4593 = vpack.c.b16 %v4591, %v4590
        %v4597 = vsel %vm333, %v4563, 0
        %v4600 = vsel %vm333, %v4564, 0
        %v4603 = vsel %vm333, %v4565, 0
        %v4606 = vsel %vm333, %v4566, 0
        %v4609 = vsel %vm333, %v4567, 0
        %v4612 = vsel %vm333, %v4568, 0
        %v4615 = vsel %vm333, %v4569, 0
        %v4618 = vsel %vm333, %v4570, 0
        %v4621 = vsel %vm333, %v4571, 0
        %v4624 = vsel %vm333, %v4572, 0
        %v4627 = vsel %vm333, %v4573, 0
        %v4630 = vsel %vm333, %v4574, 0
        %v4633 = vsel %vm333, %v4575, 0
        %v4636 = vsel %vm333, %v4576, 0
        %v4639 = vsel %vm333, %v4577, 0
        %v4642 = vsel %vm333, %v4578, 0
        %4644 = vmatpush.bf16.msra.mxu0 0
        %4645 = vmatpush.bf16.msra.mxu0 0
        %4646 = vmatpush.bf16.msra.mxu0 0
        %4647 = vmatpush.bf16.msra.mxu0 0
        %4648 = vmatpush.bf16.msra.mxu0 0
        %4649 = vmatpush.bf16.msra.mxu0 0
        %4650 = vmatpush.bf16.msra.mxu0 %v4593
        %4651 = vmatpush.bf16.msra.mxu0 %v4592
        %4652 = vmatmul.bf16.gmra.mxu0 %v4597
        %v4653 = vpop.f32.mrf.mxu0
        %v4654 = vadd.f32 0.0, %v4653
        %v4655 = vpop.f32.mrf.mxu0
        %v4656 = vadd.f32 0.0, %v4655
        %4657 = vmatmul.bf16.gmra.mxu0 %v4600
        %v4658 = vpop.f32.mrf.mxu0
        %v4659 = vadd.f32 0.0, %v4658
        %v4660 = vpop.f32.mrf.mxu0
        %v4661 = vadd.f32 0.0, %v4660
        %4662 = vmatmul.bf16.gmra.mxu0 %v4603
        %v4663 = vpop.f32.mrf.mxu0
        %v4664 = vadd.f32 0.0, %v4663
        %v4665 = vpop.f32.mrf.mxu0
        %v4666 = vadd.f32 0.0, %v4665
        %4667 = vmatmul.bf16.gmra.mxu0 %v4606
        %v4668 = vpop.f32.mrf.mxu0
        %v4669 = vadd.f32 0.0, %v4668
        %v4670 = vpop.f32.mrf.mxu0
        %v4671 = vadd.f32 0.0, %v4670
        %4672 = vmatmul.bf16.gmra.mxu0 %v4609
        %v4673 = vpop.f32.mrf.mxu0
        %v4674 = vadd.f32 0.0, %v4673
        %v4675 = vpop.f32.mrf.mxu0
        %v4676 = vadd.f32 0.0, %v4675
        %4677 = vmatmul.bf16.gmra.mxu0 %v4612
        %v4678 = vpop.f32.mrf.mxu0
        %v4679 = vadd.f32 0.0, %v4678
        %v4680 = vpop.f32.mrf.mxu0
        %v4681 = vadd.f32 0.0, %v4680
        %4682 = vmatmul.bf16.gmra.mxu0 %v4615
        %v4683 = vpop.f32.mrf.mxu0
        %v4684 = vadd.f32 0.0, %v4683
        %v4685 = vpop.f32.mrf.mxu0
        %v4686 = vadd.f32 0.0, %v4685
        %4687 = vmatmul.bf16.gmra.mxu0 %v4618
        %v4688 = vpop.f32.mrf.mxu0
        %v4689 = vadd.f32 0.0, %v4688
        %v4690 = vpop.f32.mrf.mxu0
        %v4691 = vadd.f32 0.0, %v4690
        %4692 = vmatmul.bf16.gmra.mxu0 %v4621
        %v4693 = vpop.f32.mrf.mxu0
        %v4694 = vadd.f32 0.0, %v4693
        %v4695 = vpop.f32.mrf.mxu0
        %v4696 = vadd.f32 0.0, %v4695
        %4697 = vmatmul.bf16.gmra.mxu0 %v4624
        %v4698 = vpop.f32.mrf.mxu0
        %v4699 = vadd.f32 0.0, %v4698
        %v4700 = vpop.f32.mrf.mxu0
        %v4701 = vadd.f32 0.0, %v4700
        %4702 = vmatmul.bf16.gmra.mxu0 %v4627
        %v4703 = vpop.f32.mrf.mxu0
        %v4704 = vadd.f32 0.0, %v4703
        %v4705 = vpop.f32.mrf.mxu0
        %v4706 = vadd.f32 0.0, %v4705
        %4707 = vmatmul.bf16.gmra.mxu0 %v4630
        %v4708 = vpop.f32.mrf.mxu0
        %v4709 = vadd.f32 0.0, %v4708
        %v4710 = vpop.f32.mrf.mxu0
        %v4711 = vadd.f32 0.0, %v4710
        %4712 = vmatmul.bf16.gmra.mxu0 %v4633
        %v4713 = vpop.f32.mrf.mxu0
        %v4714 = vadd.f32 0.0, %v4713
        %v4715 = vpop.f32.mrf.mxu0
        %v4716 = vadd.f32 0.0, %v4715
        %4717 = vmatmul.bf16.gmra.mxu0 %v4636
        %v4718 = vpop.f32.mrf.mxu0
        %v4719 = vadd.f32 0.0, %v4718
        %v4720 = vpop.f32.mrf.mxu0
        %v4721 = vadd.f32 0.0, %v4720
        %4722 = vmatmul.bf16.gmra.mxu0 %v4639
        %v4723 = vpop.f32.mrf.mxu0
        %v4724 = vadd.f32 0.0, %v4723
        %v4725 = vpop.f32.mrf.mxu0
        %v4726 = vadd.f32 0.0, %v4725
        %4727 = vmatmul.bf16.gmra.mxu0 %v4642
        %v4728 = vpop.f32.mrf.mxu0
        %v4729 = vadd.f32 0.0, %v4728
        %v4730 = vpop.f32.mrf.mxu0
        %v4731 = vadd.f32 0.0, %v4730
        %4732 = vdwg.mxu0
        %v4733 = vadd.f32 %v4499, %v4654
        %v4734 = vadd.f32 %v4500, %v4656
        %v4735 = vadd.f32 %v4501, %v4659
        %v4736 = vadd.f32 %v4502, %v4661
        %v4737 = vadd.f32 %v4503, %v4664
        %v4738 = vadd.f32 %v4504, %v4666
        %v4739 = vadd.f32 %v4505, %v4669
        %v4740 = vadd.f32 %v4506, %v4671
        %v4741 = vadd.f32 %v4507, %v4674
        %v4742 = vadd.f32 %v4508, %v4676
        %v4743 = vadd.f32 %v4509, %v4679
        %v4744 = vadd.f32 %v4510, %v4681
        %v4745 = vadd.f32 %v4511, %v4684
        %v4746 = vadd.f32 %v4512, %v4686
        %v4747 = vadd.f32 %v4513, %v4689
        %v4748 = vadd.f32 %v4514, %v4691
        %v4749 = vadd.f32 %v4515, %v4694
        %v4750 = vadd.f32 %v4516, %v4696
        %v4751 = vadd.f32 %v4517, %v4699
        %v4752 = vadd.f32 %v4518, %v4701
        %v4753 = vadd.f32 %v4519, %v4704
        %v4754 = vadd.f32 %v4520, %v4706
        %v4755 = vadd.f32 %v4521, %v4709
        %v4756 = vadd.f32 %v4522, %v4711
        %v4757 = vadd.f32 %v4523, %v4714
        %v4758 = vadd.f32 %v4524, %v4716
        %v4759 = vadd.f32 %v4525, %v4719
        %v4760 = vadd.f32 %v4526, %v4721
        %v4761 = vadd.f32 %v4527, %v4724
        %v4762 = vadd.f32 %v4528, %v4726
        %v4763 = vadd.f32 %v4529, %v4729
        %v4764 = vadd.f32 %v4530, %v4731
        %v4765 = vld [vmem:[%s5] sm:$0x1]
        %v4767 = vperm.slane %v4765, 0
        %v4769 = vmul.f32 %v4733, %v4767
        %v4770 = vmul.f32 %v4734, %v4767
        %v4771 = vmul.f32 %v4735, %v4767
        %v4772 = vmul.f32 %v4736, %v4767
        %v4773 = vmul.f32 %v4737, %v4767
        %v4774 = vmul.f32 %v4738, %v4767
        %v4775 = vmul.f32 %v4739, %v4767
        %v4776 = vmul.f32 %v4740, %v4767
        %v4777 = vmul.f32 %v4741, %v4767
        %v4778 = vmul.f32 %v4742, %v4767
        %v4779 = vmul.f32 %v4743, %v4767
        %v4780 = vmul.f32 %v4744, %v4767
        %v4781 = vmul.f32 %v4745, %v4767
        %v4782 = vmul.f32 %v4746, %v4767
        %v4783 = vmul.f32 %v4747, %v4767
        %v4784 = vmul.f32 %v4748, %v4767
        %v4785 = vmul.f32 %v4749, %v4767
        %v4786 = vmul.f32 %v4750, %v4767
        %v4787 = vmul.f32 %v4751, %v4767
        %v4788 = vmul.f32 %v4752, %v4767
        %v4789 = vmul.f32 %v4753, %v4767
        %v4790 = vmul.f32 %v4754, %v4767
        %v4791 = vmul.f32 %v4755, %v4767
        %v4792 = vmul.f32 %v4756, %v4767
        %v4793 = vmul.f32 %v4757, %v4767
        %v4794 = vmul.f32 %v4758, %v4767
        %v4795 = vmul.f32 %v4759, %v4767
        %v4796 = vmul.f32 %v4760, %v4767
        %v4797 = vmul.f32 %v4761, %v4767
        %v4798 = vmul.f32 %v4762, %v4767
        %v4799 = vmul.f32 %v4763, %v4767
        %v4800 = vmul.f32 %v4764, %v4767
        %v4801 = vld [vmem:[%s6] sm:$0x1]
        %v4803 = vperm.slane %v4801, 0
        %v4805 = vadd.f32 %v4769, %v4803
        %v4806 = vadd.f32 %v4770, %v4803
        %v4807 = vadd.f32 %v4771, %v4803
        %v4808 = vadd.f32 %v4772, %v4803
        %v4809 = vadd.f32 %v4773, %v4803
        %v4810 = vadd.f32 %v4774, %v4803
        %v4811 = vadd.f32 %v4775, %v4803
        %v4812 = vadd.f32 %v4776, %v4803
        %v4813 = vadd.f32 %v4777, %v4803
        %v4814 = vadd.f32 %v4778, %v4803
        %v4815 = vadd.f32 %v4779, %v4803
        %v4816 = vadd.f32 %v4780, %v4803
        %v4817 = vadd.f32 %v4781, %v4803
        %v4818 = vadd.f32 %v4782, %v4803
        %v4819 = vadd.f32 %v4783, %v4803
        %v4820 = vadd.f32 %v4784, %v4803
        %v4821 = vadd.f32 %v4785, %v4803
        %v4822 = vadd.f32 %v4786, %v4803
        %v4823 = vadd.f32 %v4787, %v4803
        %v4824 = vadd.f32 %v4788, %v4803
        %v4825 = vadd.f32 %v4789, %v4803
        %v4826 = vadd.f32 %v4790, %v4803
        %v4827 = vadd.f32 %v4791, %v4803
        %v4828 = vadd.f32 %v4792, %v4803
        %v4829 = vadd.f32 %v4793, %v4803
        %v4830 = vadd.f32 %v4794, %v4803
        %v4831 = vadd.f32 %v4795, %v4803
        %v4832 = vadd.f32 %v4796, %v4803
        %v4833 = vadd.f32 %v4797, %v4803
        %v4834 = vadd.f32 %v4798, %v4803
        %v4835 = vadd.f32 %v4799, %v4803
        %v4836 = vadd.f32 %v4800, %v4803
        %v4837 = vadd.f32 %v4805, %v479
        %v4838 = vadd.f32 %v4806, %v480
        %v4839 = vadd.f32 %v4807, %v481
        %v4840 = vadd.f32 %v4808, %v482
        %v4841 = vadd.f32 %v4809, %v483
        %v4842 = vadd.f32 %v4810, %v484
        %v4843 = vadd.f32 %v4811, %v485
        %v4844 = vadd.f32 %v4812, %v486
        %v4845 = vadd.f32 %v4813, %v487
        %v4846 = vadd.f32 %v4814, %v488
        %v4847 = vadd.f32 %v4815, %v489
        %v4848 = vadd.f32 %v4816, %v490
        %v4849 = vadd.f32 %v4817, %v491
        %v4850 = vadd.f32 %v4818, %v492
        %v4851 = vadd.f32 %v4819, %v493
        %v4852 = vadd.f32 %v4820, %v494
        %v4853 = vadd.f32 %v4821, %v495
        %v4854 = vadd.f32 %v4822, %v496
        %v4855 = vadd.f32 %v4823, %v497
        %v4856 = vadd.f32 %v4824, %v498
        %v4857 = vadd.f32 %v4825, %v499
        %v4858 = vadd.f32 %v4826, %v500
        %v4859 = vadd.f32 %v4827, %v501
        %v4860 = vadd.f32 %v4828, %v502
        %v4861 = vadd.f32 %v4829, %v503
        %v4862 = vadd.f32 %v4830, %v504
        %v4863 = vadd.f32 %v4831, %v505
        %v4864 = vadd.f32 %v4832, %v506
        %v4865 = vadd.f32 %v4833, %v507
        %v4866 = vadd.f32 %v4834, %v508
        %v4867 = vadd.f32 %v4835, %v509
        %v4868 = vadd.f32 %v4836, %v510
        %v4869 = vmax.f32 %v4837, 0.0
        %v4870 = vmax.f32 %v4838, 0.0
        %v4871 = vmax.f32 %v4839, 0.0
        %v4872 = vmax.f32 %v4840, 0.0
        %v4873 = vmax.f32 %v4841, 0.0
        %v4874 = vmax.f32 %v4842, 0.0
        %v4875 = vmax.f32 %v4843, 0.0
        %v4876 = vmax.f32 %v4844, 0.0
        %v4877 = vmax.f32 %v4845, 0.0
        %v4878 = vmax.f32 %v4846, 0.0
        %v4879 = vmax.f32 %v4847, 0.0
        %v4880 = vmax.f32 %v4848, 0.0
        %v4881 = vmax.f32 %v4849, 0.0
        %v4882 = vmax.f32 %v4850, 0.0
        %v4883 = vmax.f32 %v4851, 0.0
        %v4884 = vmax.f32 %v4852, 0.0
        %v4885 = vmax.f32 %v4853, 0.0
        %v4886 = vmax.f32 %v4854, 0.0
        %v4887 = vmax.f32 %v4855, 0.0
        %v4888 = vmax.f32 %v4856, 0.0
        %v4889 = vmax.f32 %v4857, 0.0
        %v4890 = vmax.f32 %v4858, 0.0
        %v4891 = vmax.f32 %v4859, 0.0
        %v4892 = vmax.f32 %v4860, 0.0
        %v4893 = vmax.f32 %v4861, 0.0
        %v4894 = vmax.f32 %v4862, 0.0
        %v4895 = vmax.f32 %v4863, 0.0
        %v4896 = vmax.f32 %v4864, 0.0
        %v4897 = vmax.f32 %v4865, 0.0
        %v4898 = vmax.f32 %v4866, 0.0
        %v4899 = vmax.f32 %v4867, 0.0
        %v4900 = vmax.f32 %v4868, 0.0
        %4901 = vst.msk [vmem:[%s331] sm:$0xff] %vm333, %v4869
        %4902 = vst.msk [vmem:[%s331 + $0x8] sm:$0xff] %vm333, %v4870
        %4903 = vst.msk [vmem:[%s331 + $0x10] sm:$0xff] %vm333, %v4871
        %4904 = vst.msk [vmem:[%s331 + $0x18] sm:$0xff] %vm333, %v4872
        %4905 = vst.msk [vmem:[%s331 + $0x20] sm:$0xff] %vm333, %v4873
        %4906 = vst.msk [vmem:[%s331 + $0x28] sm:$0xff] %vm333, %v4874
        %4907 = vst.msk [vmem:[%s331 + $0x30] sm:$0xff] %vm333, %v4875
        %4908 = vst.msk [vmem:[%s331 + $0x38] sm:$0xff] %vm333, %v4876
        %4909 = vst.msk [vmem:[%s331 + $0x40] sm:$0xff] %vm333, %v4877
        %4910 = vst.msk [vmem:[%s331 + $0x48] sm:$0xff] %vm333, %v4878
        %4911 = vst.msk [vmem:[%s331 + $0x50] sm:$0xff] %vm333, %v4879
        %4912 = vst.msk [vmem:[%s331 + $0x58] sm:$0xff] %vm333, %v4880
        %4913 = vst.msk [vmem:[%s331 + $0x60] sm:$0xff] %vm333, %v4881
        %4914 = vst.msk [vmem:[%s331 + $0x68] sm:$0xff] %vm333, %v4882
        %4915 = vst.msk [vmem:[%s331 + $0x70] sm:$0xff] %vm333, %v4883
        %4916 = vst.msk [vmem:[%s331 + $0x78] sm:$0xff] %vm333, %v4884
        %4917 = vst.msk [vmem:[%s331 + $0x80] sm:$0xff] %vm333, %v4885
        %4918 = vst.msk [vmem:[%s331 + $0x88] sm:$0xff] %vm333, %v4886
        %4919 = vst.msk [vmem:[%s331 + $0x90] sm:$0xff] %vm333, %v4887
        %4920 = vst.msk [vmem:[%s331 + $0x98] sm:$0xff] %vm333, %v4888
        %4921 = vst.msk [vmem:[%s331 + $0xa0] sm:$0xff] %vm333, %v4889
        %4922 = vst.msk [vmem:[%s331 + $0xa8] sm:$0xff] %vm333, %v4890
        %4923 = vst.msk [vmem:[%s331 + $0xb0] sm:$0xff] %vm333, %v4891
        %4924 = vst.msk [vmem:[%s331 + $0xb8] sm:$0xff] %vm333, %v4892
        %4925 = vst.msk [vmem:[%s331 + $0xc0] sm:$0xff] %vm333, %v4893
        %4926 = vst.msk [vmem:[%s331 + $0xc8] sm:$0xff] %vm333, %v4894
        %4927 = vst.msk [vmem:[%s331 + $0xd0] sm:$0xff] %vm333, %v4895
        %4928 = vst.msk [vmem:[%s331 + $0xd8] sm:$0xff] %vm333, %v4896
        %4929 = vst.msk [vmem:[%s331 + $0xe0] sm:$0xff] %vm333, %v4897
        %4930 = vst.msk [vmem:[%s331 + $0xe8] sm:$0xff] %vm333, %v4898
        %4931 = vst.msk [vmem:[%s331 + $0xf0] sm:$0xff] %vm333, %v4899
        %4932 = vst.msk [vmem:[%s331 + $0xf8] sm:$0xff] %vm333, %v4900
        %s4933 = sand.u32 %s185, 1
        %s4934 = scalar_lea.sflag [#allocation6], %s4933
        %s4935 = sand.u32 %s185, 1
        %s4936 = smul.addr %s4935, 256
        %s4937 = scalar_lea.vmem [#allocation10], %s4936
        // Predicated region
        $region61: #{tpu_custom_call.1} parent=47 // pred_check
          %p4938 = pneg %p195
        $region62: #{tpu_custom_call.1} parent=47 // pred_check_branch
          %4940 = sbr.rel (%p4938) target = $region64
        $region63: #{tpu_custom_call.1} parent=47 // pred_region
          %4942 = vsyncadd %s4934, 0
          %s4943 = smul.addr %s25, 32
          %s4944 = smul.addr %s4943, 8
          %s4945 = scalar_lea.hbm %s7, %s4944
          %s4946 = sshll.u32 %s4937, 4
          %s4947 = int_to_ptr.vmem [resolvable:$true] %s4946
          %s4948 = sshll.u32 %s4945, 4
          %s4949 = int_to_ptr.hbm [resolvable:$true] %s4948
          %4954 = dma.vmem_to_hbm [thread:$0]  %s4947, 4096, %s4949, %s4934, 128, 128, 8
        $region64: #{tpu_custom_call.1} parent=47 // pred_fallthru
          _
      $region48: #{tpu_custom_call.1} parent=5 // pred_fallthru
        _
      %p4955 = scmp.le.s32.totalorder 2, %s20
      // Predicated region
      $region65: #{tpu_custom_call.1} parent=5 // pred_check
        %p4956 = pneg %p4955
      $region66: #{tpu_custom_call.1} parent=5 // pred_check_branch
        %4958 = sbr.rel (%p4956) target = $region68
      $region67: #{tpu_custom_call.1} parent=5 // pred_region
        %s4959 = ssub.s32 %s20, 2
        // Predicated region
        $region69: #{tpu_custom_call.1} parent=67 // pred_check
          %p4960 = pneg %p201
        $region70: #{tpu_custom_call.1} parent=67 // pred_check_branch
          %4962 = sbr.rel (%p4960) target = $region72
        $region71: #{tpu_custom_call.1} parent=67 // pred_region
          %s4963 = sand.u32 %s186, 1
          %s4964 = scalar_lea.sflag [#allocation6], %s4963
          %s4965 = sand.u32 %s186, 1
          %s4966 = smul.addr %s4965, 256
          %s4967 = scalar_lea.vmem [#allocation10], %s4966
          %4969 = dma.done %s4964, 4096
        $region72: #{tpu_custom_call.1} parent=67 // pred_fallthru
          _
      $region68: #{tpu_custom_call.1} parent=5 // pred_fallthru
        _
    $region6: #{tpu_custom_call.1} parent=1 // loop_footer
      %s24 = sadd.s32 1, %s20
    $region7: #{tpu_custom_call.1} parent=1 // loop_footer_branch
      %19 = sbr.rel target = $region3
    $region8: #{tpu_custom_call.1} parent=1 // loop_exit
      _
    %4970 = vsyncpa [#allocation5], 1
    %s4971 = scalar_lea.sflag [#allocation5], 1
    %4972 = vsyncpa %s4971, 1
    %4973 = vsyncpa [#allocation8], 1
    %4974 = vsyncpa [#allocation6], 1
    %s4975 = scalar_lea.sflag [#allocation6], 1
    %4976 = vsyncpa %s4975, 1

</llo_original>
